<compile_context>
chip_gen: v7x
topology: tpu7x:2x2x1
jax: 0.10.0
libtpu: 0.0.40
codegen_flags: <defaults>
</compile_context>

<pallas_src>
import functools

import jax
import jax.numpy as jnp
from jax.experimental import pallas as pl
from jax.experimental.pallas import tpu as pltpu


# ----------------------------------------------------------------------------
# In-kernel helpers
# ----------------------------------------------------------------------------
def _conv3x3_im2col(x, w_mat, mask_l, mask_r, H, W):
    """3x3 'same' convolution in flat-spatial layout via one im2col matmul.

    x:      (Cin, H*W) float32, spatial flattened row-major (p = y*W + x).
    w_mat:  (Cout, 9*Cin) bfloat16, columns ordered (ky, kx, cin).
    mask_l: (1, H*W) float32, 1.0 where column >= 1      (valid for dx=-1 taps).
    mask_r: (1, H*W) float32, 1.0 where column <= W - 2  (valid for dx=+1 taps).
    Returns (Cout, H*W) float32.
    """
    Cin, HW = x.shape
    # Zero-pad W+1 elements on each side of the flat spatial axis: row over/underflow
    # of a shifted view then reads zeros; only the column wrap needs masking.
    zpad = jnp.zeros((Cin, W + 1), x.dtype)
    xpad = jnp.concatenate([zpad, x, zpad], axis=1)          # (Cin, HW + 2W + 2)
    taps = []
    for dy in (-1, 0, 1):
        for dx in (-1, 0, 1):
            start = (W + 1) + dy * W + dx
            tap = xpad[:, start:start + HW]                  # value at (y+dy, x+dx)
            if dx == -1:
                tap = tap * mask_l
            elif dx == 1:
                tap = tap * mask_r
            taps.append(tap)
    patches = jnp.concatenate(taps, axis=0).astype(jnp.bfloat16)   # (9*Cin, HW)
    return jnp.dot(w_mat, patches, preferred_element_type=jnp.float32)


# ----------------------------------------------------------------------------
# Fused flow-step kernel: ActNorm + InvConv + Coupling (forward) for one image.
# ----------------------------------------------------------------------------
def _flow_step_kernel(x_ref, ml_ref, mr_ref,
                      wac_ref, bac_ref,
                      bn0a_ref, bn0b_ref, w1_ref,
                      bn1a_ref, bn1b_ref, w2_ref,
                      bn2a_ref, bn2b_ref, w3_ref, b3_ref,
                      cs_ref,
                      xo_ref, ldj_ref, *, H, W, Ch):
    x = x_ref[0]                                             # (C, H*W) f32
    mask_l = ml_ref[...]                                     # (1, H*W)
    mask_r = mr_ref[...]                                     # (1, H*W)

    # --- ActNorm + InvConv, folded into one channel-mixing matmul + bias ---
    z = jnp.dot(wac_ref[...], x.astype(jnp.bfloat16),
                preferred_element_type=jnp.float32) + bac_ref[...]

    x_change = z[:Ch]                                        # (Ch, HW)
    x_id = z[Ch:]                                            # (Ch, HW)

    # --- Coupling NN on x_id ---
    h = jnp.maximum(x_id * bn0a_ref[...] + bn0b_ref[...], 0.0)
    h = _conv3x3_im2col(h, w1_ref[...], mask_l, mask_r, H, W)        # (M, HW)
    h = jnp.maximum(h * bn1a_ref[...] + bn1b_ref[...], 0.0)
    h = jnp.dot(w2_ref[...], h.astype(jnp.bfloat16),
                preferred_element_type=jnp.float32)                  # (M, HW)
    h = jnp.maximum(h * bn2a_ref[...] + bn2b_ref[...], 0.0)
    st = _conv3x3_im2col(h, w3_ref[...], mask_l, mask_r, H, W) + b3_ref[...]

    # s / t come out as contiguous halves (out-conv channels permuted at init).
    s = cs_ref[...] * jnp.tanh(st[:Ch])
    t = st[Ch:]
    x_change = (x_change + t) * jnp.exp(s)

    xo_ref[0] = jnp.concatenate([x_change, x_id], axis=0)
    ldj = jnp.sum(jnp.sum(s, axis=1, keepdims=True), axis=0, keepdims=True)  # (1,1)
    ldj_ref[0] = jnp.broadcast_to(ldj, (1, 128))


def _full_spec(shape):
    nd = len(shape)
    return pl.BlockSpec(shape, lambda i, _nd=nd: (0,) * _nd)


def flow_step(sp, x, sldj):
    """One _FlowStep forward on x of shape (B, C, H*W)."""
    B, C, HW = x.shape
    H, W, Ch = sp["H"], sp["W"], sp["Ch"]
    weights = (sp["mask_l"], sp["mask_r"],
               sp["w_ac"], sp["b_ac"],
               sp["bn0_a"], sp["bn0_b"], sp["w1"],
               sp["bn1_a"], sp["bn1_b"], sp["w2"],
               sp["bn2_a"], sp["bn2_b"], sp["w3"], sp["b3"],
               sp["coup_scale"])
    kernel = functools.partial(_flow_step_kernel, H=H, W=W, Ch=Ch)
    x_new, ldj = pl.pallas_call(
        kernel,
        out_shape=(jax.ShapeDtypeStruct((B, C, HW), jnp.float32),
                   jax.ShapeDtypeStruct((B, 1, 128), jnp.float32)),
        grid=(B,),
        in_specs=[pl.BlockSpec((1, C, HW), lambda i: (i, 0, 0))]
                 + [_full_spec(w.shape) for w in weights],
        out_specs=(pl.BlockSpec((1, C, HW), lambda i: (i, 0, 0)),
                   pl.BlockSpec((1, 1, 128), lambda i: (i, 0, 0))),
        compiler_params=pltpu.CompilerParams(dimension_semantics=("parallel",)),
    )(x, *weights)
    return x_new, sldj + sp["ldj_const"] + ldj[:, 0, 0]


# ----------------------------------------------------------------------------
# Plain-JAX glue: squeeze / unsqueeze (NCHW, matches torch exactly), recursion
# ----------------------------------------------------------------------------
def squeeze_nchw(x):
    B, C, H, W = x.shape
    x = x.reshape(B, C, H // 2, 2, W // 2, 2)
    x = jnp.transpose(x, (0, 1, 3, 5, 2, 4))
    return x.reshape(B, C * 4, H // 2, W // 2)


def unsqueeze_nchw(x):
    B, C, H, W = x.shape
    x = x.reshape(B, C // 4, 2, 2, H, W)
    x = jnp.transpose(x, (0, 1, 4, 2, 5, 3))
    return x.reshape(B, C // 4, H * 2, W * 2)


def glow_forward(p, x, sldj):
    """_Glow.forward with reverse=False.  x: (B, C, H, W) NCHW."""
    B, C, H, W = x.shape
    xf = x.reshape(B, C, H * W)
    for sp in p["steps"]:
        xf, sldj = flow_step(sp, xf, sldj)
    x = xf.reshape(B, C, H, W)
    if p["next"] is not None:
        x = squeeze_nchw(x)
        C4 = x.shape[1]
        x, x_split = x[:, :C4 // 2], x[:, C4 // 2:]
        x, sldj = glow_forward(p["next"], x, sldj)
        x = jnp.concatenate([x, x_split], axis=1)
        x = unsqueeze_nchw(x)
    return x, sldj


# ----------------------------------------------------------------------------
# Deterministic synthetic "torch-like" parameters + kernel-ready preparation
# ----------------------------------------------------------------------------
def _bn_fold(kg, kb, km, kv, n, eps=1e-5):
    gamma = 1.0 + 0.1 * jax.random.normal(kg, (n,), jnp.float32)
    beta = 0.1 * jax.random.normal(kb, (n,), jnp.float32)
    rmean = 0.1 * jax.random.normal(km, (n,), jnp.float32)
    rvar = 1.0 + 0.1 * jax.random.uniform(kv, (n,), jnp.float32)
    scale = gamma / jnp.sqrt(rvar + eps)
    shift = beta - rmean * scale
    return scale, shift


def init_flow_step_raw(key, C, M):
    ks = jax.random.split(key, 20)
    Ch = C // 2
    p = {
        "an_bias": 0.1 * jax.random.normal(ks[0], (C,), jnp.float32),
        "an_logs": 0.1 * jax.random.normal(ks[1], (C,), jnp.float32),
        "inv_w": jnp.linalg.qr(jax.random.normal(ks[2], (C, C), jnp.float32))[0],
        "coup_scale": 1.0 + 0.1 * jax.random.normal(ks[3], (Ch,), jnp.float32),
    }
    nn = {}
    nn["bn0_a"], nn["bn0_b"] = _bn_fold(ks[4], ks[5], ks[6], ks[7], Ch)
    nn["w1"] = 0.05 * jax.random.normal(ks[8], (M, Ch, 3, 3), jnp.float32)   # (Cout,Cin,3,3)
    nn["bn1_a"], nn["bn1_b"] = _bn_fold(ks[9], ks[10], ks[11], ks[12], M)
    nn["w2"] = 0.05 * jax.random.normal(ks[13], (M, M), jnp.float32)         # (Cout,Cin)
    nn["bn2_a"], nn["bn2_b"] = _bn_fold(ks[14], ks[15], ks[16], ks[17], M)
    # torch zero-inits out_conv; use small random so the coupling path is non-trivial.
    nn["w3"] = 0.05 * jax.random.normal(ks[18], (2 * Ch, M, 3, 3), jnp.float32)
    nn["b3"] = 0.05 * jax.random.normal(ks[19], (2 * Ch,), jnp.float32)
    p["nn"] = nn
    return p


def init_glow_raw(key, C, M, num_levels, num_steps):
    keys = jax.random.split(key, num_steps + 1)
    steps = [init_flow_step_raw(keys[i], C, M) for i in range(num_steps)]
    nxt = (init_glow_raw(keys[-1], 2 * C, M, num_levels - 1, num_steps)
           if num_levels > 1 else None)
    return {"steps": steps, "next": nxt}


def _conv_to_mat(w):
    """torch (Cout, Cin, 3, 3) -> (Cout, 9*Cin), columns ordered (ky, kx, cin)."""
    return jnp.transpose(w, (0, 2, 3, 1)).reshape(w.shape[0], -1)


def prepare_flow_step(raw, H, W):
    C = raw["an_bias"].shape[0]
    Ch = C // 2
    nn = raw["nn"]
    M = nn["w2"].shape[0]

    # Fold ActNorm (x + bias) * exp(logs) into the InvConv 1x1 matmul.
    e = jnp.exp(raw["an_logs"])
    w_ac = raw["inv_w"] * e[None, :]
    b_ac = raw["inv_w"] @ (e * raw["an_bias"])
    _, logabsdet = jnp.linalg.slogdet(raw["inv_w"])
    ldj_const = float((jnp.sum(raw["an_logs"]) + logabsdet) * (H * W))

    # Permute out-conv channels so s (even) / t (odd) become contiguous halves.
    perm = jnp.concatenate([jnp.arange(0, 2 * Ch, 2), jnp.arange(1, 2 * Ch, 2)])

    # Column-boundary masks for the 3x3 conv taps (dx = -1 / +1).
    col = jnp.arange(H * W, dtype=jnp.int32) % W
    mask_l = (col >= 1).astype(jnp.float32).reshape(1, H * W)
    mask_r = (col < W - 1).astype(jnp.float32).reshape(1, H * W)

    return {
        "H": H, "W": W, "Ch": Ch,
        "ldj_const": ldj_const,
        "mask_l": mask_l, "mask_r": mask_r,
        "w_ac": w_ac.astype(jnp.bfloat16),
        "b_ac": b_ac.reshape(C, 1),
        "bn0_a": nn["bn0_a"].reshape(Ch, 1), "bn0_b": nn["bn0_b"].reshape(Ch, 1),
        "w1": _conv_to_mat(nn["w1"]).astype(jnp.bfloat16),          # (M, 9*Ch)
        "bn1_a": nn["bn1_a"].reshape(M, 1), "bn1_b": nn["bn1_b"].reshape(M, 1),
        "w2": nn["w2"].astype(jnp.bfloat16),                        # (M, M)
        "bn2_a": nn["bn2_a"].reshape(M, 1), "bn2_b": nn["bn2_b"].reshape(M, 1),
        "w3": _conv_to_mat(nn["w3"])[perm].astype(jnp.bfloat16),    # (2*Ch, 9*M)
        "b3": nn["b3"][perm].reshape(2 * Ch, 1),
        "coup_scale": raw["coup_scale"].reshape(Ch, 1),
    }


def prepare_glow(raw, H, W):
    steps = [prepare_flow_step(r, H, W) for r in raw["steps"]]
    nxt = prepare_glow(raw["next"], H // 2, W // 2) if raw["next"] is not None else None
    return {"steps": steps, "next": nxt}


# ----------------------------------------------------------------------------
if __name__ == "__main__":
    key = jax.random.PRNGKey(0)
    kx, kp = jax.random.split(key)

    B, C, H, W = 2, 4, 16, 16
    MID, NUM_LEVELS, NUM_STEPS = 32, 2, 2

    x_nchw = jax.random.normal(kx, (B, C, H, W), dtype=jnp.float32)
    sldj0 = jnp.zeros((B,), jnp.float32)

    raw_params = init_glow_raw(kp, C, MID, NUM_LEVELS, NUM_STEPS)
    params = prepare_glow(raw_params, H, W)   # folded / kernel-ready constants

    @jax.jit
    def forward(x, sldj):
        return glow_forward(params, x, sldj)

    y_nchw, sldj_out = forward(x_nchw, sldj0)
    jax.block_until_ready((y_nchw, sldj_out))

    assert y_nchw.shape == (B, C, H, W)
    assert sldj_out.shape == (B,)
    assert bool(jnp.all(jnp.isfinite(y_nchw))) and bool(jnp.all(jnp.isfinite(sldj_out)))
    print("KERNEL_OK")
</pallas_src>

<mosaic_0001>
module attributes {stable_mosaic.version = 11 : i64} {
  func.func @_flow_step_kernel(%arg0: i32, %arg1: memref<1x4x256xf32, #tpu.memory_space<vmem>>, %arg2: memref<1x256xf32, #tpu.memory_space<vmem>>, %arg3: memref<1x256xf32, #tpu.memory_space<vmem>>, %arg4: memref<4x4xbf16, #tpu.memory_space<vmem>>, %arg5: memref<4x1xf32, #tpu.memory_space<vmem>>, %arg6: memref<2x1xf32, #tpu.memory_space<vmem>>, %arg7: memref<2x1xf32, #tpu.memory_space<vmem>>, %arg8: memref<32x18xbf16, #tpu.memory_space<vmem>>, %arg9: memref<32x1xf32, #tpu.memory_space<vmem>>, %arg10: memref<32x1xf32, #tpu.memory_space<vmem>>, %arg11: memref<32x32xbf16, #tpu.memory_space<vmem>>, %arg12: memref<32x1xf32, #tpu.memory_space<vmem>>, %arg13: memref<32x1xf32, #tpu.memory_space<vmem>>, %arg14: memref<4x288xbf16, #tpu.memory_space<vmem>>, %arg15: memref<4x1xf32, #tpu.memory_space<vmem>>, %arg16: memref<2x1xf32, #tpu.memory_space<vmem>>, %arg17: memref<1x4x256xf32, #tpu.memory_space<vmem>>, %arg18: memref<1x1x128xf32, #tpu.memory_space<vmem>>) attributes {dimension_semantics = [#tpu.dimension_semantics<parallel>], iteration_bounds = array<i64: 2>, scalar_prefetch = 0 : i64, scratch_operands = 0 : i64, tpu.core_type = #tpu.core_type<tc>, window_params = [{transform_indices = @transform_0, window_bounds = array<i64: 1, 4, 256>}, {pipeline_mode = #tpu.pipeline_mode<synchronous>, transform_indices = @transform_1, window_bounds = array<i64: 1, 256>}, {pipeline_mode = #tpu.pipeline_mode<synchronous>, transform_indices = @transform_2, window_bounds = array<i64: 1, 256>}, {pipeline_mode = #tpu.pipeline_mode<synchronous>, transform_indices = @transform_3, window_bounds = array<i64: 4, 4>}, {pipeline_mode = #tpu.pipeline_mode<synchronous>, transform_indices = @transform_4, window_bounds = array<i64: 4, 1>}, {pipeline_mode = #tpu.pipeline_mode<synchronous>, transform_indices = @transform_5, window_bounds = array<i64: 2, 1>}, {pipeline_mode = #tpu.pipeline_mode<synchronous>, transform_indices = @transform_6, window_bounds = array<i64: 2, 1>}, {pipeline_mode = #tpu.pipeline_mode<synchronous>, transform_indices = @transform_7, window_bounds = array<i64: 32, 18>}, {pipeline_mode = #tpu.pipeline_mode<synchronous>, transform_indices = @transform_8, window_bounds = array<i64: 32, 1>}, {pipeline_mode = #tpu.pipeline_mode<synchronous>, transform_indices = @transform_9, window_bounds = array<i64: 32, 1>}, {pipeline_mode = #tpu.pipeline_mode<synchronous>, transform_indices = @transform_10, window_bounds = array<i64: 32, 32>}, {pipeline_mode = #tpu.pipeline_mode<synchronous>, transform_indices = @transform_11, window_bounds = array<i64: 32, 1>}, {pipeline_mode = #tpu.pipeline_mode<synchronous>, transform_indices = @transform_12, window_bounds = array<i64: 32, 1>}, {pipeline_mode = #tpu.pipeline_mode<synchronous>, transform_indices = @transform_13, window_bounds = array<i64: 4, 288>}, {pipeline_mode = #tpu.pipeline_mode<synchronous>, transform_indices = @transform_14, window_bounds = array<i64: 4, 1>}, {pipeline_mode = #tpu.pipeline_mode<synchronous>, transform_indices = @transform_15, window_bounds = array<i64: 2, 1>}, {transform_indices = @transform_16, window_bounds = array<i64: 1, 4, 256>}, {transform_indices = @transform_17, window_bounds = array<i64: 1, 1, 128>}]} {
    %c0 = arith.constant 0 : index
    %c0_0 = arith.constant 0 : index
    %c0_1 = arith.constant 0 : index
    %0 = vector.load %arg1[%c0, %c0_0, %c0_1] : memref<1x4x256xf32, #tpu.memory_space<vmem>>, vector<1x4x256xf32>
    %1 = vector.shape_cast %0 : vector<1x4x256xf32> to vector<4x256xf32>
    %c0_2 = arith.constant 0 : index
    %c0_3 = arith.constant 0 : index
    %2 = vector.load %arg2[%c0_2, %c0_3] : memref<1x256xf32, #tpu.memory_space<vmem>>, vector<1x256xf32>
    %c0_4 = arith.constant 0 : index
    %c0_5 = arith.constant 0 : index
    %3 = vector.load %arg3[%c0_4, %c0_5] : memref<1x256xf32, #tpu.memory_space<vmem>>, vector<1x256xf32>
    %c0_6 = arith.constant 0 : index
    %c0_7 = arith.constant 0 : index
    %4 = vector.load %arg4[%c0_6, %c0_7] : memref<4x4xbf16, #tpu.memory_space<vmem>>, vector<4x4xbf16>
    %5 = arith.truncf %1 : vector<4x256xf32> to vector<4x256xbf16>
    %cst = arith.constant dense<0.000000e+00> : vector<4x256xf32>
    %6 = tpu.matmul %4, %5, %cst {dimension_numbers = #tpu.dot_dimension_numbers<[1], [0], [0], [1], [0, 0, 1, 1], [], []>} : vector<4x4xbf16>, vector<4x256xbf16>, vector<4x256xf32> -> vector<4x256xf32>
    %c0_8 = arith.constant 0 : index
    %c0_9 = arith.constant 0 : index
    %7 = vector.load %arg5[%c0_8, %c0_9] : memref<4x1xf32, #tpu.memory_space<vmem>>, vector<4x1xf32>
    %8 = vector.broadcast %7 : vector<4x1xf32> to vector<4x256xf32>
    %9 = arith.addf %6, %8 : vector<4x256xf32>
    %10 = vector.extract_strided_slice %9 {offsets = [0, 0], sizes = [2, 256], strides = [1, 1]} : vector<4x256xf32> to vector<2x256xf32>
    %11 = vector.extract_strided_slice %9 {offsets = [2, 0], sizes = [2, 256], strides = [1, 1]} : vector<4x256xf32> to vector<2x256xf32>
    %c0_10 = arith.constant 0 : index
    %c0_11 = arith.constant 0 : index
    %12 = vector.load %arg6[%c0_10, %c0_11] : memref<2x1xf32, #tpu.memory_space<vmem>>, vector<2x1xf32>
    %13 = vector.broadcast %12 : vector<2x1xf32> to vector<2x256xf32>
    %14 = arith.mulf %11, %13 : vector<2x256xf32>
    %c0_12 = arith.constant 0 : index
    %c0_13 = arith.constant 0 : index
    %15 = vector.load %arg7[%c0_12, %c0_13] : memref<2x1xf32, #tpu.memory_space<vmem>>, vector<2x1xf32>
    %16 = vector.broadcast %15 : vector<2x1xf32> to vector<2x256xf32>
    %17 = arith.addf %14, %16 : vector<2x256xf32>
    %cst_14 = arith.constant 0.000000e+00 : f32
    %18 = vector.broadcast %cst_14 : f32 to vector<2x256xf32>
    %19 = arith.maximumf %17, %18 : vector<2x256xf32>
    %c0_15 = arith.constant 0 : index
    %c0_16 = arith.constant 0 : index
    %20 = vector.load %arg8[%c0_15, %c0_16] : memref<32x18xbf16, #tpu.memory_space<vmem>>, vector<32x18xbf16>
    %cst_17 = arith.constant 0.000000e+00 : f32
    %21 = vector.broadcast %cst_17 : f32 to vector<2x17xf32>
    %22 = tpu.concatenate %21, %19, %21 in 1 : vector<2x17xf32>, vector<2x256xf32>, vector<2x17xf32> -> vector<2x290xf32>
    %23 = vector.extract_strided_slice %22 {offsets = [0, 0], sizes = [2, 256], strides = [1, 1]} : vector<2x290xf32> to vector<2x256xf32>
    %24 = vector.broadcast %2 : vector<1x256xf32> to vector<2x256xf32>
    %25 = arith.mulf %23, %24 : vector<2x256xf32>
    %26 = vector.extract_strided_slice %22 {offsets = [0, 1], sizes = [2, 256], strides = [1, 1]} : vector<2x290xf32> to vector<2x256xf32>
    %27 = vector.extract_strided_slice %22 {offsets = [0, 2], sizes = [2, 256], strides = [1, 1]} : vector<2x290xf32> to vector<2x256xf32>
    %28 = vector.broadcast %3 : vector<1x256xf32> to vector<2x256xf32>
    %29 = arith.mulf %27, %28 : vector<2x256xf32>
    %30 = vector.extract_strided_slice %22 {offsets = [0, 16], sizes = [2, 256], strides = [1, 1]} : vector<2x290xf32> to vector<2x256xf32>
    %31 = vector.broadcast %2 : vector<1x256xf32> to vector<2x256xf32>
    %32 = arith.mulf %30, %31 : vector<2x256xf32>
    %33 = vector.extract_strided_slice %22 {offsets = [0, 17], sizes = [2, 256], strides = [1, 1]} : vector<2x290xf32> to vector<2x256xf32>
    %34 = vector.extract_strided_slice %22 {offsets = [0, 18], sizes = [2, 256], strides = [1, 1]} : vector<2x290xf32> to vector<2x256xf32>
    %35 = vector.broadcast %3 : vector<1x256xf32> to vector<2x256xf32>
    %36 = arith.mulf %34, %35 : vector<2x256xf32>
    %37 = vector.extract_strided_slice %22 {offsets = [0, 32], sizes = [2, 256], strides = [1, 1]} : vector<2x290xf32> to vector<2x256xf32>
    %38 = vector.broadcast %2 : vector<1x256xf32> to vector<2x256xf32>
    %39 = arith.mulf %37, %38 : vector<2x256xf32>
    %40 = vector.extract_strided_slice %22 {offsets = [0, 33], sizes = [2, 256], strides = [1, 1]} : vector<2x290xf32> to vector<2x256xf32>
    %41 = vector.extract_strided_slice %22 {offsets = [0, 34], sizes = [2, 256], strides = [1, 1]} : vector<2x290xf32> to vector<2x256xf32>
    %42 = vector.broadcast %3 : vector<1x256xf32> to vector<2x256xf32>
    %43 = arith.mulf %41, %42 : vector<2x256xf32>
    %44 = tpu.concatenate %25, %26, %29, %32, %33, %36, %39, %40, %43 in 0 : vector<2x256xf32>, vector<2x256xf32>, vector<2x256xf32>, vector<2x256xf32>, vector<2x256xf32>, vector<2x256xf32>, vector<2x256xf32>, vector<2x256xf32>, vector<2x256xf32> -> vector<18x256xf32>
    %45 = arith.truncf %44 : vector<18x256xf32> to vector<18x256xbf16>
    %cst_18 = arith.constant dense<0.000000e+00> : vector<32x256xf32>
    %46 = tpu.matmul %20, %45, %cst_18 {dimension_numbers = #tpu.dot_dimension_numbers<[1], [0], [0], [1], [0, 0, 1, 1], [], []>} : vector<32x18xbf16>, vector<18x256xbf16>, vector<32x256xf32> -> vector<32x256xf32>
    %c0_19 = arith.constant 0 : index
    %c0_20 = arith.constant 0 : index
    %47 = vector.load %arg9[%c0_19, %c0_20] : memref<32x1xf32, #tpu.memory_space<vmem>>, vector<32x1xf32>
    %48 = vector.broadcast %47 : vector<32x1xf32> to vector<32x256xf32>
    %49 = arith.mulf %46, %48 : vector<32x256xf32>
    %c0_21 = arith.constant 0 : index
    %c0_22 = arith.constant 0 : index
    %50 = vector.load %arg10[%c0_21, %c0_22] : memref<32x1xf32, #tpu.memory_space<vmem>>, vector<32x1xf32>
    %51 = vector.broadcast %50 : vector<32x1xf32> to vector<32x256xf32>
    %52 = arith.addf %49, %51 : vector<32x256xf32>
    %cst_23 = arith.constant 0.000000e+00 : f32
    %53 = vector.broadcast %cst_23 : f32 to vector<32x256xf32>
    %54 = arith.maximumf %52, %53 : vector<32x256xf32>
    %c0_24 = arith.constant 0 : index
    %c0_25 = arith.constant 0 : index
    %55 = vector.load %arg11[%c0_24, %c0_25] : memref<32x32xbf16, #tpu.memory_space<vmem>>, vector<32x32xbf16>
    %56 = arith.truncf %54 : vector<32x256xf32> to vector<32x256xbf16>
    %cst_26 = arith.constant dense<0.000000e+00> : vector<32x256xf32>
    %57 = tpu.matmul %55, %56, %cst_26 {dimension_numbers = #tpu.dot_dimension_numbers<[1], [0], [0], [1], [0, 0, 1, 1], [], []>} : vector<32x32xbf16>, vector<32x256xbf16>, vector<32x256xf32> -> vector<32x256xf32>
    %c0_27 = arith.constant 0 : index
    %c0_28 = arith.constant 0 : index
    %58 = vector.load %arg12[%c0_27, %c0_28] : memref<32x1xf32, #tpu.memory_space<vmem>>, vector<32x1xf32>
    %59 = vector.broadcast %58 : vector<32x1xf32> to vector<32x256xf32>
    %60 = arith.mulf %57, %59 : vector<32x256xf32>
    %c0_29 = arith.constant 0 : index
    %c0_30 = arith.constant 0 : index
    %61 = vector.load %arg13[%c0_29, %c0_30] : memref<32x1xf32, #tpu.memory_space<vmem>>, vector<32x1xf32>
    %62 = vector.broadcast %61 : vector<32x1xf32> to vector<32x256xf32>
    %63 = arith.addf %60, %62 : vector<32x256xf32>
    %cst_31 = arith.constant 0.000000e+00 : f32
    %64 = vector.broadcast %cst_31 : f32 to vector<32x256xf32>
    %65 = arith.maximumf %63, %64 : vector<32x256xf32>
    %c0_32 = arith.constant 0 : index
    %c0_33 = arith.constant 0 : index
    %66 = vector.load %arg14[%c0_32, %c0_33] : memref<4x288xbf16, #tpu.memory_space<vmem>>, vector<4x288xbf16>
    %cst_34 = arith.constant 0.000000e+00 : f32
    %67 = vector.broadcast %cst_34 : f32 to vector<32x17xf32>
    %68 = tpu.concatenate %67, %65, %67 in 1 : vector<32x17xf32>, vector<32x256xf32>, vector<32x17xf32> -> vector<32x290xf32>
    %69 = vector.extract_strided_slice %68 {offsets = [0, 0], sizes = [32, 256], strides = [1, 1]} : vector<32x290xf32> to vector<32x256xf32>
    %70 = vector.broadcast %2 : vector<1x256xf32> to vector<32x256xf32>
    %71 = arith.mulf %69, %70 : vector<32x256xf32>
    %72 = vector.extract_strided_slice %68 {offsets = [0, 1], sizes = [32, 256], strides = [1, 1]} : vector<32x290xf32> to vector<32x256xf32>
    %73 = vector.extract_strided_slice %68 {offsets = [0, 2], sizes = [32, 256], strides = [1, 1]} : vector<32x290xf32> to vector<32x256xf32>
    %74 = vector.broadcast %3 : vector<1x256xf32> to vector<32x256xf32>
    %75 = arith.mulf %73, %74 : vector<32x256xf32>
    %76 = vector.extract_strided_slice %68 {offsets = [0, 16], sizes = [32, 256], strides = [1, 1]} : vector<32x290xf32> to vector<32x256xf32>
    %77 = vector.broadcast %2 : vector<1x256xf32> to vector<32x256xf32>
    %78 = arith.mulf %76, %77 : vector<32x256xf32>
    %79 = vector.extract_strided_slice %68 {offsets = [0, 17], sizes = [32, 256], strides = [1, 1]} : vector<32x290xf32> to vector<32x256xf32>
    %80 = vector.extract_strided_slice %68 {offsets = [0, 18], sizes = [32, 256], strides = [1, 1]} : vector<32x290xf32> to vector<32x256xf32>
    %81 = vector.broadcast %3 : vector<1x256xf32> to vector<32x256xf32>
    %82 = arith.mulf %80, %81 : vector<32x256xf32>
    %83 = vector.extract_strided_slice %68 {offsets = [0, 32], sizes = [32, 256], strides = [1, 1]} : vector<32x290xf32> to vector<32x256xf32>
    %84 = vector.broadcast %2 : vector<1x256xf32> to vector<32x256xf32>
    %85 = arith.mulf %83, %84 : vector<32x256xf32>
    %86 = vector.extract_strided_slice %68 {offsets = [0, 33], sizes = [32, 256], strides = [1, 1]} : vector<32x290xf32> to vector<32x256xf32>
    %87 = vector.extract_strided_slice %68 {offsets = [0, 34], sizes = [32, 256], strides = [1, 1]} : vector<32x290xf32> to vector<32x256xf32>
    %88 = vector.broadcast %3 : vector<1x256xf32> to vector<32x256xf32>
    %89 = arith.mulf %87, %88 : vector<32x256xf32>
    %90 = tpu.concatenate %71, %72, %75, %78, %79, %82, %85, %86, %89 in 0 : vector<32x256xf32>, vector<32x256xf32>, vector<32x256xf32>, vector<32x256xf32>, vector<32x256xf32>, vector<32x256xf32>, vector<32x256xf32>, vector<32x256xf32>, vector<32x256xf32> -> vector<288x256xf32>
    %91 = arith.truncf %90 : vector<288x256xf32> to vector<288x256xbf16>
    %cst_35 = arith.constant dense<0.000000e+00> : vector<4x256xf32>
    %92 = tpu.matmul %66, %91, %cst_35 {dimension_numbers = #tpu.dot_dimension_numbers<[1], [0], [0], [1], [0, 0, 1, 1], [], []>} : vector<4x288xbf16>, vector<288x256xbf16>, vector<4x256xf32> -> vector<4x256xf32>
    %c0_36 = arith.constant 0 : index
    %c0_37 = arith.constant 0 : index
    %93 = vector.load %arg15[%c0_36, %c0_37] : memref<4x1xf32, #tpu.memory_space<vmem>>, vector<4x1xf32>
    %94 = vector.broadcast %93 : vector<4x1xf32> to vector<4x256xf32>
    %95 = arith.addf %92, %94 : vector<4x256xf32>
    %c0_38 = arith.constant 0 : index
    %c0_39 = arith.constant 0 : index
    %96 = vector.load %arg16[%c0_38, %c0_39] : memref<2x1xf32, #tpu.memory_space<vmem>>, vector<2x1xf32>
    %97 = vector.extract_strided_slice %95 {offsets = [0, 0], sizes = [2, 256], strides = [1, 1]} : vector<4x256xf32> to vector<2x256xf32>
    %98 = math.tanh %97 : vector<2x256xf32>
    %99 = vector.broadcast %96 : vector<2x1xf32> to vector<2x256xf32>
    %100 = arith.mulf %99, %98 : vector<2x256xf32>
    %101 = vector.extract_strided_slice %95 {offsets = [2, 0], sizes = [2, 256], strides = [1, 1]} : vector<4x256xf32> to vector<2x256xf32>
    %102 = arith.addf %10, %101 : vector<2x256xf32>
    %103 = math.exp %100 : vector<2x256xf32>
    %104 = arith.mulf %102, %103 : vector<2x256xf32>
    %105 = tpu.concatenate %104, %11 in 0 : vector<2x256xf32>, vector<2x256xf32> -> vector<4x256xf32>
    %c0_40 = arith.constant 0 : index
    %c0_41 = arith.constant 0 : index
    %c0_42 = arith.constant 0 : index
    %106 = vector.load %arg17[%c0_40, %c0_41, %c0_42] : memref<1x4x256xf32, #tpu.memory_space<vmem>>, vector<1x4x256xf32>
    %107 = vector.shape_cast %106 : vector<1x4x256xf32> to vector<4x256xf32>
    %108 = vector.shape_cast %105 : vector<4x256xf32> to vector<1x4x256xf32>
    tpu.vector_store %arg17[%c0_40, %c0_41, %c0_42], %108 {strides = array<i32>} : memref<1x4x256xf32, #tpu.memory_space<vmem>>, vector<1x4x256xf32>,
    %cst_43 = arith.constant dense<0.000000e+00> : vector<2xf32>
    %109 = vector.multi_reduction <add>, %100, %cst_43 [1] : vector<2x256xf32> to vector<2xf32>
    %110 = vector.shape_cast %109 : vector<2xf32> to vector<2x1xf32>
    %cst_44 = arith.constant dense<0.000000e+00> : vector<1xf32>
    %111 = vector.multi_reduction <add>, %110, %cst_44 [0] : vector<2x1xf32> to vector<1xf32>
    %112 = vector.shape_cast %111 : vector<1xf32> to vector<1x1xf32>
    %113 = vector.shape_cast %112 : vector<1x1xf32> to vector<1x1xf32>
    %114 = vector.broadcast %113 : vector<1x1xf32> to vector<1x128xf32>
    %c0_45 = arith.constant 0 : index
    %c0_46 = arith.constant 0 : index
    %c0_47 = arith.constant 0 : index
    %115 = vector.load %arg18[%c0_45, %c0_46, %c0_47] : memref<1x1x128xf32, #tpu.memory_space<vmem>>, vector<1x1x128xf32>
    %116 = vector.shape_cast %115 : vector<1x1x128xf32> to vector<1x128xf32>
    %117 = vector.shape_cast %114 : vector<1x128xf32> to vector<1x1x128xf32>
    tpu.vector_store %arg18[%c0_45, %c0_46, %c0_47], %117 {strides = array<i32>} : memref<1x1x128xf32, #tpu.memory_space<vmem>>, vector<1x1x128xf32>,
    return
  }
  func.func @transform_0(%arg0: i32) -> (i32, i32, i32) {
    %c0_i32 = arith.constant 0 : i32
    %c0_i32_0 = arith.constant 0 : i32
    %c0_i32_1 = arith.constant 0 : i32
    return %arg0, %c0_i32, %c0_i32_0 : i32, i32, i32
  }
  func.func @transform_1(%arg0: i32) -> (i32, i32) {
    %c0_i32 = arith.constant 0 : i32
    %c0_i32_0 = arith.constant 0 : i32
    %c0_i32_1 = arith.constant 0 : i32
    return %c0_i32, %c0_i32_0 : i32, i32
  }
  func.func @transform_2(%arg0: i32) -> (i32, i32) {
    %c0_i32 = arith.constant 0 : i32
    %c0_i32_0 = arith.constant 0 : i32
    %c0_i32_1 = arith.constant 0 : i32
    return %c0_i32, %c0_i32_0 : i32, i32
  }
  func.func @transform_3(%arg0: i32) -> (i32, i32) {
    %c0_i32 = arith.constant 0 : i32
    %c0_i32_0 = arith.constant 0 : i32
    %c0_i32_1 = arith.constant 0 : i32
    return %c0_i32, %c0_i32_0 : i32, i32
  }
  func.func @transform_4(%arg0: i32) -> (i32, i32) {
    %c0_i32 = arith.constant 0 : i32
    %c0_i32_0 = arith.constant 0 : i32
    %c0_i32_1 = arith.constant 0 : i32
    return %c0_i32, %c0_i32_0 : i32, i32
  }
  func.func @transform_5(%arg0: i32) -> (i32, i32) {
    %c0_i32 = arith.constant 0 : i32
    %c0_i32_0 = arith.constant 0 : i32
    %c0_i32_1 = arith.constant 0 : i32
    return %c0_i32, %c0_i32_0 : i32, i32
  }
  func.func @transform_6(%arg0: i32) -> (i32, i32) {
    %c0_i32 = arith.constant 0 : i32
    %c0_i32_0 = arith.constant 0 : i32
    %c0_i32_1 = arith.constant 0 : i32
    return %c0_i32, %c0_i32_0 : i32, i32
  }
  func.func @transform_7(%arg0: i32) -> (i32, i32) {
    %c0_i32 = arith.constant 0 : i32
    %c0_i32_0 = arith.constant 0 : i32
    %c0_i32_1 = arith.constant 0 : i32
    return %c0_i32, %c0_i32_0 : i32, i32
  }
  func.func @transform_8(%arg0: i32) -> (i32, i32) {
    %c0_i32 = arith.constant 0 : i32
    %c0_i32_0 = arith.constant 0 : i32
    %c0_i32_1 = arith.constant 0 : i32
    return %c0_i32, %c0_i32_0 : i32, i32
  }
  func.func @transform_9(%arg0: i32) -> (i32, i32) {
    %c0_i32 = arith.constant 0 : i32
    %c0_i32_0 = arith.constant 0 : i32
    %c0_i32_1 = arith.constant 0 : i32
    return %c0_i32, %c0_i32_0 : i32, i32
  }
  func.func @transform_10(%arg0: i32) -> (i32, i32) {
    %c0_i32 = arith.constant 0 : i32
    %c0_i32_0 = arith.constant 0 : i32
    %c0_i32_1 = arith.constant 0 : i32
    return %c0_i32, %c0_i32_0 : i32, i32
  }
  func.func @transform_11(%arg0: i32) -> (i32, i32) {
    %c0_i32 = arith.constant 0 : i32
    %c0_i32_0 = arith.constant 0 : i32
    %c0_i32_1 = arith.constant 0 : i32
    return %c0_i32, %c0_i32_0 : i32, i32
  }
  func.func @transform_12(%arg0: i32) -> (i32, i32) {
    %c0_i32 = arith.constant 0 : i32
    %c0_i32_0 = arith.constant 0 : i32
    %c0_i32_1 = arith.constant 0 : i32
    return %c0_i32, %c0_i32_0 : i32, i32
  }
  func.func @transform_13(%arg0: i32) -> (i32, i32) {
    %c0_i32 = arith.constant 0 : i32
    %c0_i32_0 = arith.constant 0 : i32
    %c0_i32_1 = arith.constant 0 : i32
    return %c0_i32, %c0_i32_0 : i32, i32
  }
  func.func @transform_14(%arg0: i32) -> (i32, i32) {
    %c0_i32 = arith.constant 0 : i32
    %c0_i32_0 = arith.constant 0 : i32
    %c0_i32_1 = arith.constant 0 : i32
    return %c0_i32, %c0_i32_0 : i32, i32
  }
  func.func @transform_15(%arg0: i32) -> (i32, i32) {
    %c0_i32 = arith.constant 0 : i32
    %c0_i32_0 = arith.constant 0 : i32
    %c0_i32_1 = arith.constant 0 : i32
    return %c0_i32, %c0_i32_0 : i32, i32
  }
  func.func @transform_16(%arg0: i32) -> (i32, i32, i32) {
    %c0_i32 = arith.constant 0 : i32
    %c0_i32_0 = arith.constant 0 : i32
    %c0_i32_1 = arith.constant 0 : i32
    return %arg0, %c0_i32, %c0_i32_0 : i32, i32, i32
  }
  func.func @transform_17(%arg0: i32) -> (i32, i32, i32) {
    %c0_i32 = arith.constant 0 : i32
    %c0_i32_0 = arith.constant 0 : i32
    %c0_i32_1 = arith.constant 0 : i32
    return %arg0, %c0_i32, %c0_i32_0 : i32, i32, i32
  }
}

module attributes {stable_mosaic.version = 11 : i64} {
  func.func @_flow_step_kernel(%arg0: i32, %arg1: memref<1x8x64xf32, #tpu.memory_space<vmem>>, %arg2: memref<1x64xf32, #tpu.memory_space<vmem>>, %arg3: memref<1x64xf32, #tpu.memory_space<vmem>>, %arg4: memref<8x8xbf16, #tpu.memory_space<vmem>>, %arg5: memref<8x1xf32, #tpu.memory_space<vmem>>, %arg6: memref<4x1xf32, #tpu.memory_space<vmem>>, %arg7: memref<4x1xf32, #tpu.memory_space<vmem>>, %arg8: memref<32x36xbf16, #tpu.memory_space<vmem>>, %arg9: memref<32x1xf32, #tpu.memory_space<vmem>>, %arg10: memref<32x1xf32, #tpu.memory_space<vmem>>, %arg11: memref<32x32xbf16, #tpu.memory_space<vmem>>, %arg12: memref<32x1xf32, #tpu.memory_space<vmem>>, %arg13: memref<32x1xf32, #tpu.memory_space<vmem>>, %arg14: memref<8x288xbf16, #tpu.memory_space<vmem>>, %arg15: memref<8x1xf32, #tpu.memory_space<vmem>>, %arg16: memref<4x1xf32, #tpu.memory_space<vmem>>, %arg17: memref<1x8x64xf32, #tpu.memory_space<vmem>>, %arg18: memref<1x1x128xf32, #tpu.memory_space<vmem>>) attributes {dimension_semantics = [#tpu.dimension_semantics<parallel>], iteration_bounds = array<i64: 2>, scalar_prefetch = 0 : i64, scratch_operands = 0 : i64, tpu.core_type = #tpu.core_type<tc>, window_params = [{transform_indices = @transform_0, window_bounds = array<i64: 1, 8, 64>}, {pipeline_mode = #tpu.pipeline_mode<synchronous>, transform_indices = @transform_1, window_bounds = array<i64: 1, 64>}, {pipeline_mode = #tpu.pipeline_mode<synchronous>, transform_indices = @transform_2, window_bounds = array<i64: 1, 64>}, {pipeline_mode = #tpu.pipeline_mode<synchronous>, transform_indices = @transform_3, window_bounds = array<i64: 8, 8>}, {pipeline_mode = #tpu.pipeline_mode<synchronous>, transform_indices = @transform_4, window_bounds = array<i64: 8, 1>}, {pipeline_mode = #tpu.pipeline_mode<synchronous>, transform_indices = @transform_5, window_bounds = array<i64: 4, 1>}, {pipeline_mode = #tpu.pipeline_mode<synchronous>, transform_indices = @transform_6, window_bounds = array<i64: 4, 1>}, {pipeline_mode = #tpu.pipeline_mode<synchronous>, transform_indices = @transform_7, window_bounds = array<i64: 32, 36>}, {pipeline_mode = #tpu.pipeline_mode<synchronous>, transform_indices = @transform_8, window_bounds = array<i64: 32, 1>}, {pipeline_mode = #tpu.pipeline_mode<synchronous>, transform_indices = @transform_9, window_bounds = array<i64: 32, 1>}, {pipeline_mode = #tpu.pipeline_mode<synchronous>, transform_indices = @transform_10, window_bounds = array<i64: 32, 32>}, {pipeline_mode = #tpu.pipeline_mode<synchronous>, transform_indices = @transform_11, window_bounds = array<i64: 32, 1>}, {pipeline_mode = #tpu.pipeline_mode<synchronous>, transform_indices = @transform_12, window_bounds = array<i64: 32, 1>}, {pipeline_mode = #tpu.pipeline_mode<synchronous>, transform_indices = @transform_13, window_bounds = array<i64: 8, 288>}, {pipeline_mode = #tpu.pipeline_mode<synchronous>, transform_indices = @transform_14, window_bounds = array<i64: 8, 1>}, {pipeline_mode = #tpu.pipeline_mode<synchronous>, transform_indices = @transform_15, window_bounds = array<i64: 4, 1>}, {transform_indices = @transform_16, window_bounds = array<i64: 1, 8, 64>}, {transform_indices = @transform_17, window_bounds = array<i64: 1, 1, 128>}]} {
    %c0 = arith.constant 0 : index
    %c0_0 = arith.constant 0 : index
    %c0_1 = arith.constant 0 : index
    %0 = vector.load %arg1[%c0, %c0_0, %c0_1] : memref<1x8x64xf32, #tpu.memory_space<vmem>>, vector<1x8x64xf32>
    %1 = vector.shape_cast %0 : vector<1x8x64xf32> to vector<8x64xf32>
    %c0_2 = arith.constant 0 : index
    %c0_3 = arith.constant 0 : index
    %2 = vector.load %arg2[%c0_2, %c0_3] : memref<1x64xf32, #tpu.memory_space<vmem>>, vector<1x64xf32>
    %c0_4 = arith.constant 0 : index
    %c0_5 = arith.constant 0 : index
    %3 = vector.load %arg3[%c0_4, %c0_5] : memref<1x64xf32, #tpu.memory_space<vmem>>, vector<1x64xf32>
    %c0_6 = arith.constant 0 : index
    %c0_7 = arith.constant 0 : index
    %4 = vector.load %arg4[%c0_6, %c0_7] : memref<8x8xbf16, #tpu.memory_space<vmem>>, vector<8x8xbf16>
    %5 = arith.truncf %1 : vector<8x64xf32> to vector<8x64xbf16>
    %cst = arith.constant dense<0.000000e+00> : vector<8x64xf32>
    %6 = tpu.matmul %4, %5, %cst {dimension_numbers = #tpu.dot_dimension_numbers<[1], [0], [0], [1], [0, 0, 1, 1], [], []>} : vector<8x8xbf16>, vector<8x64xbf16>, vector<8x64xf32> -> vector<8x64xf32>
    %c0_8 = arith.constant 0 : index
    %c0_9 = arith.constant 0 : index
    %7 = vector.load %arg5[%c0_8, %c0_9] : memref<8x1xf32, #tpu.memory_space<vmem>>, vector<8x1xf32>
    %8 = vector.broadcast %7 : vector<8x1xf32> to vector<8x64xf32>
    %9 = arith.addf %6, %8 : vector<8x64xf32>
    %10 = vector.extract_strided_slice %9 {offsets = [0, 0], sizes = [4, 64], strides = [1, 1]} : vector<8x64xf32> to vector<4x64xf32>
    %11 = vector.extract_strided_slice %9 {offsets = [4, 0], sizes = [4, 64], strides = [1, 1]} : vector<8x64xf32> to vector<4x64xf32>
    %c0_10 = arith.constant 0 : index
    %c0_11 = arith.constant 0 : index
    %12 = vector.load %arg6[%c0_10, %c0_11] : memref<4x1xf32, #tpu.memory_space<vmem>>, vector<4x1xf32>
    %13 = vector.broadcast %12 : vector<4x1xf32> to vector<4x64xf32>
    %14 = arith.mulf %11, %13 : vector<4x64xf32>
    %c0_12 = arith.constant 0 : index
    %c0_13 = arith.constant 0 : index
    %15 = vector.load %arg7[%c0_12, %c0_13] : memref<4x1xf32, #tpu.memory_space<vmem>>, vector<4x1xf32>
    %16 = vector.broadcast %15 : vector<4x1xf32> to vector<4x64xf32>
    %17 = arith.addf %14, %16 : vector<4x64xf32>
    %cst_14 = arith.constant 0.000000e+00 : f32
    %18 = vector.broadcast %cst_14 : f32 to vector<4x64xf32>
    %19 = arith.maximumf %17, %18 : vector<4x64xf32>
    %c0_15 = arith.constant 0 : index
    %c0_16 = arith.constant 0 : index
    %20 = vector.load %arg8[%c0_15, %c0_16] : memref<32x36xbf16, #tpu.memory_space<vmem>>, vector<32x36xbf16>
    %cst_17 = arith.constant 0.000000e+00 : f32
    %21 = vector.broadcast %cst_17 : f32 to vector<4x9xf32>
    %22 = tpu.concatenate %21, %19, %21 in 1 : vector<4x9xf32>, vector<4x64xf32>, vector<4x9xf32> -> vector<4x82xf32>
    %23 = vector.extract_strided_slice %22 {offsets = [0, 0], sizes = [4, 64], strides = [1, 1]} : vector<4x82xf32> to vector<4x64xf32>
    %24 = vector.broadcast %2 : vector<1x64xf32> to vector<4x64xf32>
    %25 = arith.mulf %23, %24 : vector<4x64xf32>
    %26 = vector.extract_strided_slice %22 {offsets = [0, 1], sizes = [4, 64], strides = [1, 1]} : vector<4x82xf32> to vector<4x64xf32>
    %27 = vector.extract_strided_slice %22 {offsets = [0, 2], sizes = [4, 64], strides = [1, 1]} : vector<4x82xf32> to vector<4x64xf32>
    %28 = vector.broadcast %3 : vector<1x64xf32> to vector<4x64xf32>
    %29 = arith.mulf %27, %28 : vector<4x64xf32>
    %30 = vector.extract_strided_slice %22 {offsets = [0, 8], sizes = [4, 64], strides = [1, 1]} : vector<4x82xf32> to vector<4x64xf32>
    %31 = vector.broadcast %2 : vector<1x64xf32> to vector<4x64xf32>
    %32 = arith.mulf %30, %31 : vector<4x64xf32>
    %33 = vector.extract_strided_slice %22 {offsets = [0, 9], sizes = [4, 64], strides = [1, 1]} : vector<4x82xf32> to vector<4x64xf32>
    %34 = vector.extract_strided_slice %22 {offsets = [0, 10], sizes = [4, 64], strides = [1, 1]} : vector<4x82xf32> to vector<4x64xf32>
    %35 = vector.broadcast %3 : vector<1x64xf32> to vector<4x64xf32>
    %36 = arith.mulf %34, %35 : vector<4x64xf32>
    %37 = vector.extract_strided_slice %22 {offsets = [0, 16], sizes = [4, 64], strides = [1, 1]} : vector<4x82xf32> to vector<4x64xf32>
    %38 = vector.broadcast %2 : vector<1x64xf32> to vector<4x64xf32>
    %39 = arith.mulf %37, %38 : vector<4x64xf32>
    %40 = vector.extract_strided_slice %22 {offsets = [0, 17], sizes = [4, 64], strides = [1, 1]} : vector<4x82xf32> to vector<4x64xf32>
    %41 = vector.extract_strided_slice %22 {offsets = [0, 18], sizes = [4, 64], strides = [1, 1]} : vector<4x82xf32> to vector<4x64xf32>
    %42 = vector.broadcast %3 : vector<1x64xf32> to vector<4x64xf32>
    %43 = arith.mulf %41, %42 : vector<4x64xf32>
    %44 = tpu.concatenate %25, %26, %29, %32, %33, %36, %39, %40, %43 in 0 : vector<4x64xf32>, vector<4x64xf32>, vector<4x64xf32>, vector<4x64xf32>, vector<4x64xf32>, vector<4x64xf32>, vector<4x64xf32>, vector<4x64xf32>, vector<4x64xf32> -> vector<36x64xf32>
    %45 = arith.truncf %44 : vector<36x64xf32> to vector<36x64xbf16>
    %cst_18 = arith.constant dense<0.000000e+00> : vector<32x64xf32>
    %46 = tpu.matmul %20, %45, %cst_18 {dimension_numbers = #tpu.dot_dimension_numbers<[1], [0], [0], [1], [0, 0, 1, 1], [], []>} : vector<32x36xbf16>, vector<36x64xbf16>, vector<32x64xf32> -> vector<32x64xf32>
    %c0_19 = arith.constant 0 : index
    %c0_20 = arith.constant 0 : index
    %47 = vector.load %arg9[%c0_19, %c0_20] : memref<32x1xf32, #tpu.memory_space<vmem>>, vector<32x1xf32>
    %48 = vector.broadcast %47 : vector<32x1xf32> to vector<32x64xf32>
    %49 = arith.mulf %46, %48 : vector<32x64xf32>
    %c0_21 = arith.constant 0 : index
    %c0_22 = arith.constant 0 : index
    %50 = vector.load %arg10[%c0_21, %c0_22] : memref<32x1xf32, #tpu.memory_space<vmem>>, vector<32x1xf32>
    %51 = vector.broadcast %50 : vector<32x1xf32> to vector<32x64xf32>
    %52 = arith.addf %49, %51 : vector<32x64xf32>
    %cst_23 = arith.constant 0.000000e+00 : f32
    %53 = vector.broadcast %cst_23 : f32 to vector<32x64xf32>
    %54 = arith.maximumf %52, %53 : vector<32x64xf32>
    %c0_24 = arith.constant 0 : index
    %c0_25 = arith.constant 0 : index
    %55 = vector.load %arg11[%c0_24, %c0_25] : memref<32x32xbf16, #tpu.memory_space<vmem>>, vector<32x32xbf16>
    %56 = arith.truncf %54 : vector<32x64xf32> to vector<32x64xbf16>
    %cst_26 = arith.constant dense<0.000000e+00> : vector<32x64xf32>
    %57 = tpu.matmul %55, %56, %cst_26 {dimension_numbers = #tpu.dot_dimension_numbers<[1], [0], [0], [1], [0, 0, 1, 1], [], []>} : vector<32x32xbf16>, vector<32x64xbf16>, vector<32x64xf32> -> vector<32x64xf32>
    %c0_27 = arith.constant 0 : index
    %c0_28 = arith.constant 0 : index
    %58 = vector.load %arg12[%c0_27, %c0_28] : memref<32x1xf32, #tpu.memory_space<vmem>>, vector<32x1xf32>
    %59 = vector.broadcast %58 : vector<32x1xf32> to vector<32x64xf32>
    %60 = arith.mulf %57, %59 : vector<32x64xf32>
    %c0_29 = arith.constant 0 : index
    %c0_30 = arith.constant 0 : index
    %61 = vector.load %arg13[%c0_29, %c0_30] : memref<32x1xf32, #tpu.memory_space<vmem>>, vector<32x1xf32>
    %62 = vector.broadcast %61 : vector<32x1xf32> to vector<32x64xf32>
    %63 = arith.addf %60, %62 : vector<32x64xf32>
    %cst_31 = arith.constant 0.000000e+00 : f32
    %64 = vector.broadcast %cst_31 : f32 to vector<32x64xf32>
    %65 = arith.maximumf %63, %64 : vector<32x64xf32>
    %c0_32 = arith.constant 0 : index
    %c0_33 = arith.constant 0 : index
    %66 = vector.load %arg14[%c0_32, %c0_33] : memref<8x288xbf16, #tpu.memory_space<vmem>>, vector<8x288xbf16>
    %cst_34 = arith.constant 0.000000e+00 : f32
    %67 = vector.broadcast %cst_34 : f32 to vector<32x9xf32>
    %68 = tpu.concatenate %67, %65, %67 in 1 : vector<32x9xf32>, vector<32x64xf32>, vector<32x9xf32> -> vector<32x82xf32>
    %69 = vector.extract_strided_slice %68 {offsets = [0, 0], sizes = [32, 64], strides = [1, 1]} : vector<32x82xf32> to vector<32x64xf32>
    %70 = vector.broadcast %2 : vector<1x64xf32> to vector<32x64xf32>
    %71 = arith.mulf %69, %70 : vector<32x64xf32>
    %72 = vector.extract_strided_slice %68 {offsets = [0, 1], sizes = [32, 64], strides = [1, 1]} : vector<32x82xf32> to vector<32x64xf32>
    %73 = vector.extract_strided_slice %68 {offsets = [0, 2], sizes = [32, 64], strides = [1, 1]} : vector<32x82xf32> to vector<32x64xf32>
    %74 = vector.broadcast %3 : vector<1x64xf32> to vector<32x64xf32>
    %75 = arith.mulf %73, %74 : vector<32x64xf32>
    %76 = vector.extract_strided_slice %68 {offsets = [0, 8], sizes = [32, 64], strides = [1, 1]} : vector<32x82xf32> to vector<32x64xf32>
    %77 = vector.broadcast %2 : vector<1x64xf32> to vector<32x64xf32>
    %78 = arith.mulf %76, %77 : vector<32x64xf32>
    %79 = vector.extract_strided_slice %68 {offsets = [0, 9], sizes = [32, 64], strides = [1, 1]} : vector<32x82xf32> to vector<32x64xf32>
    %80 = vector.extract_strided_slice %68 {offsets = [0, 10], sizes = [32, 64], strides = [1, 1]} : vector<32x82xf32> to vector<32x64xf32>
    %81 = vector.broadcast %3 : vector<1x64xf32> to vector<32x64xf32>
    %82 = arith.mulf %80, %81 : vector<32x64xf32>
    %83 = vector.extract_strided_slice %68 {offsets = [0, 16], sizes = [32, 64], strides = [1, 1]} : vector<32x82xf32> to vector<32x64xf32>
    %84 = vector.broadcast %2 : vector<1x64xf32> to vector<32x64xf32>
    %85 = arith.mulf %83, %84 : vector<32x64xf32>
    %86 = vector.extract_strided_slice %68 {offsets = [0, 17], sizes = [32, 64], strides = [1, 1]} : vector<32x82xf32> to vector<32x64xf32>
    %87 = vector.extract_strided_slice %68 {offsets = [0, 18], sizes = [32, 64], strides = [1, 1]} : vector<32x82xf32> to vector<32x64xf32>
    %88 = vector.broadcast %3 : vector<1x64xf32> to vector<32x64xf32>
    %89 = arith.mulf %87, %88 : vector<32x64xf32>
    %90 = tpu.concatenate %71, %72, %75, %78, %79, %82, %85, %86, %89 in 0 : vector<32x64xf32>, vector<32x64xf32>, vector<32x64xf32>, vector<32x64xf32>, vector<32x64xf32>, vector<32x64xf32>, vector<32x64xf32>, vector<32x64xf32>, vector<32x64xf32> -> vector<288x64xf32>
    %91 = arith.truncf %90 : vector<288x64xf32> to vector<288x64xbf16>
    %cst_35 = arith.constant dense<0.000000e+00> : vector<8x64xf32>
    %92 = tpu.matmul %66, %91, %cst_35 {dimension_numbers = #tpu.dot_dimension_numbers<[1], [0], [0], [1], [0, 0, 1, 1], [], []>} : vector<8x288xbf16>, vector<288x64xbf16>, vector<8x64xf32> -> vector<8x64xf32>
    %c0_36 = arith.constant 0 : index
    %c0_37 = arith.constant 0 : index
    %93 = vector.load %arg15[%c0_36, %c0_37] : memref<8x1xf32, #tpu.memory_space<vmem>>, vector<8x1xf32>
    %94 = vector.broadcast %93 : vector<8x1xf32> to vector<8x64xf32>
    %95 = arith.addf %92, %94 : vector<8x64xf32>
    %c0_38 = arith.constant 0 : index
    %c0_39 = arith.constant 0 : index
    %96 = vector.load %arg16[%c0_38, %c0_39] : memref<4x1xf32, #tpu.memory_space<vmem>>, vector<4x1xf32>
    %97 = vector.extract_strided_slice %95 {offsets = [0, 0], sizes = [4, 64], strides = [1, 1]} : vector<8x64xf32> to vector<4x64xf32>
    %98 = math.tanh %97 : vector<4x64xf32>
    %99 = vector.broadcast %96 : vector<4x1xf32> to vector<4x64xf32>
    %100 = arith.mulf %99, %98 : vector<4x64xf32>
    %101 = vector.extract_strided_slice %95 {offsets = [4, 0], sizes = [4, 64], strides = [1, 1]} : vector<8x64xf32> to vector<4x64xf32>
    %102 = arith.addf %10, %101 : vector<4x64xf32>
    %103 = math.exp %100 : vector<4x64xf32>
    %104 = arith.mulf %102, %103 : vector<4x64xf32>
    %105 = tpu.concatenate %104, %11 in 0 : vector<4x64xf32>, vector<4x64xf32> -> vector<8x64xf32>
    %c0_40 = arith.constant 0 : index
    %c0_41 = arith.constant 0 : index
    %c0_42 = arith.constant 0 : index
    %106 = vector.load %arg17[%c0_40, %c0_41, %c0_42] : memref<1x8x64xf32, #tpu.memory_space<vmem>>, vector<1x8x64xf32>
    %107 = vector.shape_cast %106 : vector<1x8x64xf32> to vector<8x64xf32>
    %108 = vector.shape_cast %105 : vector<8x64xf32> to vector<1x8x64xf32>
    tpu.vector_store %arg17[%c0_40, %c0_41, %c0_42], %108 {strides = array<i32>} : memref<1x8x64xf32, #tpu.memory_space<vmem>>, vector<1x8x64xf32>,
    %cst_43 = arith.constant dense<0.000000e+00> : vector<4xf32>
    %109 = vector.multi_reduction <add>, %100, %cst_43 [1] : vector<4x64xf32> to vector<4xf32>
    %110 = vector.shape_cast %109 : vector<4xf32> to vector<4x1xf32>
    %cst_44 = arith.constant dense<0.000000e+00> : vector<1xf32>
    %111 = vector.multi_reduction <add>, %110, %cst_44 [0] : vector<4x1xf32> to vector<1xf32>
    %112 = vector.shape_cast %111 : vector<1xf32> to vector<1x1xf32>
    %113 = vector.shape_cast %112 : vector<1x1xf32> to vector<1x1xf32>
    %114 = vector.broadcast %113 : vector<1x1xf32> to vector<1x128xf32>
    %c0_45 = arith.constant 0 : index
    %c0_46 = arith.constant 0 : index
    %c0_47 = arith.constant 0 : index
    %115 = vector.load %arg18[%c0_45, %c0_46, %c0_47] : memref<1x1x128xf32, #tpu.memory_space<vmem>>, vector<1x1x128xf32>
    %116 = vector.shape_cast %115 : vector<1x1x128xf32> to vector<1x128xf32>
    %117 = vector.shape_cast %114 : vector<1x128xf32> to vector<1x1x128xf32>
    tpu.vector_store %arg18[%c0_45, %c0_46, %c0_47], %117 {strides = array<i32>} : memref<1x1x128xf32, #tpu.memory_space<vmem>>, vector<1x1x128xf32>,
    return
  }
  func.func @transform_0(%arg0: i32) -> (i32, i32, i32) {
    %c0_i32 = arith.constant 0 : i32
    %c0_i32_0 = arith.constant 0 : i32
    %c0_i32_1 = arith.constant 0 : i32
    return %arg0, %c0_i32, %c0_i32_0 : i32, i32, i32
  }
  func.func @transform_1(%arg0: i32) -> (i32, i32) {
    %c0_i32 = arith.constant 0 : i32
    %c0_i32_0 = arith.constant 0 : i32
    %c0_i32_1 = arith.constant 0 : i32
    return %c0_i32, %c0_i32_0 : i32, i32
  }
  func.func @transform_2(%arg0: i32) -> (i32, i32) {
    %c0_i32 = arith.constant 0 : i32
    %c0_i32_0 = arith.constant 0 : i32
    %c0_i32_1 = arith.constant 0 : i32
    return %c0_i32, %c0_i32_0 : i32, i32
  }
  func.func @transform_3(%arg0: i32) -> (i32, i32) {
    %c0_i32 = arith.constant 0 : i32
    %c0_i32_0 = arith.constant 0 : i32
    %c0_i32_1 = arith.constant 0 : i32
    return %c0_i32, %c0_i32_0 : i32, i32
  }
  func.func @transform_4(%arg0: i32) -> (i32, i32) {
    %c0_i32 = arith.constant 0 : i32
    %c0_i32_0 = arith.constant 0 : i32
    %c0_i32_1 = arith.constant 0 : i32
    return %c0_i32, %c0_i32_0 : i32, i32
  }
  func.func @transform_5(%arg0: i32) -> (i32, i32) {
    %c0_i32 = arith.constant 0 : i32
    %c0_i32_0 = arith.constant 0 : i32
    %c0_i32_1 = arith.constant 0 : i32
    return %c0_i32, %c0_i32_0 : i32, i32
  }
  func.func @transform_6(%arg0: i32) -> (i32, i32) {
    %c0_i32 = arith.constant 0 : i32
    %c0_i32_0 = arith.constant 0 : i32
    %c0_i32_1 = arith.constant 0 : i32
    return %c0_i32, %c0_i32_0 : i32, i32
  }
  func.func @transform_7(%arg0: i32) -> (i32, i32) {
    %c0_i32 = arith.constant 0 : i32
    %c0_i32_0 = arith.constant 0 : i32
    %c0_i32_1 = arith.constant 0 : i32
    return %c0_i32, %c0_i32_0 : i32, i32
  }
  func.func @transform_8(%arg0: i32) -> (i32, i32) {
    %c0_i32 = arith.constant 0 : i32
    %c0_i32_0 = arith.constant 0 : i32
    %c0_i32_1 = arith.constant 0 : i32
    return %c0_i32, %c0_i32_0 : i32, i32
  }
  func.func @transform_9(%arg0: i32) -> (i32, i32) {
    %c0_i32 = arith.constant 0 : i32
    %c0_i32_0 = arith.constant 0 : i32
    %c0_i32_1 = arith.constant 0 : i32
    return %c0_i32, %c0_i32_0 : i32, i32
  }
  func.func @transform_10(%arg0: i32) -> (i32, i32) {
    %c0_i32 = arith.constant 0 : i32
    %c0_i32_0 = arith.constant 0 : i32
    %c0_i32_1 = arith.constant 0 : i32
    return %c0_i32, %c0_i32_0 : i32, i32
  }
  func.func @transform_11(%arg0: i32) -> (i32, i32) {
    %c0_i32 = arith.constant 0 : i32
    %c0_i32_0 = arith.constant 0 : i32
    %c0_i32_1 = arith.constant 0 : i32
    return %c0_i32, %c0_i32_0 : i32, i32
  }
  func.func @transform_12(%arg0: i32) -> (i32, i32) {
    %c0_i32 = arith.constant 0 : i32
    %c0_i32_0 = arith.constant 0 : i32
    %c0_i32_1 = arith.constant 0 : i32
    return %c0_i32, %c0_i32_0 : i32, i32
  }
  func.func @transform_13(%arg0: i32) -> (i32, i32) {
    %c0_i32 = arith.constant 0 : i32
    %c0_i32_0 = arith.constant 0 : i32
    %c0_i32_1 = arith.constant 0 : i32
    return %c0_i32, %c0_i32_0 : i32, i32
  }
  func.func @transform_14(%arg0: i32) -> (i32, i32) {
    %c0_i32 = arith.constant 0 : i32
    %c0_i32_0 = arith.constant 0 : i32
    %c0_i32_1 = arith.constant 0 : i32
    return %c0_i32, %c0_i32_0 : i32, i32
  }
  func.func @transform_15(%arg0: i32) -> (i32, i32) {
    %c0_i32 = arith.constant 0 : i32
    %c0_i32_0 = arith.constant 0 : i32
    %c0_i32_1 = arith.constant 0 : i32
    return %c0_i32, %c0_i32_0 : i32, i32
  }
  func.func @transform_16(%arg0: i32) -> (i32, i32, i32) {
    %c0_i32 = arith.constant 0 : i32
    %c0_i32_0 = arith.constant 0 : i32
    %c0_i32_1 = arith.constant 0 : i32
    return %arg0, %c0_i32, %c0_i32_0 : i32, i32, i32
  }
  func.func @transform_17(%arg0: i32) -> (i32, i32, i32) {
    %c0_i32 = arith.constant 0 : i32
    %c0_i32_0 = arith.constant 0 : i32
    %c0_i32_1 = arith.constant 0 : i32
    return %arg0, %c0_i32, %c0_i32_0 : i32, i32, i32
  }
}

</mosaic_0001>

<llo_original>
// kernel: forward.6
$region0: #{forward.6}
  #allocation0 [shape = 'u32[]', space=smem, size = 0x4, offset = 0x4, fixed_abs, tag = 'smem constant byte address 0x4 - core index']
  #allocation1 [shape = 'u32[144,128]{1,0:T(1,128)}', space=vmem, size = 0x12000, scoped, tag = 'internal scratch']
  %s0 = inlined_call_operand.vmem [shape: f32[2,8,64], index: 0, kind: input, shape index: {}]
  %s1 = inlined_call_operand.vmem [shape: f32[1,64], index: 1, kind: input, shape index: {}]
  %s2 = inlined_call_operand.vmem [shape: f32[1,64], index: 2, kind: input, shape index: {}]
  %s3 = inlined_call_operand.vmem [shape: bf16[8,8], index: 3, kind: input, shape index: {}]
  %s4 = inlined_call_operand.vmem [shape: f32[8,1], index: 4, kind: input, shape index: {}]
  %s5 = inlined_call_operand.vmem [shape: f32[4,1], index: 5, kind: input, shape index: {}]
  %s6 = inlined_call_operand.vmem [shape: f32[4,1], index: 6, kind: input, shape index: {}]
  %s7 = inlined_call_operand.vmem [shape: bf16[32,36], index: 7, kind: input, shape index: {}]
  %s8 = inlined_call_operand.vmem [shape: f32[32,1], index: 8, kind: input, shape index: {}]
  %s9 = inlined_call_operand.vmem [shape: f32[32,1], index: 9, kind: input, shape index: {}]
  %s10 = inlined_call_operand.vmem [shape: bf16[32,32], index: 10, kind: input, shape index: {}]
  %s11 = inlined_call_operand.vmem [shape: f32[32,1], index: 11, kind: input, shape index: {}]
  %s12 = inlined_call_operand.vmem [shape: f32[32,1], index: 12, kind: input, shape index: {}]
  %s13 = inlined_call_operand.vmem [shape: bf16[8,288], index: 13, kind: input, shape index: {}]
  %s14 = inlined_call_operand.vmem [shape: f32[8,1], index: 14, kind: input, shape index: {}]
  %s15 = inlined_call_operand.vmem [shape: f32[4,1], index: 15, kind: input, shape index: {}]
  %s16 = inlined_call_operand.vmem [shape: f32[2,8,64], index: 16, kind: output, shape index: {0}]
  %s17 = inlined_call_operand.vmem [shape: f32[2,1,128], index: 17, kind: output, shape index: {1}]
  %18 = xla_tuple %s16, %s17
  %s19 = sld [smem:[#allocation0]]
  $region105: #{forward.6} parent=0
    _
  %s21 = ssub.s32 1, %s19
  %s22 = scalar_select 0, %s21, %s19
  loop: start=0, step=1, limit=4
  $region2: #{forward.6} parent=0 // loop_pre_header
    _
  $region3: #{forward.6} parent=0 // loop_header
    %s24 = sphi 0, %s28
    %p25 = scmp.ge.s32.totalorder %s24, 4
    %s34 = sphi 0, %s36
    %s37 = sphi 0, %s34
    %s38 = sphi 0, %s37
    %s54 = sphi 0, %s38
    %s58 = sphi 0, %s58
    %s60 = sphi 0, %s58
    %s61 = sphi 0, %s60
    %s75 = sphi 0, %s61
    %s79 = sphi 0, %s79
    %s81 = sphi 0, %s79
    %s82 = sphi 0, %s81
    %s96 = sphi 0, %s82
    %s100 = sphi 0, %s100
    %s102 = sphi 0, %s100
    %s103 = sphi 0, %s102
    %s117 = sphi 0, %s103
    %s121 = sphi 0, %s121
    %s123 = sphi 0, %s121
    %s124 = sphi 0, %s123
    %s138 = sphi 0, %s124
    %s142 = sphi 0, %s142
    %s144 = sphi 0, %s142
    %s145 = sphi 0, %s144
    %s159 = sphi 0, %s145
    %s163 = sphi 0, %s163
    %s165 = sphi 0, %s163
    %s166 = sphi 0, %s165
    %s180 = sphi 0, %s166
    %s184 = sphi 0, %s184
    %s186 = sphi 0, %s184
    %s187 = sphi 0, %s186
    %s201 = sphi 0, %s187
    %s205 = sphi 0, %s205
    %s207 = sphi 0, %s205
    %s208 = sphi 0, %s207
    %s222 = sphi 0, %s208
    %s226 = sphi 0, %s226
    %s228 = sphi 0, %s226
    %s229 = sphi 0, %s228
    %s243 = sphi 0, %s229
    %s247 = sphi 0, %s247
    %s249 = sphi 0, %s247
    %s250 = sphi 0, %s249
    %s264 = sphi 0, %s250
    %s268 = sphi 0, %s268
    %s270 = sphi 0, %s268
    %s271 = sphi 0, %s270
    %s285 = sphi 0, %s271
    %s289 = sphi 0, %s289
    %s291 = sphi 0, %s289
    %s292 = sphi 0, %s291
    %s306 = sphi 0, %s292
    %s310 = sphi 0, %s310
    %s312 = sphi 0, %s310
    %s313 = sphi 0, %s312
    %s327 = sphi 0, %s313
    %s331 = sphi 0, %s331
    %s333 = sphi 0, %s331
    %s334 = sphi 0, %s333
    %s348 = sphi 0, %s334
    %s352 = sphi 0, %s352
    %s354 = sphi 0, %s352
    %s355 = sphi 0, %s354
    %s369 = sphi 0, %s355
    %s375 = sphi 0, %s377
    %s378 = sphi 0, %s375
    %s379 = sphi 0, %s378
    %s395 = sphi 0, %s379
    %s401 = sphi 0, %s403
    %s404 = sphi 0, %s401
    %s405 = sphi 0, %s404
    %s421 = sphi 0, %s405
  $region4: #{forward.6} parent=0 // loop_header_branch
    %27 = sbr.rel (%p25) target = $region8
  $region5: #{forward.6} parent=0 // loop_body
    %s29 = ssub.s32 %s24, 1
    %s30 = ssub.s32 %s24, 2
    %s31 = sadd.s32 %s24, 1
    %s32 = ssub.s32 %s24, %s31
    %p33 = scmp.eq.s32.totalorder %s32, 0
    %s35 = sadd.s32 %s34, 1
    %s36 = scalar_select %p33, %s34, %s35
    %p39 = pneg %p33
    %p40 = scmp.eq.s32.totalorder %s24, 1
    %p41 = por %p39, %p40
    %p42 = scmp.ne.s32.totalorder %s34, %s37
    %p43 = scmp.eq.s32.totalorder %s24, 0
    %p44 = por %p42, %p43
    %p45 = scmp.ne.s32.totalorder %s34, %s37
    %p46 = scmp.eq.s32.totalorder %s29, 1
    %p47 = por %p45, %p46
    %p48 = scmp.ne.s32.totalorder %s37, %s38
    %p49 = scmp.eq.s32.totalorder %s29, 0
    %p50 = por %p48, %p49
    %p51 = scmp.ne.s32.totalorder %s37, %s38
    %p52 = scmp.eq.s32.totalorder %s30, 1
    %p53 = por %p51, %p52
    %p55 = scmp.ne.s32.totalorder %s38, %s54
    %p56 = scmp.eq.s32.totalorder %s30, 0
    %p57 = por %p55, %p56
    %s59 = sadd.s32 %s58, 1
    %p62 = scmp.eq.s32.totalorder %s24, 1
    %p63 = scmp.ne.s32.totalorder %s58, %s60
    %p64 = scmp.eq.s32.totalorder %s24, 0
    %p65 = por %p63, %p64
    %p66 = scmp.ne.s32.totalorder %s58, %s60
    %p67 = scmp.eq.s32.totalorder %s29, 1
    %p68 = por %p66, %p67
    %p69 = scmp.ne.s32.totalorder %s60, %s61
    %p70 = scmp.eq.s32.totalorder %s29, 0
    %p71 = por %p69, %p70
    %p72 = scmp.ne.s32.totalorder %s60, %s61
    %p73 = scmp.eq.s32.totalorder %s30, 1
    %p74 = por %p72, %p73
    %p76 = scmp.ne.s32.totalorder %s61, %s75
    %p77 = scmp.eq.s32.totalorder %s30, 0
    %p78 = por %p76, %p77
    %s80 = sadd.s32 %s79, 1
    %p83 = scmp.eq.s32.totalorder %s24, 1
    %p84 = scmp.ne.s32.totalorder %s79, %s81
    %p85 = scmp.eq.s32.totalorder %s24, 0
    %p86 = por %p84, %p85
    %p87 = scmp.ne.s32.totalorder %s79, %s81
    %p88 = scmp.eq.s32.totalorder %s29, 1
    %p89 = por %p87, %p88
    %p90 = scmp.ne.s32.totalorder %s81, %s82
    %p91 = scmp.eq.s32.totalorder %s29, 0
    %p92 = por %p90, %p91
    %p93 = scmp.ne.s32.totalorder %s81, %s82
    %p94 = scmp.eq.s32.totalorder %s30, 1
    %p95 = por %p93, %p94
    %p97 = scmp.ne.s32.totalorder %s82, %s96
    %p98 = scmp.eq.s32.totalorder %s30, 0
    %p99 = por %p97, %p98
    %s101 = sadd.s32 %s100, 1
    %p104 = scmp.eq.s32.totalorder %s24, 1
    %p105 = scmp.ne.s32.totalorder %s100, %s102
    %p106 = scmp.eq.s32.totalorder %s24, 0
    %p107 = por %p105, %p106
    %p108 = scmp.ne.s32.totalorder %s100, %s102
    %p109 = scmp.eq.s32.totalorder %s29, 1
    %p110 = por %p108, %p109
    %p111 = scmp.ne.s32.totalorder %s102, %s103
    %p112 = scmp.eq.s32.totalorder %s29, 0
    %p113 = por %p111, %p112
    %p114 = scmp.ne.s32.totalorder %s102, %s103
    %p115 = scmp.eq.s32.totalorder %s30, 1
    %p116 = por %p114, %p115
    %p118 = scmp.ne.s32.totalorder %s103, %s117
    %p119 = scmp.eq.s32.totalorder %s30, 0
    %p120 = por %p118, %p119
    %s122 = sadd.s32 %s121, 1
    %p125 = scmp.eq.s32.totalorder %s24, 1
    %p126 = scmp.ne.s32.totalorder %s121, %s123
    %p127 = scmp.eq.s32.totalorder %s24, 0
    %p128 = por %p126, %p127
    %p129 = scmp.ne.s32.totalorder %s121, %s123
    %p130 = scmp.eq.s32.totalorder %s29, 1
    %p131 = por %p129, %p130
    %p132 = scmp.ne.s32.totalorder %s123, %s124
    %p133 = scmp.eq.s32.totalorder %s29, 0
    %p134 = por %p132, %p133
    %p135 = scmp.ne.s32.totalorder %s123, %s124
    %p136 = scmp.eq.s32.totalorder %s30, 1
    %p137 = por %p135, %p136
    %p139 = scmp.ne.s32.totalorder %s124, %s138
    %p140 = scmp.eq.s32.totalorder %s30, 0
    %p141 = por %p139, %p140
    %s143 = sadd.s32 %s142, 1
    %p146 = scmp.eq.s32.totalorder %s24, 1
    %p147 = scmp.ne.s32.totalorder %s142, %s144
    %p148 = scmp.eq.s32.totalorder %s24, 0
    %p149 = por %p147, %p148
    %p150 = scmp.ne.s32.totalorder %s142, %s144
    %p151 = scmp.eq.s32.totalorder %s29, 1
    %p152 = por %p150, %p151
    %p153 = scmp.ne.s32.totalorder %s144, %s145
    %p154 = scmp.eq.s32.totalorder %s29, 0
    %p155 = por %p153, %p154
    %p156 = scmp.ne.s32.totalorder %s144, %s145
    %p157 = scmp.eq.s32.totalorder %s30, 1
    %p158 = por %p156, %p157
    %p160 = scmp.ne.s32.totalorder %s145, %s159
    %p161 = scmp.eq.s32.totalorder %s30, 0
    %p162 = por %p160, %p161
    %s164 = sadd.s32 %s163, 1
    %p167 = scmp.eq.s32.totalorder %s24, 1
    %p168 = scmp.ne.s32.totalorder %s163, %s165
    %p169 = scmp.eq.s32.totalorder %s24, 0
    %p170 = por %p168, %p169
    %p171 = scmp.ne.s32.totalorder %s163, %s165
    %p172 = scmp.eq.s32.totalorder %s29, 1
    %p173 = por %p171, %p172
    %p174 = scmp.ne.s32.totalorder %s165, %s166
    %p175 = scmp.eq.s32.totalorder %s29, 0
    %p176 = por %p174, %p175
    %p177 = scmp.ne.s32.totalorder %s165, %s166
    %p178 = scmp.eq.s32.totalorder %s30, 1
    %p179 = por %p177, %p178
    %p181 = scmp.ne.s32.totalorder %s166, %s180
    %p182 = scmp.eq.s32.totalorder %s30, 0
    %p183 = por %p181, %p182
    %s185 = sadd.s32 %s184, 1
    %p188 = scmp.eq.s32.totalorder %s24, 1
    %p189 = scmp.ne.s32.totalorder %s184, %s186
    %p190 = scmp.eq.s32.totalorder %s24, 0
    %p191 = por %p189, %p190
    %p192 = scmp.ne.s32.totalorder %s184, %s186
    %p193 = scmp.eq.s32.totalorder %s29, 1
    %p194 = por %p192, %p193
    %p195 = scmp.ne.s32.totalorder %s186, %s187
    %p196 = scmp.eq.s32.totalorder %s29, 0
    %p197 = por %p195, %p196
    %p198 = scmp.ne.s32.totalorder %s186, %s187
    %p199 = scmp.eq.s32.totalorder %s30, 1
    %p200 = por %p198, %p199
    %p202 = scmp.ne.s32.totalorder %s187, %s201
    %p203 = scmp.eq.s32.totalorder %s30, 0
    %p204 = por %p202, %p203
    %s206 = sadd.s32 %s205, 1
    %p209 = scmp.eq.s32.totalorder %s24, 1
    %p210 = scmp.ne.s32.totalorder %s205, %s207
    %p211 = scmp.eq.s32.totalorder %s24, 0
    %p212 = por %p210, %p211
    %p213 = scmp.ne.s32.totalorder %s205, %s207
    %p214 = scmp.eq.s32.totalorder %s29, 1
    %p215 = por %p213, %p214
    %p216 = scmp.ne.s32.totalorder %s207, %s208
    %p217 = scmp.eq.s32.totalorder %s29, 0
    %p218 = por %p216, %p217
    %p219 = scmp.ne.s32.totalorder %s207, %s208
    %p220 = scmp.eq.s32.totalorder %s30, 1
    %p221 = por %p219, %p220
    %p223 = scmp.ne.s32.totalorder %s208, %s222
    %p224 = scmp.eq.s32.totalorder %s30, 0
    %p225 = por %p223, %p224
    %s227 = sadd.s32 %s226, 1
    %p230 = scmp.eq.s32.totalorder %s24, 1
    %p231 = scmp.ne.s32.totalorder %s226, %s228
    %p232 = scmp.eq.s32.totalorder %s24, 0
    %p233 = por %p231, %p232
    %p234 = scmp.ne.s32.totalorder %s226, %s228
    %p235 = scmp.eq.s32.totalorder %s29, 1
    %p236 = por %p234, %p235
    %p237 = scmp.ne.s32.totalorder %s228, %s229
    %p238 = scmp.eq.s32.totalorder %s29, 0
    %p239 = por %p237, %p238
    %p240 = scmp.ne.s32.totalorder %s228, %s229
    %p241 = scmp.eq.s32.totalorder %s30, 1
    %p242 = por %p240, %p241
    %p244 = scmp.ne.s32.totalorder %s229, %s243
    %p245 = scmp.eq.s32.totalorder %s30, 0
    %p246 = por %p244, %p245
    %s248 = sadd.s32 %s247, 1
    %p251 = scmp.eq.s32.totalorder %s24, 1
    %p252 = scmp.ne.s32.totalorder %s247, %s249
    %p253 = scmp.eq.s32.totalorder %s24, 0
    %p254 = por %p252, %p253
    %p255 = scmp.ne.s32.totalorder %s247, %s249
    %p256 = scmp.eq.s32.totalorder %s29, 1
    %p257 = por %p255, %p256
    %p258 = scmp.ne.s32.totalorder %s249, %s250
    %p259 = scmp.eq.s32.totalorder %s29, 0
    %p260 = por %p258, %p259
    %p261 = scmp.ne.s32.totalorder %s249, %s250
    %p262 = scmp.eq.s32.totalorder %s30, 1
    %p263 = por %p261, %p262
    %p265 = scmp.ne.s32.totalorder %s250, %s264
    %p266 = scmp.eq.s32.totalorder %s30, 0
    %p267 = por %p265, %p266
    %s269 = sadd.s32 %s268, 1
    %p272 = scmp.eq.s32.totalorder %s24, 1
    %p273 = scmp.ne.s32.totalorder %s268, %s270
    %p274 = scmp.eq.s32.totalorder %s24, 0
    %p275 = por %p273, %p274
    %p276 = scmp.ne.s32.totalorder %s268, %s270
    %p277 = scmp.eq.s32.totalorder %s29, 1
    %p278 = por %p276, %p277
    %p279 = scmp.ne.s32.totalorder %s270, %s271
    %p280 = scmp.eq.s32.totalorder %s29, 0
    %p281 = por %p279, %p280
    %p282 = scmp.ne.s32.totalorder %s270, %s271
    %p283 = scmp.eq.s32.totalorder %s30, 1
    %p284 = por %p282, %p283
    %p286 = scmp.ne.s32.totalorder %s271, %s285
    %p287 = scmp.eq.s32.totalorder %s30, 0
    %p288 = por %p286, %p287
    %s290 = sadd.s32 %s289, 1
    %p293 = scmp.eq.s32.totalorder %s24, 1
    %p294 = scmp.ne.s32.totalorder %s289, %s291
    %p295 = scmp.eq.s32.totalorder %s24, 0
    %p296 = por %p294, %p295
    %p297 = scmp.ne.s32.totalorder %s289, %s291
    %p298 = scmp.eq.s32.totalorder %s29, 1
    %p299 = por %p297, %p298
    %p300 = scmp.ne.s32.totalorder %s291, %s292
    %p301 = scmp.eq.s32.totalorder %s29, 0
    %p302 = por %p300, %p301
    %p303 = scmp.ne.s32.totalorder %s291, %s292
    %p304 = scmp.eq.s32.totalorder %s30, 1
    %p305 = por %p303, %p304
    %p307 = scmp.ne.s32.totalorder %s292, %s306
    %p308 = scmp.eq.s32.totalorder %s30, 0
    %p309 = por %p307, %p308
    %s311 = sadd.s32 %s310, 1
    %p314 = scmp.eq.s32.totalorder %s24, 1
    %p315 = scmp.ne.s32.totalorder %s310, %s312
    %p316 = scmp.eq.s32.totalorder %s24, 0
    %p317 = por %p315, %p316
    %p318 = scmp.ne.s32.totalorder %s310, %s312
    %p319 = scmp.eq.s32.totalorder %s29, 1
    %p320 = por %p318, %p319
    %p321 = scmp.ne.s32.totalorder %s312, %s313
    %p322 = scmp.eq.s32.totalorder %s29, 0
    %p323 = por %p321, %p322
    %p324 = scmp.ne.s32.totalorder %s312, %s313
    %p325 = scmp.eq.s32.totalorder %s30, 1
    %p326 = por %p324, %p325
    %p328 = scmp.ne.s32.totalorder %s313, %s327
    %p329 = scmp.eq.s32.totalorder %s30, 0
    %p330 = por %p328, %p329
    %s332 = sadd.s32 %s331, 1
    %p335 = scmp.eq.s32.totalorder %s24, 1
    %p336 = scmp.ne.s32.totalorder %s331, %s333
    %p337 = scmp.eq.s32.totalorder %s24, 0
    %p338 = por %p336, %p337
    %p339 = scmp.ne.s32.totalorder %s331, %s333
    %p340 = scmp.eq.s32.totalorder %s29, 1
    %p341 = por %p339, %p340
    %p342 = scmp.ne.s32.totalorder %s333, %s334
    %p343 = scmp.eq.s32.totalorder %s29, 0
    %p344 = por %p342, %p343
    %p345 = scmp.ne.s32.totalorder %s333, %s334
    %p346 = scmp.eq.s32.totalorder %s30, 1
    %p347 = por %p345, %p346
    %p349 = scmp.ne.s32.totalorder %s334, %s348
    %p350 = scmp.eq.s32.totalorder %s30, 0
    %p351 = por %p349, %p350
    %s353 = sadd.s32 %s352, 1
    %p356 = scmp.eq.s32.totalorder %s24, 1
    %p357 = scmp.ne.s32.totalorder %s352, %s354
    %p358 = scmp.eq.s32.totalorder %s24, 0
    %p359 = por %p357, %p358
    %p360 = scmp.ne.s32.totalorder %s352, %s354
    %p361 = scmp.eq.s32.totalorder %s29, 1
    %p362 = por %p360, %p361
    %p363 = scmp.ne.s32.totalorder %s354, %s355
    %p364 = scmp.eq.s32.totalorder %s29, 0
    %p365 = por %p363, %p364
    %p366 = scmp.ne.s32.totalorder %s354, %s355
    %p367 = scmp.eq.s32.totalorder %s30, 1
    %p368 = por %p366, %p367
    %p370 = scmp.ne.s32.totalorder %s355, %s369
    %p371 = scmp.eq.s32.totalorder %s30, 0
    %p372 = por %p370, %p371
    %s373 = ssub.s32 %s24, %s31
    %p374 = scmp.eq.s32.totalorder %s373, 0
    %s376 = sadd.s32 %s375, 1
    %s377 = scalar_select %p374, %s375, %s376
    %p380 = pneg %p374
    %p381 = scmp.eq.s32.totalorder %s24, 1
    %p382 = por %p380, %p381
    %p383 = scmp.ne.s32.totalorder %s375, %s378
    %p384 = scmp.eq.s32.totalorder %s24, 0
    %p385 = por %p383, %p384
    %p386 = scmp.ne.s32.totalorder %s375, %s378
    %p387 = scmp.eq.s32.totalorder %s29, 1
    %p388 = por %p386, %p387
    %p389 = scmp.ne.s32.totalorder %s378, %s379
    %p390 = scmp.eq.s32.totalorder %s29, 0
    %p391 = por %p389, %p390
    %p392 = scmp.ne.s32.totalorder %s378, %s379
    %p393 = scmp.eq.s32.totalorder %s30, 1
    %p394 = por %p392, %p393
    %p396 = scmp.ne.s32.totalorder %s379, %s395
    %p397 = scmp.eq.s32.totalorder %s30, 0
    %p398 = por %p396, %p397
    %s399 = ssub.s32 %s24, %s31
    %p400 = scmp.eq.s32.totalorder %s399, 0
    %s402 = sadd.s32 %s401, 1
    %s403 = scalar_select %p400, %s401, %s402
    %p406 = pneg %p400
    %p407 = scmp.eq.s32.totalorder %s24, 1
    %p408 = por %p406, %p407
    %p409 = scmp.ne.s32.totalorder %s401, %s404
    %p410 = scmp.eq.s32.totalorder %s24, 0
    %p411 = por %p409, %p410
    %p412 = scmp.ne.s32.totalorder %s401, %s404
    %p413 = scmp.eq.s32.totalorder %s29, 1
    %p414 = por %p412, %p413
    %p415 = scmp.ne.s32.totalorder %s404, %s405
    %p416 = scmp.eq.s32.totalorder %s29, 0
    %p417 = por %p415, %p416
    %p418 = scmp.ne.s32.totalorder %s404, %s405
    %p419 = scmp.eq.s32.totalorder %s30, 1
    %p420 = por %p418, %p419
    %p422 = scmp.ne.s32.totalorder %s405, %s421
    %p423 = scmp.eq.s32.totalorder %s30, 0
    %p424 = por %p422, %p423
    %p425 = scmp.le.s32.totalorder 1, %s24
    %p426 = scmp.lt.s32.totalorder %s24, 3
    %p427 = pnand %p425, %p426
    %p428 = pneg %p427
    // Predicated region
    $region9: #{forward.6} parent=5 // pred_check
      _
    $region10: #{forward.6} parent=5 // pred_check_branch
      %430 = sbr.rel (%p427) target = $region12
    $region11: #{forward.6} parent=5 // pred_region
      %s431 = ssub.s32 %s24, 1
      // Predicated region
      $region13: #{forward.6} parent=11 // pred_check
        %p432 = pneg %p71
      $region14: #{forward.6} parent=11 // pred_check_branch
        %434 = sbr.rel (%p432) target = $region16
      $region15: #{forward.6} parent=11 // pred_region
        _
      $region16: #{forward.6} parent=11 // pred_fallthru
        _
      // Predicated region
      $region17: #{forward.6} parent=11 // pred_check
        %p435 = pneg %p92
      $region18: #{forward.6} parent=11 // pred_check_branch
        %437 = sbr.rel (%p435) target = $region20
      $region19: #{forward.6} parent=11 // pred_region
        _
      $region20: #{forward.6} parent=11 // pred_fallthru
        _
      // Predicated region
      $region21: #{forward.6} parent=11 // pred_check
        %p438 = pneg %p113
      $region22: #{forward.6} parent=11 // pred_check_branch
        %440 = sbr.rel (%p438) target = $region24
      $region23: #{forward.6} parent=11 // pred_region
        _
      $region24: #{forward.6} parent=11 // pred_fallthru
        _
      // Predicated region
      $region25: #{forward.6} parent=11 // pred_check
        %p441 = pneg %p134
      $region26: #{forward.6} parent=11 // pred_check_branch
        %443 = sbr.rel (%p441) target = $region28
      $region27: #{forward.6} parent=11 // pred_region
        _
      $region28: #{forward.6} parent=11 // pred_fallthru
        _
      // Predicated region
      $region29: #{forward.6} parent=11 // pred_check
        %p444 = pneg %p155
      $region30: #{forward.6} parent=11 // pred_check_branch
        %446 = sbr.rel (%p444) target = $region32
      $region31: #{forward.6} parent=11 // pred_region
        _
      $region32: #{forward.6} parent=11 // pred_fallthru
        _
      // Predicated region
      $region33: #{forward.6} parent=11 // pred_check
        %p447 = pneg %p176
      $region34: #{forward.6} parent=11 // pred_check_branch
        %449 = sbr.rel (%p447) target = $region36
      $region35: #{forward.6} parent=11 // pred_region
        _
      $region36: #{forward.6} parent=11 // pred_fallthru
        _
      // Predicated region
      $region37: #{forward.6} parent=11 // pred_check
        %p450 = pneg %p197
      $region38: #{forward.6} parent=11 // pred_check_branch
        %452 = sbr.rel (%p450) target = $region40
      $region39: #{forward.6} parent=11 // pred_region
        _
      $region40: #{forward.6} parent=11 // pred_fallthru
        _
      // Predicated region
      $region41: #{forward.6} parent=11 // pred_check
        %p453 = pneg %p218
      $region42: #{forward.6} parent=11 // pred_check_branch
        %455 = sbr.rel (%p453) target = $region44
      $region43: #{forward.6} parent=11 // pred_region
        _
      $region44: #{forward.6} parent=11 // pred_fallthru
        _
      // Predicated region
      $region45: #{forward.6} parent=11 // pred_check
        %p456 = pneg %p239
      $region46: #{forward.6} parent=11 // pred_check_branch
        %458 = sbr.rel (%p456) target = $region48
      $region47: #{forward.6} parent=11 // pred_region
        _
      $region48: #{forward.6} parent=11 // pred_fallthru
        _
      // Predicated region
      $region49: #{forward.6} parent=11 // pred_check
        %p459 = pneg %p260
      $region50: #{forward.6} parent=11 // pred_check_branch
        %461 = sbr.rel (%p459) target = $region52
      $region51: #{forward.6} parent=11 // pred_region
        _
      $region52: #{forward.6} parent=11 // pred_fallthru
        _
      // Predicated region
      $region53: #{forward.6} parent=11 // pred_check
        %p462 = pneg %p281
      $region54: #{forward.6} parent=11 // pred_check_branch
        %464 = sbr.rel (%p462) target = $region56
      $region55: #{forward.6} parent=11 // pred_region
        _
      $region56: #{forward.6} parent=11 // pred_fallthru
        _
      // Predicated region
      $region57: #{forward.6} parent=11 // pred_check
        %p465 = pneg %p302
      $region58: #{forward.6} parent=11 // pred_check_branch
        %467 = sbr.rel (%p465) target = $region60
      $region59: #{forward.6} parent=11 // pred_region
        _
      $region60: #{forward.6} parent=11 // pred_fallthru
        _
      // Predicated region
      $region61: #{forward.6} parent=11 // pred_check
        %p468 = pneg %p323
      $region62: #{forward.6} parent=11 // pred_check_branch
        %470 = sbr.rel (%p468) target = $region64
      $region63: #{forward.6} parent=11 // pred_region
        _
      $region64: #{forward.6} parent=11 // pred_fallthru
        _
      // Predicated region
      $region65: #{forward.6} parent=11 // pred_check
        %p471 = pneg %p344
      $region66: #{forward.6} parent=11 // pred_check_branch
        %473 = sbr.rel (%p471) target = $region68
      $region67: #{forward.6} parent=11 // pred_region
        _
      $region68: #{forward.6} parent=11 // pred_fallthru
        _
      // Predicated region
      $region69: #{forward.6} parent=11 // pred_check
        %p474 = pneg %p365
      $region70: #{forward.6} parent=11 // pred_check_branch
        %476 = sbr.rel (%p474) target = $region72
      $region71: #{forward.6} parent=11 // pred_region
        _
      $region72: #{forward.6} parent=11 // pred_fallthru
        _
    $region12: #{forward.6} parent=5 // pred_fallthru
      _
    %p477 = scmp.lt.s32.totalorder %s24, 2
    // Predicated region
    $region73: #{forward.6} parent=5 // pred_check
      %p478 = pneg %p477
    $region74: #{forward.6} parent=5 // pred_check_branch
      %480 = sbr.rel (%p478) target = $region76
    $region75: #{forward.6} parent=5 // pred_region
      // Predicated region
      $region77: #{forward.6} parent=75 // pred_check
        %p481 = pneg %p44
      $region78: #{forward.6} parent=75 // pred_check_branch
        %483 = sbr.rel (%p481) target = $region80
      $region79: #{forward.6} parent=75 // pred_region
        %p484 = scmp.lt.s32.totalorder %s24, 1
        %s485 = scalar_select %p484, %s24, 1
        %s486 = smul.addr %s485, 8
        %s487 = scalar_lea.vmem %s0, %s486
      $region80: #{forward.6} parent=75 // pred_fallthru
        _
    $region76: #{forward.6} parent=5 // pred_fallthru
      _
    %p488 = scmp.le.s32.totalorder 1, %s24
    %p489 = scmp.lt.s32.totalorder %s24, 3
    %p490 = pnand %p488, %p489
    %p491 = pneg %p490
    // Predicated region
    $region81: #{forward.6} parent=5 // pred_check
      _
    $region82: #{forward.6} parent=5 // pred_check_branch
      %493 = sbr.rel (%p490) target = $region84
    $region83: #{forward.6} parent=5 // pred_region
      %s494 = ssub.s32 %s24, 1
      %p495 = scmp.lt.s32.totalorder %s29, 1
      %s496 = scalar_select %p495, %s29, 1
      %s497 = smul.addr %s496, 8
      %s498 = scalar_lea.vmem %s0, %s497
      %p499 = pneg %p50
      %p500 = pneg %p47
      %p501 = pneg %p71
      %p502 = pneg %p68
      %p503 = pneg %p92
      %p504 = pneg %p89
      %p505 = pneg %p113
      %p506 = pneg %p110
      %p507 = pneg %p134
      %p508 = pneg %p131
      %p509 = pneg %p155
      %p510 = pneg %p152
      %p511 = pneg %p176
      %p512 = pneg %p173
      %p513 = pneg %p197
      %p514 = pneg %p194
      %p515 = pneg %p218
      %p516 = pneg %p215
      %p517 = pneg %p239
      %p518 = pneg %p236
      %p519 = pneg %p260
      %p520 = pneg %p257
      %p521 = pneg %p281
      %p522 = pneg %p278
      %p523 = pneg %p302
      %p524 = pneg %p299
      %p525 = pneg %p323
      %p526 = pneg %p320
      %p527 = pneg %p344
      %p528 = pneg %p341
      %p529 = pneg %p365
      %p530 = pneg %p362
      %p531 = pneg %p391
      %p532 = pneg %p388
      %p533 = scmp.lt.s32.totalorder %s29, 1
      %s534 = scalar_select %p533, %s29, 1
      %s535 = smul.addr %s534, 8
      %s536 = scalar_lea.vmem %s16, %s535
      %p537 = pneg %p417
      %p538 = pneg %p414
      %p539 = scmp.lt.s32.totalorder %s29, 1
      %s540 = scalar_select %p539, %s29, 1
      %s541 = scalar_lea.vmem %s17, %s540
      %p542 = scmp.lt.s32.totalorder %s29, 1
      %s543 = scalar_select %p542, %s29, 1
      %s544 = smul.addr %s543, 8
      %s545 = scalar_lea.vmem %s0, %s544
      %p546 = scmp.lt.s32.totalorder %s29, 1
      %s547 = scalar_select %p546, %s29, 1
      %s548 = smul.addr %s547, 8
      %s549 = scalar_lea.vmem %s16, %s548
      %p550 = scmp.lt.s32.totalorder %s29, 1
      %s551 = scalar_select %p550, %s29, 1
      %s552 = scalar_lea.vmem %s17, %s551
      %v554 = vld [vmem:[%s545] sm:$0xff]
      %v555 = vld [vmem:[%s1] sm:$0x1]
      %v556 = vld [vmem:[%s2] sm:$0x1]
      %v557 = vld [vmem:[%s3] sm:$0xf]
      %v558 = vpack.c.bf16 %v554, %v554
      %v559 = vld [vmem:[%s4] sm:$0xff]
      %561 = vset.pattern.permute.xlu0 0
      %562 = vperm.xlu0 %561, %v559
      %v563 = vpop.permute.xlu0 %562
      %vm565 = vcmask 64512
      %v567 = vsel %vm565, %v557, 0
      %vm569 = vcmask 1043456
      %v571 = vsel %vm569, %v558, 0
      %573 = vmatprep.subr.bf16.mxu0 0
      %574 = vmatpush1.bf16.msra.mxu0 %v571
      %575 = vmatprep.subr.bf16.mxu0 0
      %576 = vmatpush1.bf16.msra.mxu0 0
      %577 = vmatprep.subr.bf16.mxu0 0
      %578 = vmatpush1.bf16.msra.mxu0 0
      %579 = vmatprep.subr.bf16.mxu0 0
      %580 = vmatpush1.bf16.msra.mxu0 0
      %581 = vmatprep.subr.bf16.mxu0 0
      %582 = vmatpush1.bf16.msra.mxu0 0
      %583 = vmatprep.subr.bf16.mxu0 0
      %584 = vmatpush1.bf16.msra.mxu0 0
      %585 = vmatprep.subr.bf16.mxu0 0
      %586 = vmatpush1.bf16.msra.mxu0 0
      %587 = vmatprep.subr.bf16.mxu0 0
      %588 = vmatpush1.bf16.msra.mxu0 0
      %589 = vmatprep.subr.bf16.mxu0 0
      %590 = vmatpush1.bf16.msra.mxu0 0
      %591 = vmatprep.subr.bf16.mxu0 0
      %592 = vmatpush1.bf16.msra.mxu0 0
      %593 = vmatprep.subr.bf16.mxu0 0
      %594 = vmatpush1.bf16.msra.mxu0 0
      %595 = vmatprep.subr.bf16.mxu0 0
      %596 = vmatpush1.bf16.msra.mxu0 0
      %597 = vmatprep.subr.bf16.mxu0 0
      %598 = vmatpush1.bf16.msra.mxu0 0
      %599 = vmatprep.subr.bf16.mxu0 0
      %600 = vmatpush1.bf16.msra.mxu0 0
      %601 = vmatprep.subr.bf16.mxu0 0
      %602 = vmatpush1.bf16.msra.mxu0 0
      %603 = vmatprep.subr.bf16.mxu0 0
      %604 = vmatpush1.bf16.msra.mxu0 0
      %605 = vmatprep.mubr.bf16.mxu0 0
      %606 = vmatmul.mubr.bf16.gmra.mrb[0].mxu0 %v567
      %v607 = vpop.f32.mrb[0].mxu0
      %v608 = vadd.f32 %v563, %v607
      %v609 = vpop.f32.mrb[0].mxu0
      %v610 = vpop.f32.mrb[0].mxu0
      %v611 = vpop.f32.mrb[0].mxu0
      %612 = vdwg.mxu0
      %v613 = vld [vmem:[%s5] sm:$0xf]
      %615 = vset.pattern.permute.xlu0 0
      %616 = vperm.xlu0 %615, %v613
      %v617 = vpop.permute.xlu0 %616
      %v618 = vrot.slane %v617, 4
      %v620 = vmul.f32 %v608, %v618
      %v621 = vld [vmem:[%s6] sm:$0xf]
      %623 = vset.pattern.permute.xlu0 0
      %624 = vperm.xlu0 %623, %v621
      %v625 = vpop.permute.xlu0 %624
      %v626 = vrot.slane %v625, 4
      %v628 = vadd.f32 %v620, %v626
      %v629 = vmax.f32 %v628, 0.0
      %v630 = vld [vmem:[%s7] sm:$0xf]
      %v631 = vld [vmem:[%s7 + $0x4] sm:$0xf]
      %v632 = vld [vmem:[%s7 + $0x8] sm:$0xf]
      %v633 = vld [vmem:[%s7 + $0xc] sm:$0xf]
      %v635 = vrot.slane %v629, 4
      %636 = vrot.lane.b32.xlu0 %v635, 9
      %v637 = vpop.permute.xlu0 %636
      %vm639 = vcmask 72704
      %v640 = vsel %vm639, 0.0, %v637
      %vm641 = vcmask 596992
      %v642 = vsel %vm641, %v640, 0.0
      %v644 = vlaneseq
      %v645 = vshrl.u32 %v644, 7
      %v646 = vsub.s32 0, %v645
      %v647 = vrot.slane %v555, %v646
      %v649 = vmul.f32 %v642, %v647
      %v651 = vlaneseq
      %v652 = vshrl.u32 %v651, 7
      %v653 = vsub.s32 0, %v652
      %v654 = vrot.slane %v556, %v653
      %655 = vrot.lane.b32.xlu0 %v654, 2
      %v656 = vpop.permute.xlu0 %655
      %v658 = vmul.f32 %v642, %v656
      %659 = vrot.lane.b32.xlu0 %v647, 8
      %v660 = vpop.permute.xlu0 %659
      %v662 = vmul.f32 %v642, %v660
      %663 = vrot.lane.b32.xlu0 %v654, 10
      %v664 = vpop.permute.xlu0 %663
      %v666 = vmul.f32 %v642, %v664
      %667 = vrot.lane.b32.xlu0 %v647, 16
      %v668 = vpop.permute.xlu0 %667
      %v670 = vmul.f32 %v642, %v668
      %671 = vrot.lane.b32.xlu0 %v654, 18
      %v672 = vpop.permute.xlu0 %671
      %v674 = vmul.f32 %v642, %v672
      %v676 = vrot.slane %v642, 4
      %677 = vrot.lane.b32.xlu0 %v676, 127
      %v678 = vpop.permute.xlu0 %677
      %681 = vrot.lane.b32.xlu0 %v658, 126
      %v682 = vpop.permute.xlu0 %681
      %v685 = vrot.slane %v662, 4
      %686 = vrot.lane.b32.xlu0 %v685, 120
      %v687 = vpop.permute.xlu0 %686
      %689 = vrot.lane.b32.xlu0 %v642, 119
      %v690 = vpop.permute.xlu0 %689
      %v693 = vrot.slane %v666, 4
      %694 = vrot.lane.b32.xlu0 %v693, 118
      %v695 = vpop.permute.xlu0 %694
      %698 = vrot.lane.b32.xlu0 %v670, 112
      %v699 = vpop.permute.xlu0 %698
      %701 = vrot.lane.b32.xlu0 %v676, 111
      %v702 = vpop.permute.xlu0 %701
      %705 = vrot.lane.b32.xlu0 %v674, 110
      %v706 = vpop.permute.xlu0 %705
      %v708 = vsel %vm569, %v649, %v678
      %v709 = vsel %vm569, %v682, %v687
      %v710 = vsel %vm569, %v690, %v695
      %v711 = vsel %vm569, %v699, %v702
      %v712 = vpack.c.bf16 %v709, %v708
      %v713 = vpack.c.bf16 %v711, %v710
      %v714 = vpack.c.bf16 %v706, %v706
      %v719 = vunpack.c.l.b16 %v630
      %v720 = vunpack.c.l.b16 %v631
      %v721 = vunpack.c.l.b16 %v632
      %v722 = vunpack.c.l.b16 %v633
      %v723 = vpack.c.b16 %v720, %v719
      %v724 = vpack.c.b16 %v722, %v721
      %vm725 = vcmask 293888
      %v727 = vsel %vm725, %v723, 0
      %v730 = vsel %vm725, %v724, 0
      %vm732 = vcmask 1041408
      %v734 = vsel %vm732, %v714, 0
      %736 = vmatprep.subr.bf16.mxu0 0
      %737 = vmatpush1.bf16.msra.mxu0 %v712
      %738 = vmatprep.subr.bf16.mxu0 0
      %739 = vmatpush1.bf16.msra.mxu0 %v713
      %740 = vmatprep.subr.bf16.mxu0 0
      %741 = vmatpush1.bf16.msra.mxu0 %v734
      %742 = vmatprep.subr.bf16.mxu0 0
      %743 = vmatpush1.bf16.msra.mxu0 0
      %744 = vmatprep.subr.bf16.mxu0 0
      %745 = vmatpush1.bf16.msra.mxu0 0
      %746 = vmatprep.subr.bf16.mxu0 0
      %747 = vmatpush1.bf16.msra.mxu0 0
      %748 = vmatprep.subr.bf16.mxu0 0
      %749 = vmatpush1.bf16.msra.mxu0 0
      %750 = vmatprep.subr.bf16.mxu0 0
      %751 = vmatpush1.bf16.msra.mxu0 0
      %752 = vmatprep.subr.bf16.mxu0 0
      %753 = vmatpush1.bf16.msra.mxu0 0
      %754 = vmatprep.subr.bf16.mxu0 0
      %755 = vmatpush1.bf16.msra.mxu0 0
      %756 = vmatprep.subr.bf16.mxu0 0
      %757 = vmatpush1.bf16.msra.mxu0 0
      %758 = vmatprep.subr.bf16.mxu0 0
      %759 = vmatpush1.bf16.msra.mxu0 0
      %760 = vmatprep.subr.bf16.mxu0 0
      %761 = vmatpush1.bf16.msra.mxu0 0
      %762 = vmatprep.subr.bf16.mxu0 0
      %763 = vmatpush1.bf16.msra.mxu0 0
      %764 = vmatprep.subr.bf16.mxu0 0
      %765 = vmatpush1.bf16.msra.mxu0 0
      %766 = vmatprep.subr.bf16.mxu0 0
      %767 = vmatpush1.bf16.msra.mxu0 0
      %768 = vmatprep.mubr.bf16.mxu0 0
      %769 = vmatmul.mubr.bf16.gmra.mrb[0].mxu0 %v727
      %v770 = vpop.f32.mrb[0].mxu0
      %v771 = vadd.f32 0.0, %v770
      %v772 = vpop.f32.mrb[0].mxu0
      %v773 = vpop.f32.mrb[0].mxu0
      %v774 = vadd.f32 0.0, %v773
      %v775 = vpop.f32.mrb[0].mxu0
      %776 = vmatprep.mubr.bf16.mxu0 0
      %777 = vmatmul.mubr.bf16.gmra.mrb[0].mxu0 %v730
      %v778 = vpop.f32.mrb[0].mxu0
      %v779 = vadd.f32 0.0, %v778
      %v780 = vpop.f32.mrb[0].mxu0
      %v781 = vpop.f32.mrb[0].mxu0
      %v782 = vadd.f32 0.0, %v781
      %v783 = vpop.f32.mrb[0].mxu0
      %784 = vdwg.mxu0
      %v785 = vld [vmem:[%s8] sm:$0xff]
      %v786 = vld [vmem:[%s8 + $0x8] sm:$0xff]
      %v787 = vld [vmem:[%s8 + $0x10] sm:$0xff]
      %v788 = vld [vmem:[%s8 + $0x18] sm:$0xff]
      %790 = vset.pattern.permute.xlu0 0
      %791 = vperm.xlu0 %790, %v785
      %v792 = vpop.permute.xlu0 %791
      %795 = vset.pattern.permute.xlu0 0
      %796 = vperm.xlu0 %795, %v786
      %v797 = vpop.permute.xlu0 %796
      %800 = vset.pattern.permute.xlu0 0
      %801 = vperm.xlu0 %800, %v787
      %v802 = vpop.permute.xlu0 %801
      %805 = vset.pattern.permute.xlu0 0
      %806 = vperm.xlu0 %805, %v788
      %v807 = vpop.permute.xlu0 %806
      %v809 = vmul.f32 %v771, %v792
      %v810 = vmul.f32 %v774, %v797
      %v811 = vmul.f32 %v779, %v802
      %v812 = vmul.f32 %v782, %v807
      %v813 = vld [vmem:[%s9] sm:$0xff]
      %v814 = vld [vmem:[%s9 + $0x8] sm:$0xff]
      %v815 = vld [vmem:[%s9 + $0x10] sm:$0xff]
      %v816 = vld [vmem:[%s9 + $0x18] sm:$0xff]
      %818 = vset.pattern.permute.xlu0 0
      %819 = vperm.xlu0 %818, %v813
      %v820 = vpop.permute.xlu0 %819
      %823 = vset.pattern.permute.xlu0 0
      %824 = vperm.xlu0 %823, %v814
      %v825 = vpop.permute.xlu0 %824
      %828 = vset.pattern.permute.xlu0 0
      %829 = vperm.xlu0 %828, %v815
      %v830 = vpop.permute.xlu0 %829
      %833 = vset.pattern.permute.xlu0 0
      %834 = vperm.xlu0 %833, %v816
      %v835 = vpop.permute.xlu0 %834
      %v837 = vadd.f32 %v809, %v820
      %v838 = vadd.f32 %v810, %v825
      %v839 = vadd.f32 %v811, %v830
      %v840 = vadd.f32 %v812, %v835
      %v841 = vmax.f32 %v837, 0.0
      %v842 = vmax.f32 %v838, 0.0
      %v843 = vmax.f32 %v839, 0.0
      %v844 = vmax.f32 %v840, 0.0
      %v845 = vld [vmem:[%s10] sm:$0xf]
      %v846 = vld [vmem:[%s10 + $0x4] sm:$0xf]
      %v847 = vld [vmem:[%s10 + $0x8] sm:$0xf]
      %v848 = vld [vmem:[%s10 + $0xc] sm:$0xf]
      %v849 = vpack.c.bf16 %v842, %v841
      %v850 = vpack.c.bf16 %v844, %v843
      %v855 = vunpack.c.l.b16 %v845
      %v856 = vunpack.c.l.b16 %v846
      %v857 = vunpack.c.l.b16 %v847
      %v858 = vunpack.c.l.b16 %v848
      %v859 = vpack.c.b16 %v856, %v855
      %v860 = vpack.c.b16 %v858, %v857
      %vm861 = vcmask 261120
      %v863 = vsel %vm861, %v859, 0
      %v866 = vsel %vm861, %v860, 0
      %868 = vmatprep.subr.bf16.mxu0 0
      %869 = vmatpush1.bf16.msra.mxu0 %v849
      %870 = vmatprep.subr.bf16.mxu0 0
      %871 = vmatpush1.bf16.msra.mxu0 %v850
      %872 = vmatprep.subr.bf16.mxu0 0
      %873 = vmatpush1.bf16.msra.mxu0 0
      %874 = vmatprep.subr.bf16.mxu0 0
      %875 = vmatpush1.bf16.msra.mxu0 0
      %876 = vmatprep.subr.bf16.mxu0 0
      %877 = vmatpush1.bf16.msra.mxu0 0
      %878 = vmatprep.subr.bf16.mxu0 0
      %879 = vmatpush1.bf16.msra.mxu0 0
      %880 = vmatprep.subr.bf16.mxu0 0
      %881 = vmatpush1.bf16.msra.mxu0 0
      %882 = vmatprep.subr.bf16.mxu0 0
      %883 = vmatpush1.bf16.msra.mxu0 0
      %884 = vmatprep.subr.bf16.mxu0 0
      %885 = vmatpush1.bf16.msra.mxu0 0
      %886 = vmatprep.subr.bf16.mxu0 0
      %887 = vmatpush1.bf16.msra.mxu0 0
      %888 = vmatprep.subr.bf16.mxu0 0
      %889 = vmatpush1.bf16.msra.mxu0 0
      %890 = vmatprep.subr.bf16.mxu0 0
      %891 = vmatpush1.bf16.msra.mxu0 0
      %892 = vmatprep.subr.bf16.mxu0 0
      %893 = vmatpush1.bf16.msra.mxu0 0
      %894 = vmatprep.subr.bf16.mxu0 0
      %895 = vmatpush1.bf16.msra.mxu0 0
      %896 = vmatprep.subr.bf16.mxu0 0
      %897 = vmatpush1.bf16.msra.mxu0 0
      %898 = vmatprep.subr.bf16.mxu0 0
      %899 = vmatpush1.bf16.msra.mxu0 0
      %900 = vmatprep.mubr.bf16.mxu0 0
      %901 = vmatmul.mubr.bf16.gmra.mrb[0].mxu0 %v863
      %v902 = vpop.f32.mrb[0].mxu0
      %v903 = vadd.f32 0.0, %v902
      %v904 = vpop.f32.mrb[0].mxu0
      %v905 = vpop.f32.mrb[0].mxu0
      %v906 = vadd.f32 0.0, %v905
      %v907 = vpop.f32.mrb[0].mxu0
      %908 = vmatprep.mubr.bf16.mxu0 0
      %909 = vmatmul.mubr.bf16.gmra.mrb[0].mxu0 %v866
      %v910 = vpop.f32.mrb[0].mxu0
      %v911 = vadd.f32 0.0, %v910
      %v912 = vpop.f32.mrb[0].mxu0
      %v913 = vpop.f32.mrb[0].mxu0
      %v914 = vadd.f32 0.0, %v913
      %v915 = vpop.f32.mrb[0].mxu0
      %916 = vdwg.mxu0
      %v917 = vld [vmem:[%s11] sm:$0xff]
      %v918 = vld [vmem:[%s11 + $0x8] sm:$0xff]
      %v919 = vld [vmem:[%s11 + $0x10] sm:$0xff]
      %v920 = vld [vmem:[%s11 + $0x18] sm:$0xff]
      %922 = vset.pattern.permute.xlu0 0
      %923 = vperm.xlu0 %922, %v917
      %v924 = vpop.permute.xlu0 %923
      %927 = vset.pattern.permute.xlu0 0
      %928 = vperm.xlu0 %927, %v918
      %v929 = vpop.permute.xlu0 %928
      %932 = vset.pattern.permute.xlu0 0
      %933 = vperm.xlu0 %932, %v919
      %v934 = vpop.permute.xlu0 %933
      %937 = vset.pattern.permute.xlu0 0
      %938 = vperm.xlu0 %937, %v920
      %v939 = vpop.permute.xlu0 %938
      %v941 = vmul.f32 %v903, %v924
      %v942 = vmul.f32 %v906, %v929
      %v943 = vmul.f32 %v911, %v934
      %v944 = vmul.f32 %v914, %v939
      %v945 = vld [vmem:[%s12] sm:$0xff]
      %v946 = vld [vmem:[%s12 + $0x8] sm:$0xff]
      %v947 = vld [vmem:[%s12 + $0x10] sm:$0xff]
      %v948 = vld [vmem:[%s12 + $0x18] sm:$0xff]
      %950 = vset.pattern.permute.xlu0 0
      %951 = vperm.xlu0 %950, %v945
      %v952 = vpop.permute.xlu0 %951
      %955 = vset.pattern.permute.xlu0 0
      %956 = vperm.xlu0 %955, %v946
      %v957 = vpop.permute.xlu0 %956
      %960 = vset.pattern.permute.xlu0 0
      %961 = vperm.xlu0 %960, %v947
      %v962 = vpop.permute.xlu0 %961
      %965 = vset.pattern.permute.xlu0 0
      %966 = vperm.xlu0 %965, %v948
      %v967 = vpop.permute.xlu0 %966
      %v969 = vadd.f32 %v941, %v952
      %v970 = vadd.f32 %v942, %v957
      %v971 = vadd.f32 %v943, %v962
      %v972 = vadd.f32 %v944, %v967
      %v973 = vmax.f32 %v969, 0.0
      %v974 = vmax.f32 %v970, 0.0
      %v975 = vmax.f32 %v971, 0.0
      %v976 = vmax.f32 %v972, 0.0
      %v977 = vld [vmem:[%s13] sm:$0xff]
      %v978 = vld [vmem:[%s13 + $0x8] sm:$0xf]
      %983 = vrot.lane.b32.xlu0 %v973, 9
      %v984 = vpop.permute.xlu0 %983
      %985 = vrot.lane.b32.xlu0 %v974, 9
      %v986 = vpop.permute.xlu0 %985
      %987 = vrot.lane.b32.xlu0 %v975, 9
      %v988 = vpop.permute.xlu0 %987
      %989 = vrot.lane.b32.xlu0 %v976, 9
      %v990 = vpop.permute.xlu0 %989
      %v995 = vsel %vm639, 0.0, %v984
      %v996 = vsel %vm639, 0.0, %v986
      %v997 = vsel %vm639, 0.0, %v988
      %v998 = vsel %vm639, 0.0, %v990
      %v999 = vsel %vm641, %v995, 0.0
      %v1000 = vsel %vm641, %v996, 0.0
      %v1001 = vsel %vm641, %v997, 0.0
      %v1002 = vsel %vm641, %v998, 0.0
      %v1003 = vmul.f32 %v999, %v647
      %v1004 = vmul.f32 %v1000, %v647
      %v1005 = vmul.f32 %v1001, %v647
      %v1006 = vmul.f32 %v1002, %v647
      %v1007 = vmul.f32 %v999, %v656
      %v1008 = vmul.f32 %v1000, %v656
      %v1009 = vmul.f32 %v1001, %v656
      %v1010 = vmul.f32 %v1002, %v656
      %v1011 = vmul.f32 %v999, %v660
      %v1012 = vmul.f32 %v1000, %v660
      %v1013 = vmul.f32 %v1001, %v660
      %v1014 = vmul.f32 %v1002, %v660
      %v1015 = vmul.f32 %v999, %v664
      %v1016 = vmul.f32 %v1000, %v664
      %v1017 = vmul.f32 %v1001, %v664
      %v1018 = vmul.f32 %v1002, %v664
      %v1019 = vmul.f32 %v999, %v668
      %v1020 = vmul.f32 %v1000, %v668
      %v1021 = vmul.f32 %v1001, %v668
      %v1022 = vmul.f32 %v1002, %v668
      %v1023 = vmul.f32 %v999, %v672
      %v1024 = vmul.f32 %v1000, %v672
      %v1025 = vmul.f32 %v1001, %v672
      %v1026 = vmul.f32 %v1002, %v672
      %1031 = vrot.lane.b32.xlu0 %v999, 127
      %v1032 = vpop.permute.xlu0 %1031
      %1033 = vrot.lane.b32.xlu0 %v1000, 127
      %v1034 = vpop.permute.xlu0 %1033
      %1035 = vrot.lane.b32.xlu0 %v1001, 127
      %v1036 = vpop.permute.xlu0 %1035
      %1037 = vrot.lane.b32.xlu0 %v1002, 127
      %v1038 = vpop.permute.xlu0 %1037
      %1047 = vrot.lane.b32.xlu0 %v1007, 126
      %v1048 = vpop.permute.xlu0 %1047
      %1049 = vrot.lane.b32.xlu0 %v1008, 126
      %v1050 = vpop.permute.xlu0 %1049
      %1051 = vrot.lane.b32.xlu0 %v1009, 126
      %v1052 = vpop.permute.xlu0 %1051
      %1053 = vrot.lane.b32.xlu0 %v1010, 126
      %v1054 = vpop.permute.xlu0 %1053
      %1063 = vrot.lane.b32.xlu0 %v1011, 120
      %v1064 = vpop.permute.xlu0 %1063
      %1065 = vrot.lane.b32.xlu0 %v1012, 120
      %v1066 = vpop.permute.xlu0 %1065
      %1067 = vrot.lane.b32.xlu0 %v1013, 120
      %v1068 = vpop.permute.xlu0 %1067
      %1069 = vrot.lane.b32.xlu0 %v1014, 120
      %v1070 = vpop.permute.xlu0 %1069
      %1075 = vrot.lane.b32.xlu0 %v999, 119
      %v1076 = vpop.permute.xlu0 %1075
      %1077 = vrot.lane.b32.xlu0 %v1000, 119
      %v1078 = vpop.permute.xlu0 %1077
      %1079 = vrot.lane.b32.xlu0 %v1001, 119
      %v1080 = vpop.permute.xlu0 %1079
      %1081 = vrot.lane.b32.xlu0 %v1002, 119
      %v1082 = vpop.permute.xlu0 %1081
      %1091 = vrot.lane.b32.xlu0 %v1015, 118
      %v1092 = vpop.permute.xlu0 %1091
      %1093 = vrot.lane.b32.xlu0 %v1016, 118
      %v1094 = vpop.permute.xlu0 %1093
      %1095 = vrot.lane.b32.xlu0 %v1017, 118
      %v1096 = vpop.permute.xlu0 %1095
      %1097 = vrot.lane.b32.xlu0 %v1018, 118
      %v1098 = vpop.permute.xlu0 %1097
      %1107 = vrot.lane.b32.xlu0 %v1019, 112
      %v1108 = vpop.permute.xlu0 %1107
      %1109 = vrot.lane.b32.xlu0 %v1020, 112
      %v1110 = vpop.permute.xlu0 %1109
      %1111 = vrot.lane.b32.xlu0 %v1021, 112
      %v1112 = vpop.permute.xlu0 %1111
      %1113 = vrot.lane.b32.xlu0 %v1022, 112
      %v1114 = vpop.permute.xlu0 %1113
      %1119 = vrot.lane.b32.xlu0 %v999, 111
      %v1120 = vpop.permute.xlu0 %1119
      %1121 = vrot.lane.b32.xlu0 %v1000, 111
      %v1122 = vpop.permute.xlu0 %1121
      %1123 = vrot.lane.b32.xlu0 %v1001, 111
      %v1124 = vpop.permute.xlu0 %1123
      %1125 = vrot.lane.b32.xlu0 %v1002, 111
      %v1126 = vpop.permute.xlu0 %1125
      %1135 = vrot.lane.b32.xlu0 %v1023, 110
      %v1136 = vpop.permute.xlu0 %1135
      %1137 = vrot.lane.b32.xlu0 %v1024, 110
      %v1138 = vpop.permute.xlu0 %1137
      %1139 = vrot.lane.b32.xlu0 %v1025, 110
      %v1140 = vpop.permute.xlu0 %1139
      %1141 = vrot.lane.b32.xlu0 %v1026, 110
      %v1142 = vpop.permute.xlu0 %1141
      %v1147 = vpack.c.bf16 %v1004, %v1003
      %v1148 = vpack.c.bf16 %v1006, %v1005
      %v1149 = vpack.c.bf16 %v1034, %v1032
      %v1150 = vpack.c.bf16 %v1038, %v1036
      %v1151 = vpack.c.bf16 %v1050, %v1048
      %v1152 = vpack.c.bf16 %v1054, %v1052
      %v1153 = vpack.c.bf16 %v1066, %v1064
      %v1154 = vpack.c.bf16 %v1070, %v1068
      %v1155 = vpack.c.bf16 %v1078, %v1076
      %v1156 = vpack.c.bf16 %v1082, %v1080
      %v1157 = vpack.c.bf16 %v1094, %v1092
      %v1158 = vpack.c.bf16 %v1098, %v1096
      %v1159 = vpack.c.bf16 %v1110, %v1108
      %v1160 = vpack.c.bf16 %v1114, %v1112
      %v1161 = vpack.c.bf16 %v1122, %v1120
      %v1162 = vpack.c.bf16 %v1126, %v1124
      %v1163 = vpack.c.bf16 %v1138, %v1136
      %v1164 = vpack.c.bf16 %v1142, %v1140
      %v1165 = vld [vmem:[%s14] sm:$0xff]
      %1167 = vset.pattern.permute.xlu0 0
      %1168 = vperm.xlu0 %1167, %v1165
      %v1169 = vpop.permute.xlu0 %1168
      %v1173 = vunpack.c.l.b16 %v977
      %v1174 = vunpack.c.h.b16 %v977
      %v1175 = vunpack.c.l.b16 %v978
      %v1176 = vpack.c.b16 %v1173, %v1173
      %v1177 = vpack.c.b16 %v1174, %v1174
      %v1178 = vpack.c.b16 %v1175, %v1175
      %v1182 = vsel %vm861, %v1178, 0
      %1184 = vmatprep.subr.bf16.mxu0 0
      %1185 = vmatpush1.bf16.msra.mxu0 %v1147
      %1186 = vmatprep.subr.bf16.mxu0 0
      %1187 = vmatpush1.bf16.msra.mxu0 %v1148
      %1188 = vmatprep.subr.bf16.mxu0 0
      %1189 = vmatpush1.bf16.msra.mxu0 %v1149
      %1190 = vmatprep.subr.bf16.mxu0 0
      %1191 = vmatpush1.bf16.msra.mxu0 %v1150
      %1192 = vmatprep.subr.bf16.mxu0 0
      %1193 = vmatpush1.bf16.msra.mxu0 %v1151
      %1194 = vmatprep.subr.bf16.mxu0 0
      %1195 = vmatpush1.bf16.msra.mxu0 %v1152
      %1196 = vmatprep.subr.bf16.mxu0 0
      %1197 = vmatpush1.bf16.msra.mxu0 %v1153
      %1198 = vmatprep.subr.bf16.mxu0 0
      %1199 = vmatpush1.bf16.msra.mxu0 %v1154
      %1200 = vmatprep.subr.bf16.mxu0 0
      %1201 = vmatpush1.bf16.msra.mxu0 %v1155
      %1202 = vmatprep.subr.bf16.mxu0 0
      %1203 = vmatpush1.bf16.msra.mxu0 %v1156
      %1204 = vmatprep.subr.bf16.mxu0 0
      %1205 = vmatpush1.bf16.msra.mxu0 %v1157
      %1206 = vmatprep.subr.bf16.mxu0 0
      %1207 = vmatpush1.bf16.msra.mxu0 %v1158
      %1208 = vmatprep.subr.bf16.mxu0 0
      %1209 = vmatpush1.bf16.msra.mxu0 %v1159
      %1210 = vmatprep.subr.bf16.mxu0 0
      %1211 = vmatpush1.bf16.msra.mxu0 %v1160
      %1212 = vmatprep.subr.bf16.mxu0 0
      %1213 = vmatpush1.bf16.msra.mxu0 %v1161
      %1214 = vmatprep.subr.bf16.mxu0 0
      %1215 = vmatpush1.bf16.msra.mxu0 %v1162
      %1216 = vmatprep.mubr.bf16.mxu0 %v1177
      %1217 = vmatmul.mubr.bf16.gmra.mrb[0].mxu0 %v1176
      %v1218 = vpop.f32.mrb[0].mxu0
      %v1219 = vadd.f32 %v1169, %v1218
      %v1220 = vpop.f32.mrb[0].mxu0
      %v1221 = vpop.f32.mrb[0].mxu0
      %v1222 = vpop.f32.mrb[0].mxu0
      %1223 = vdwg.mxu0
      %1224 = vmatprep.subr.bf16.mxu0 0
      %1225 = vmatpush1.bf16.msra.mxu0 %v1163
      %1226 = vmatprep.subr.bf16.mxu0 0
      %1227 = vmatpush1.bf16.msra.mxu0 %v1164
      %1228 = vmatprep.subr.bf16.mxu0 0
      %1229 = vmatpush1.bf16.msra.mxu0 0
      %1230 = vmatprep.subr.bf16.mxu0 0
      %1231 = vmatpush1.bf16.msra.mxu0 0
      %1232 = vmatprep.subr.bf16.mxu0 0
      %1233 = vmatpush1.bf16.msra.mxu0 0
      %1234 = vmatprep.subr.bf16.mxu0 0
      %1235 = vmatpush1.bf16.msra.mxu0 0
      %1236 = vmatprep.subr.bf16.mxu0 0
      %1237 = vmatpush1.bf16.msra.mxu0 0
      %1238 = vmatprep.subr.bf16.mxu0 0
      %1239 = vmatpush1.bf16.msra.mxu0 0
      %1240 = vmatprep.subr.bf16.mxu0 0
      %1241 = vmatpush1.bf16.msra.mxu0 0
      %1242 = vmatprep.subr.bf16.mxu0 0
      %1243 = vmatpush1.bf16.msra.mxu0 0
      %1244 = vmatprep.subr.bf16.mxu0 0
      %1245 = vmatpush1.bf16.msra.mxu0 0
      %1246 = vmatprep.subr.bf16.mxu0 0
      %1247 = vmatpush1.bf16.msra.mxu0 0
      %1248 = vmatprep.subr.bf16.mxu0 0
      %1249 = vmatpush1.bf16.msra.mxu0 0
      %1250 = vmatprep.subr.bf16.mxu0 0
      %1251 = vmatpush1.bf16.msra.mxu0 0
      %1252 = vmatprep.subr.bf16.mxu0 0
      %1253 = vmatpush1.bf16.msra.mxu0 0
      %1254 = vmatprep.subr.bf16.mxu0 0
      %1255 = vmatpush1.bf16.msra.mxu0 0
      %1256 = vmatprep.mubr.bf16.mxu0 0
      %1257 = vmatmul.mubr.bf16.gmra.mrb[0].mxu0 %v1182
      %v1258 = vpop.f32.mrb[0].mxu0
      %v1259 = vadd.f32 %v1219, %v1258
      %v1260 = vpop.f32.mrb[0].mxu0
      %v1261 = vpop.f32.mrb[0].mxu0
      %v1262 = vpop.f32.mrb[0].mxu0
      %1263 = vdwg.mxu0
      %v1264 = vld [vmem:[%s15] sm:$0xf]
      %v1265 = vtanh.pop %v1259
      %1267 = vset.pattern.permute.xlu0 0
      %1268 = vperm.xlu0 %1267, %v1264
      %v1269 = vpop.permute.xlu0 %1268
      %v1271 = vmul.f32 %v1269, %v1265
      %v1273 = vrot.slane %v1259, 4
      %v1275 = vadd.f32 %v608, %v1273
      %v1276 = vmul.f32 %v1271, 1.442695
      %v1277 = vpow.pop %v1276
      %v1278 = vmul.f32 %v1275, %v1277
      %v1279 = vsel %vm569, %v1278, %v608
      %vm1280 = vcmask 523264
      %1281 = vst.msk [vmem:[%s549] sm:$0xff] %vm1280, %v1279
      %vm1282 = vcmask 519168
      %v1283 = vsel %vm1282, %v1271, 0.0
      %1284 = vadd.xlane.f32.xlu0 %v1283
      %v1285 = vpop.xlane.xlu0 %1284
      %v1286 = vsel %vm569, %v1285, 0.0
      %v1287 = vrot.slane %v1286, 4
      %v1288 = vadd.f32 %v1286, %v1287
      %v1289 = vrot.slane %v1288, 2
      %v1290 = vadd.f32 %v1288, %v1289
      %v1291 = vrot.slane %v1290, 1
      %v1292 = vadd.f32 %v1290, %v1291
      %1293 = vst [vmem:[%s552] sm:$0x1] %v1292
      %p1294 = scmp.lt.s32.totalorder %s29, 1
      %s1295 = scalar_select %p1294, %s29, 1
      %s1296 = smul.addr %s1295, 8
      %s1297 = scalar_lea.vmem %s16, %s1296
      %p1298 = scmp.lt.s32.totalorder %s29, 1
      %s1299 = scalar_select %p1298, %s29, 1
      %s1300 = scalar_lea.vmem %s17, %s1299
      // Predicated region
      $region85: #{forward.6} parent=83 // pred_check
        %p1301 = pneg %p388
      $region86: #{forward.6} parent=83 // pred_check_branch
        %1303 = sbr.rel (%p1301) target = $region88
      $region87: #{forward.6} parent=83 // pred_region
        _
      $region88: #{forward.6} parent=83 // pred_fallthru
        _
      // Predicated region
      $region89: #{forward.6} parent=83 // pred_check
        %p1304 = pneg %p414
      $region90: #{forward.6} parent=83 // pred_check_branch
        %1306 = sbr.rel (%p1304) target = $region92
      $region91: #{forward.6} parent=83 // pred_region
        _
      $region92: #{forward.6} parent=83 // pred_fallthru
        _
    $region84: #{forward.6} parent=5 // pred_fallthru
      _
    %p1307 = scmp.le.s32.totalorder 2, %s24
    // Predicated region
    $region93: #{forward.6} parent=5 // pred_check
      %p1308 = pneg %p1307
    $region94: #{forward.6} parent=5 // pred_check_branch
      %1310 = sbr.rel (%p1308) target = $region96
    $region95: #{forward.6} parent=5 // pred_region
      %s1311 = ssub.s32 %s24, 2
      // Predicated region
      $region97: #{forward.6} parent=95 // pred_check
        %p1312 = pneg %p394
      $region98: #{forward.6} parent=95 // pred_check_branch
        %1314 = sbr.rel (%p1312) target = $region100
      $region99: #{forward.6} parent=95 // pred_region
        %p1315 = scmp.lt.s32.totalorder %s30, 1
        %s1316 = scalar_select %p1315, %s30, 1
        %s1317 = smul.addr %s1316, 8
        %s1318 = scalar_lea.vmem %s16, %s1317
      $region100: #{forward.6} parent=95 // pred_fallthru
        _
      // Predicated region
      $region101: #{forward.6} parent=95 // pred_check
        %p1319 = pneg %p420
      $region102: #{forward.6} parent=95 // pred_check_branch
        %1321 = sbr.rel (%p1319) target = $region104
      $region103: #{forward.6} parent=95 // pred_region
        %p1322 = scmp.lt.s32.totalorder %s30, 1
        %s1323 = scalar_select %p1322, %s30, 1
        %s1324 = scalar_lea.vmem %s17, %s1323
      $region104: #{forward.6} parent=95 // pred_fallthru
        _
    $region96: #{forward.6} parent=5 // pred_fallthru
      _
  $region6: #{forward.6} parent=0 // loop_footer
    %s28 = sadd.s32 1, %s24
  $region7: #{forward.6} parent=0 // loop_footer_branch
    %23 = sbr.rel target = $region3
  $region8: #{forward.6} parent=0 // loop_exit
    _

// kernel: forward.4
$region0: #{forward.4}
  #allocation0 [shape = 'u32[]', space=smem, size = 0x4, offset = 0x4, fixed_abs, tag = 'smem constant byte address 0x4 - core index']
  #allocation1 [shape = 'u32[144,128]{1,0:T(1,128)}', space=vmem, size = 0x12000, scoped, tag = 'internal scratch']
  %s0 = inlined_call_operand.vmem [shape: f32[2,4,256], index: 0, kind: input, shape index: {}]
  %s1 = inlined_call_operand.vmem [shape: f32[1,256], index: 1, kind: input, shape index: {}]
  %s2 = inlined_call_operand.vmem [shape: f32[1,256], index: 2, kind: input, shape index: {}]
  %s3 = inlined_call_operand.vmem [shape: bf16[4,4], index: 3, kind: input, shape index: {}]
  %s4 = inlined_call_operand.vmem [shape: f32[4,1], index: 4, kind: input, shape index: {}]
  %s5 = inlined_call_operand.vmem [shape: f32[2,1], index: 5, kind: input, shape index: {}]
  %s6 = inlined_call_operand.vmem [shape: f32[2,1], index: 6, kind: input, shape index: {}]
  %s7 = inlined_call_operand.vmem [shape: bf16[32,18], index: 7, kind: input, shape index: {}]
  %s8 = inlined_call_operand.vmem [shape: f32[32,1], index: 8, kind: input, shape index: {}]
  %s9 = inlined_call_operand.vmem [shape: f32[32,1], index: 9, kind: input, shape index: {}]
  %s10 = inlined_call_operand.vmem [shape: bf16[32,32], index: 10, kind: input, shape index: {}]
  %s11 = inlined_call_operand.vmem [shape: f32[32,1], index: 11, kind: input, shape index: {}]
  %s12 = inlined_call_operand.vmem [shape: f32[32,1], index: 12, kind: input, shape index: {}]
  %s13 = inlined_call_operand.vmem [shape: bf16[4,288], index: 13, kind: input, shape index: {}]
  %s14 = inlined_call_operand.vmem [shape: f32[4,1], index: 14, kind: input, shape index: {}]
  %s15 = inlined_call_operand.vmem [shape: f32[2,1], index: 15, kind: input, shape index: {}]
  %s16 = inlined_call_operand.vmem [shape: f32[2,4,256], index: 16, kind: output, shape index: {0}]
  %s17 = inlined_call_operand.vmem [shape: f32[2,1,128], index: 17, kind: output, shape index: {1}]
  %18 = xla_tuple %s16, %s17
  %s19 = sld [smem:[#allocation0]]
  $region105: #{forward.4} parent=0
    _
  %s21 = ssub.s32 1, %s19
  %s22 = scalar_select 0, %s21, %s19
  loop: start=0, step=1, limit=4
  $region2: #{forward.4} parent=0 // loop_pre_header
    _
  $region3: #{forward.4} parent=0 // loop_header
    %s24 = sphi 0, %s28
    %p25 = scmp.ge.s32.totalorder %s24, 4
    %s34 = sphi 0, %s36
    %s37 = sphi 0, %s34
    %s38 = sphi 0, %s37
    %s54 = sphi 0, %s38
    %s58 = sphi 0, %s58
    %s60 = sphi 0, %s58
    %s61 = sphi 0, %s60
    %s75 = sphi 0, %s61
    %s79 = sphi 0, %s79
    %s81 = sphi 0, %s79
    %s82 = sphi 0, %s81
    %s96 = sphi 0, %s82
    %s100 = sphi 0, %s100
    %s102 = sphi 0, %s100
    %s103 = sphi 0, %s102
    %s117 = sphi 0, %s103
    %s121 = sphi 0, %s121
    %s123 = sphi 0, %s121
    %s124 = sphi 0, %s123
    %s138 = sphi 0, %s124
    %s142 = sphi 0, %s142
    %s144 = sphi 0, %s142
    %s145 = sphi 0, %s144
    %s159 = sphi 0, %s145
    %s163 = sphi 0, %s163
    %s165 = sphi 0, %s163
    %s166 = sphi 0, %s165
    %s180 = sphi 0, %s166
    %s184 = sphi 0, %s184
    %s186 = sphi 0, %s184
    %s187 = sphi 0, %s186
    %s201 = sphi 0, %s187
    %s205 = sphi 0, %s205
    %s207 = sphi 0, %s205
    %s208 = sphi 0, %s207
    %s222 = sphi 0, %s208
    %s226 = sphi 0, %s226
    %s228 = sphi 0, %s226
    %s229 = sphi 0, %s228
    %s243 = sphi 0, %s229
    %s247 = sphi 0, %s247
    %s249 = sphi 0, %s247
    %s250 = sphi 0, %s249
    %s264 = sphi 0, %s250
    %s268 = sphi 0, %s268
    %s270 = sphi 0, %s268
    %s271 = sphi 0, %s270
    %s285 = sphi 0, %s271
    %s289 = sphi 0, %s289
    %s291 = sphi 0, %s289
    %s292 = sphi 0, %s291
    %s306 = sphi 0, %s292
    %s310 = sphi 0, %s310
    %s312 = sphi 0, %s310
    %s313 = sphi 0, %s312
    %s327 = sphi 0, %s313
    %s331 = sphi 0, %s331
    %s333 = sphi 0, %s331
    %s334 = sphi 0, %s333
    %s348 = sphi 0, %s334
    %s352 = sphi 0, %s352
    %s354 = sphi 0, %s352
    %s355 = sphi 0, %s354
    %s369 = sphi 0, %s355
    %s375 = sphi 0, %s377
    %s378 = sphi 0, %s375
    %s379 = sphi 0, %s378
    %s395 = sphi 0, %s379
    %s401 = sphi 0, %s403
    %s404 = sphi 0, %s401
    %s405 = sphi 0, %s404
    %s421 = sphi 0, %s405
  $region4: #{forward.4} parent=0 // loop_header_branch
    %27 = sbr.rel (%p25) target = $region8
  $region5: #{forward.4} parent=0 // loop_body
    %s29 = ssub.s32 %s24, 1
    %s30 = ssub.s32 %s24, 2
    %s31 = sadd.s32 %s24, 1
    %s32 = ssub.s32 %s24, %s31
    %p33 = scmp.eq.s32.totalorder %s32, 0
    %s35 = sadd.s32 %s34, 1
    %s36 = scalar_select %p33, %s34, %s35
    %p39 = pneg %p33
    %p40 = scmp.eq.s32.totalorder %s24, 1
    %p41 = por %p39, %p40
    %p42 = scmp.ne.s32.totalorder %s34, %s37
    %p43 = scmp.eq.s32.totalorder %s24, 0
    %p44 = por %p42, %p43
    %p45 = scmp.ne.s32.totalorder %s34, %s37
    %p46 = scmp.eq.s32.totalorder %s29, 1
    %p47 = por %p45, %p46
    %p48 = scmp.ne.s32.totalorder %s37, %s38
    %p49 = scmp.eq.s32.totalorder %s29, 0
    %p50 = por %p48, %p49
    %p51 = scmp.ne.s32.totalorder %s37, %s38
    %p52 = scmp.eq.s32.totalorder %s30, 1
    %p53 = por %p51, %p52
    %p55 = scmp.ne.s32.totalorder %s38, %s54
    %p56 = scmp.eq.s32.totalorder %s30, 0
    %p57 = por %p55, %p56
    %s59 = sadd.s32 %s58, 1
    %p62 = scmp.eq.s32.totalorder %s24, 1
    %p63 = scmp.ne.s32.totalorder %s58, %s60
    %p64 = scmp.eq.s32.totalorder %s24, 0
    %p65 = por %p63, %p64
    %p66 = scmp.ne.s32.totalorder %s58, %s60
    %p67 = scmp.eq.s32.totalorder %s29, 1
    %p68 = por %p66, %p67
    %p69 = scmp.ne.s32.totalorder %s60, %s61
    %p70 = scmp.eq.s32.totalorder %s29, 0
    %p71 = por %p69, %p70
    %p72 = scmp.ne.s32.totalorder %s60, %s61
    %p73 = scmp.eq.s32.totalorder %s30, 1
    %p74 = por %p72, %p73
    %p76 = scmp.ne.s32.totalorder %s61, %s75
    %p77 = scmp.eq.s32.totalorder %s30, 0
    %p78 = por %p76, %p77
    %s80 = sadd.s32 %s79, 1
    %p83 = scmp.eq.s32.totalorder %s24, 1
    %p84 = scmp.ne.s32.totalorder %s79, %s81
    %p85 = scmp.eq.s32.totalorder %s24, 0
    %p86 = por %p84, %p85
    %p87 = scmp.ne.s32.totalorder %s79, %s81
    %p88 = scmp.eq.s32.totalorder %s29, 1
    %p89 = por %p87, %p88
    %p90 = scmp.ne.s32.totalorder %s81, %s82
    %p91 = scmp.eq.s32.totalorder %s29, 0
    %p92 = por %p90, %p91
    %p93 = scmp.ne.s32.totalorder %s81, %s82
    %p94 = scmp.eq.s32.totalorder %s30, 1
    %p95 = por %p93, %p94
    %p97 = scmp.ne.s32.totalorder %s82, %s96
    %p98 = scmp.eq.s32.totalorder %s30, 0
    %p99 = por %p97, %p98
    %s101 = sadd.s32 %s100, 1
    %p104 = scmp.eq.s32.totalorder %s24, 1
    %p105 = scmp.ne.s32.totalorder %s100, %s102
    %p106 = scmp.eq.s32.totalorder %s24, 0
    %p107 = por %p105, %p106
    %p108 = scmp.ne.s32.totalorder %s100, %s102
    %p109 = scmp.eq.s32.totalorder %s29, 1
    %p110 = por %p108, %p109
    %p111 = scmp.ne.s32.totalorder %s102, %s103
    %p112 = scmp.eq.s32.totalorder %s29, 0
    %p113 = por %p111, %p112
    %p114 = scmp.ne.s32.totalorder %s102, %s103
    %p115 = scmp.eq.s32.totalorder %s30, 1
    %p116 = por %p114, %p115
    %p118 = scmp.ne.s32.totalorder %s103, %s117
    %p119 = scmp.eq.s32.totalorder %s30, 0
    %p120 = por %p118, %p119
    %s122 = sadd.s32 %s121, 1
    %p125 = scmp.eq.s32.totalorder %s24, 1
    %p126 = scmp.ne.s32.totalorder %s121, %s123
    %p127 = scmp.eq.s32.totalorder %s24, 0
    %p128 = por %p126, %p127
    %p129 = scmp.ne.s32.totalorder %s121, %s123
    %p130 = scmp.eq.s32.totalorder %s29, 1
    %p131 = por %p129, %p130
    %p132 = scmp.ne.s32.totalorder %s123, %s124
    %p133 = scmp.eq.s32.totalorder %s29, 0
    %p134 = por %p132, %p133
    %p135 = scmp.ne.s32.totalorder %s123, %s124
    %p136 = scmp.eq.s32.totalorder %s30, 1
    %p137 = por %p135, %p136
    %p139 = scmp.ne.s32.totalorder %s124, %s138
    %p140 = scmp.eq.s32.totalorder %s30, 0
    %p141 = por %p139, %p140
    %s143 = sadd.s32 %s142, 1
    %p146 = scmp.eq.s32.totalorder %s24, 1
    %p147 = scmp.ne.s32.totalorder %s142, %s144
    %p148 = scmp.eq.s32.totalorder %s24, 0
    %p149 = por %p147, %p148
    %p150 = scmp.ne.s32.totalorder %s142, %s144
    %p151 = scmp.eq.s32.totalorder %s29, 1
    %p152 = por %p150, %p151
    %p153 = scmp.ne.s32.totalorder %s144, %s145
    %p154 = scmp.eq.s32.totalorder %s29, 0
    %p155 = por %p153, %p154
    %p156 = scmp.ne.s32.totalorder %s144, %s145
    %p157 = scmp.eq.s32.totalorder %s30, 1
    %p158 = por %p156, %p157
    %p160 = scmp.ne.s32.totalorder %s145, %s159
    %p161 = scmp.eq.s32.totalorder %s30, 0
    %p162 = por %p160, %p161
    %s164 = sadd.s32 %s163, 1
    %p167 = scmp.eq.s32.totalorder %s24, 1
    %p168 = scmp.ne.s32.totalorder %s163, %s165
    %p169 = scmp.eq.s32.totalorder %s24, 0
    %p170 = por %p168, %p169
    %p171 = scmp.ne.s32.totalorder %s163, %s165
    %p172 = scmp.eq.s32.totalorder %s29, 1
    %p173 = por %p171, %p172
    %p174 = scmp.ne.s32.totalorder %s165, %s166
    %p175 = scmp.eq.s32.totalorder %s29, 0
    %p176 = por %p174, %p175
    %p177 = scmp.ne.s32.totalorder %s165, %s166
    %p178 = scmp.eq.s32.totalorder %s30, 1
    %p179 = por %p177, %p178
    %p181 = scmp.ne.s32.totalorder %s166, %s180
    %p182 = scmp.eq.s32.totalorder %s30, 0
    %p183 = por %p181, %p182
    %s185 = sadd.s32 %s184, 1
    %p188 = scmp.eq.s32.totalorder %s24, 1
    %p189 = scmp.ne.s32.totalorder %s184, %s186
    %p190 = scmp.eq.s32.totalorder %s24, 0
    %p191 = por %p189, %p190
    %p192 = scmp.ne.s32.totalorder %s184, %s186
    %p193 = scmp.eq.s32.totalorder %s29, 1
    %p194 = por %p192, %p193
    %p195 = scmp.ne.s32.totalorder %s186, %s187
    %p196 = scmp.eq.s32.totalorder %s29, 0
    %p197 = por %p195, %p196
    %p198 = scmp.ne.s32.totalorder %s186, %s187
    %p199 = scmp.eq.s32.totalorder %s30, 1
    %p200 = por %p198, %p199
    %p202 = scmp.ne.s32.totalorder %s187, %s201
    %p203 = scmp.eq.s32.totalorder %s30, 0
    %p204 = por %p202, %p203
    %s206 = sadd.s32 %s205, 1
    %p209 = scmp.eq.s32.totalorder %s24, 1
    %p210 = scmp.ne.s32.totalorder %s205, %s207
    %p211 = scmp.eq.s32.totalorder %s24, 0
    %p212 = por %p210, %p211
    %p213 = scmp.ne.s32.totalorder %s205, %s207
    %p214 = scmp.eq.s32.totalorder %s29, 1
    %p215 = por %p213, %p214
    %p216 = scmp.ne.s32.totalorder %s207, %s208
    %p217 = scmp.eq.s32.totalorder %s29, 0
    %p218 = por %p216, %p217
    %p219 = scmp.ne.s32.totalorder %s207, %s208
    %p220 = scmp.eq.s32.totalorder %s30, 1
    %p221 = por %p219, %p220
    %p223 = scmp.ne.s32.totalorder %s208, %s222
    %p224 = scmp.eq.s32.totalorder %s30, 0
    %p225 = por %p223, %p224
    %s227 = sadd.s32 %s226, 1
    %p230 = scmp.eq.s32.totalorder %s24, 1
    %p231 = scmp.ne.s32.totalorder %s226, %s228
    %p232 = scmp.eq.s32.totalorder %s24, 0
    %p233 = por %p231, %p232
    %p234 = scmp.ne.s32.totalorder %s226, %s228
    %p235 = scmp.eq.s32.totalorder %s29, 1
    %p236 = por %p234, %p235
    %p237 = scmp.ne.s32.totalorder %s228, %s229
    %p238 = scmp.eq.s32.totalorder %s29, 0
    %p239 = por %p237, %p238
    %p240 = scmp.ne.s32.totalorder %s228, %s229
    %p241 = scmp.eq.s32.totalorder %s30, 1
    %p242 = por %p240, %p241
    %p244 = scmp.ne.s32.totalorder %s229, %s243
    %p245 = scmp.eq.s32.totalorder %s30, 0
    %p246 = por %p244, %p245
    %s248 = sadd.s32 %s247, 1
    %p251 = scmp.eq.s32.totalorder %s24, 1
    %p252 = scmp.ne.s32.totalorder %s247, %s249
    %p253 = scmp.eq.s32.totalorder %s24, 0
    %p254 = por %p252, %p253
    %p255 = scmp.ne.s32.totalorder %s247, %s249
    %p256 = scmp.eq.s32.totalorder %s29, 1
    %p257 = por %p255, %p256
    %p258 = scmp.ne.s32.totalorder %s249, %s250
    %p259 = scmp.eq.s32.totalorder %s29, 0
    %p260 = por %p258, %p259
    %p261 = scmp.ne.s32.totalorder %s249, %s250
    %p262 = scmp.eq.s32.totalorder %s30, 1
    %p263 = por %p261, %p262
    %p265 = scmp.ne.s32.totalorder %s250, %s264
    %p266 = scmp.eq.s32.totalorder %s30, 0
    %p267 = por %p265, %p266
    %s269 = sadd.s32 %s268, 1
    %p272 = scmp.eq.s32.totalorder %s24, 1
    %p273 = scmp.ne.s32.totalorder %s268, %s270
    %p274 = scmp.eq.s32.totalorder %s24, 0
    %p275 = por %p273, %p274
    %p276 = scmp.ne.s32.totalorder %s268, %s270
    %p277 = scmp.eq.s32.totalorder %s29, 1
    %p278 = por %p276, %p277
    %p279 = scmp.ne.s32.totalorder %s270, %s271
    %p280 = scmp.eq.s32.totalorder %s29, 0
    %p281 = por %p279, %p280
    %p282 = scmp.ne.s32.totalorder %s270, %s271
    %p283 = scmp.eq.s32.totalorder %s30, 1
    %p284 = por %p282, %p283
    %p286 = scmp.ne.s32.totalorder %s271, %s285
    %p287 = scmp.eq.s32.totalorder %s30, 0
    %p288 = por %p286, %p287
    %s290 = sadd.s32 %s289, 1
    %p293 = scmp.eq.s32.totalorder %s24, 1
    %p294 = scmp.ne.s32.totalorder %s289, %s291
    %p295 = scmp.eq.s32.totalorder %s24, 0
    %p296 = por %p294, %p295
    %p297 = scmp.ne.s32.totalorder %s289, %s291
    %p298 = scmp.eq.s32.totalorder %s29, 1
    %p299 = por %p297, %p298
    %p300 = scmp.ne.s32.totalorder %s291, %s292
    %p301 = scmp.eq.s32.totalorder %s29, 0
    %p302 = por %p300, %p301
    %p303 = scmp.ne.s32.totalorder %s291, %s292
    %p304 = scmp.eq.s32.totalorder %s30, 1
    %p305 = por %p303, %p304
    %p307 = scmp.ne.s32.totalorder %s292, %s306
    %p308 = scmp.eq.s32.totalorder %s30, 0
    %p309 = por %p307, %p308
    %s311 = sadd.s32 %s310, 1
    %p314 = scmp.eq.s32.totalorder %s24, 1
    %p315 = scmp.ne.s32.totalorder %s310, %s312
    %p316 = scmp.eq.s32.totalorder %s24, 0
    %p317 = por %p315, %p316
    %p318 = scmp.ne.s32.totalorder %s310, %s312
    %p319 = scmp.eq.s32.totalorder %s29, 1
    %p320 = por %p318, %p319
    %p321 = scmp.ne.s32.totalorder %s312, %s313
    %p322 = scmp.eq.s32.totalorder %s29, 0
    %p323 = por %p321, %p322
    %p324 = scmp.ne.s32.totalorder %s312, %s313
    %p325 = scmp.eq.s32.totalorder %s30, 1
    %p326 = por %p324, %p325
    %p328 = scmp.ne.s32.totalorder %s313, %s327
    %p329 = scmp.eq.s32.totalorder %s30, 0
    %p330 = por %p328, %p329
    %s332 = sadd.s32 %s331, 1
    %p335 = scmp.eq.s32.totalorder %s24, 1
    %p336 = scmp.ne.s32.totalorder %s331, %s333
    %p337 = scmp.eq.s32.totalorder %s24, 0
    %p338 = por %p336, %p337
    %p339 = scmp.ne.s32.totalorder %s331, %s333
    %p340 = scmp.eq.s32.totalorder %s29, 1
    %p341 = por %p339, %p340
    %p342 = scmp.ne.s32.totalorder %s333, %s334
    %p343 = scmp.eq.s32.totalorder %s29, 0
    %p344 = por %p342, %p343
    %p345 = scmp.ne.s32.totalorder %s333, %s334
    %p346 = scmp.eq.s32.totalorder %s30, 1
    %p347 = por %p345, %p346
    %p349 = scmp.ne.s32.totalorder %s334, %s348
    %p350 = scmp.eq.s32.totalorder %s30, 0
    %p351 = por %p349, %p350
    %s353 = sadd.s32 %s352, 1
    %p356 = scmp.eq.s32.totalorder %s24, 1
    %p357 = scmp.ne.s32.totalorder %s352, %s354
    %p358 = scmp.eq.s32.totalorder %s24, 0
    %p359 = por %p357, %p358
    %p360 = scmp.ne.s32.totalorder %s352, %s354
    %p361 = scmp.eq.s32.totalorder %s29, 1
    %p362 = por %p360, %p361
    %p363 = scmp.ne.s32.totalorder %s354, %s355
    %p364 = scmp.eq.s32.totalorder %s29, 0
    %p365 = por %p363, %p364
    %p366 = scmp.ne.s32.totalorder %s354, %s355
    %p367 = scmp.eq.s32.totalorder %s30, 1
    %p368 = por %p366, %p367
    %p370 = scmp.ne.s32.totalorder %s355, %s369
    %p371 = scmp.eq.s32.totalorder %s30, 0
    %p372 = por %p370, %p371
    %s373 = ssub.s32 %s24, %s31
    %p374 = scmp.eq.s32.totalorder %s373, 0
    %s376 = sadd.s32 %s375, 1
    %s377 = scalar_select %p374, %s375, %s376
    %p380 = pneg %p374
    %p381 = scmp.eq.s32.totalorder %s24, 1
    %p382 = por %p380, %p381
    %p383 = scmp.ne.s32.totalorder %s375, %s378
    %p384 = scmp.eq.s32.totalorder %s24, 0
    %p385 = por %p383, %p384
    %p386 = scmp.ne.s32.totalorder %s375, %s378
    %p387 = scmp.eq.s32.totalorder %s29, 1
    %p388 = por %p386, %p387
    %p389 = scmp.ne.s32.totalorder %s378, %s379
    %p390 = scmp.eq.s32.totalorder %s29, 0
    %p391 = por %p389, %p390
    %p392 = scmp.ne.s32.totalorder %s378, %s379
    %p393 = scmp.eq.s32.totalorder %s30, 1
    %p394 = por %p392, %p393
    %p396 = scmp.ne.s32.totalorder %s379, %s395
    %p397 = scmp.eq.s32.totalorder %s30, 0
    %p398 = por %p396, %p397
    %s399 = ssub.s32 %s24, %s31
    %p400 = scmp.eq.s32.totalorder %s399, 0
    %s402 = sadd.s32 %s401, 1
    %s403 = scalar_select %p400, %s401, %s402
    %p406 = pneg %p400
    %p407 = scmp.eq.s32.totalorder %s24, 1
    %p408 = por %p406, %p407
    %p409 = scmp.ne.s32.totalorder %s401, %s404
    %p410 = scmp.eq.s32.totalorder %s24, 0
    %p411 = por %p409, %p410
    %p412 = scmp.ne.s32.totalorder %s401, %s404
    %p413 = scmp.eq.s32.totalorder %s29, 1
    %p414 = por %p412, %p413
    %p415 = scmp.ne.s32.totalorder %s404, %s405
    %p416 = scmp.eq.s32.totalorder %s29, 0
    %p417 = por %p415, %p416
    %p418 = scmp.ne.s32.totalorder %s404, %s405
    %p419 = scmp.eq.s32.totalorder %s30, 1
    %p420 = por %p418, %p419
    %p422 = scmp.ne.s32.totalorder %s405, %s421
    %p423 = scmp.eq.s32.totalorder %s30, 0
    %p424 = por %p422, %p423
    %p425 = scmp.le.s32.totalorder 1, %s24
    %p426 = scmp.lt.s32.totalorder %s24, 3
    %p427 = pnand %p425, %p426
    %p428 = pneg %p427
    // Predicated region
    $region9: #{forward.4} parent=5 // pred_check
      _
    $region10: #{forward.4} parent=5 // pred_check_branch
      %430 = sbr.rel (%p427) target = $region12
    $region11: #{forward.4} parent=5 // pred_region
      %s431 = ssub.s32 %s24, 1
      // Predicated region
      $region13: #{forward.4} parent=11 // pred_check
        %p432 = pneg %p71
      $region14: #{forward.4} parent=11 // pred_check_branch
        %434 = sbr.rel (%p432) target = $region16
      $region15: #{forward.4} parent=11 // pred_region
        _
      $region16: #{forward.4} parent=11 // pred_fallthru
        _
      // Predicated region
      $region17: #{forward.4} parent=11 // pred_check
        %p435 = pneg %p92
      $region18: #{forward.4} parent=11 // pred_check_branch
        %437 = sbr.rel (%p435) target = $region20
      $region19: #{forward.4} parent=11 // pred_region
        _
      $region20: #{forward.4} parent=11 // pred_fallthru
        _
      // Predicated region
      $region21: #{forward.4} parent=11 // pred_check
        %p438 = pneg %p113
      $region22: #{forward.4} parent=11 // pred_check_branch
        %440 = sbr.rel (%p438) target = $region24
      $region23: #{forward.4} parent=11 // pred_region
        _
      $region24: #{forward.4} parent=11 // pred_fallthru
        _
      // Predicated region
      $region25: #{forward.4} parent=11 // pred_check
        %p441 = pneg %p134
      $region26: #{forward.4} parent=11 // pred_check_branch
        %443 = sbr.rel (%p441) target = $region28
      $region27: #{forward.4} parent=11 // pred_region
        _
      $region28: #{forward.4} parent=11 // pred_fallthru
        _
      // Predicated region
      $region29: #{forward.4} parent=11 // pred_check
        %p444 = pneg %p155
      $region30: #{forward.4} parent=11 // pred_check_branch
        %446 = sbr.rel (%p444) target = $region32
      $region31: #{forward.4} parent=11 // pred_region
        _
      $region32: #{forward.4} parent=11 // pred_fallthru
        _
      // Predicated region
      $region33: #{forward.4} parent=11 // pred_check
        %p447 = pneg %p176
      $region34: #{forward.4} parent=11 // pred_check_branch
        %449 = sbr.rel (%p447) target = $region36
      $region35: #{forward.4} parent=11 // pred_region
        _
      $region36: #{forward.4} parent=11 // pred_fallthru
        _
      // Predicated region
      $region37: #{forward.4} parent=11 // pred_check
        %p450 = pneg %p197
      $region38: #{forward.4} parent=11 // pred_check_branch
        %452 = sbr.rel (%p450) target = $region40
      $region39: #{forward.4} parent=11 // pred_region
        _
      $region40: #{forward.4} parent=11 // pred_fallthru
        _
      // Predicated region
      $region41: #{forward.4} parent=11 // pred_check
        %p453 = pneg %p218
      $region42: #{forward.4} parent=11 // pred_check_branch
        %455 = sbr.rel (%p453) target = $region44
      $region43: #{forward.4} parent=11 // pred_region
        _
      $region44: #{forward.4} parent=11 // pred_fallthru
        _
      // Predicated region
      $region45: #{forward.4} parent=11 // pred_check
        %p456 = pneg %p239
      $region46: #{forward.4} parent=11 // pred_check_branch
        %458 = sbr.rel (%p456) target = $region48
      $region47: #{forward.4} parent=11 // pred_region
        _
      $region48: #{forward.4} parent=11 // pred_fallthru
        _
      // Predicated region
      $region49: #{forward.4} parent=11 // pred_check
        %p459 = pneg %p260
      $region50: #{forward.4} parent=11 // pred_check_branch
        %461 = sbr.rel (%p459) target = $region52
      $region51: #{forward.4} parent=11 // pred_region
        _
      $region52: #{forward.4} parent=11 // pred_fallthru
        _
      // Predicated region
      $region53: #{forward.4} parent=11 // pred_check
        %p462 = pneg %p281
      $region54: #{forward.4} parent=11 // pred_check_branch
        %464 = sbr.rel (%p462) target = $region56
      $region55: #{forward.4} parent=11 // pred_region
        _
      $region56: #{forward.4} parent=11 // pred_fallthru
        _
      // Predicated region
      $region57: #{forward.4} parent=11 // pred_check
        %p465 = pneg %p302
      $region58: #{forward.4} parent=11 // pred_check_branch
        %467 = sbr.rel (%p465) target = $region60
      $region59: #{forward.4} parent=11 // pred_region
        _
      $region60: #{forward.4} parent=11 // pred_fallthru
        _
      // Predicated region
      $region61: #{forward.4} parent=11 // pred_check
        %p468 = pneg %p323
      $region62: #{forward.4} parent=11 // pred_check_branch
        %470 = sbr.rel (%p468) target = $region64
      $region63: #{forward.4} parent=11 // pred_region
        _
      $region64: #{forward.4} parent=11 // pred_fallthru
        _
      // Predicated region
      $region65: #{forward.4} parent=11 // pred_check
        %p471 = pneg %p344
      $region66: #{forward.4} parent=11 // pred_check_branch
        %473 = sbr.rel (%p471) target = $region68
      $region67: #{forward.4} parent=11 // pred_region
        _
      $region68: #{forward.4} parent=11 // pred_fallthru
        _
      // Predicated region
      $region69: #{forward.4} parent=11 // pred_check
        %p474 = pneg %p365
      $region70: #{forward.4} parent=11 // pred_check_branch
        %476 = sbr.rel (%p474) target = $region72
      $region71: #{forward.4} parent=11 // pred_region
        _
      $region72: #{forward.4} parent=11 // pred_fallthru
        _
    $region12: #{forward.4} parent=5 // pred_fallthru
      _
    %p477 = scmp.lt.s32.totalorder %s24, 2
    // Predicated region
    $region73: #{forward.4} parent=5 // pred_check
      %p478 = pneg %p477
    $region74: #{forward.4} parent=5 // pred_check_branch
      %480 = sbr.rel (%p478) target = $region76
    $region75: #{forward.4} parent=5 // pred_region
      // Predicated region
      $region77: #{forward.4} parent=75 // pred_check
        %p481 = pneg %p44
      $region78: #{forward.4} parent=75 // pred_check_branch
        %483 = sbr.rel (%p481) target = $region80
      $region79: #{forward.4} parent=75 // pred_region
        %p484 = scmp.lt.s32.totalorder %s24, 1
        %s485 = scalar_select %p484, %s24, 1
        %s486 = smul.addr %s485, 2
        %s487 = smul.addr %s486, 4
        %s488 = scalar_lea.vmem %s0, %s487
      $region80: #{forward.4} parent=75 // pred_fallthru
        _
    $region76: #{forward.4} parent=5 // pred_fallthru
      _
    %p489 = scmp.le.s32.totalorder 1, %s24
    %p490 = scmp.lt.s32.totalorder %s24, 3
    %p491 = pnand %p489, %p490
    %p492 = pneg %p491
    // Predicated region
    $region81: #{forward.4} parent=5 // pred_check
      _
    $region82: #{forward.4} parent=5 // pred_check_branch
      %494 = sbr.rel (%p491) target = $region84
    $region83: #{forward.4} parent=5 // pred_region
      %s495 = ssub.s32 %s24, 1
      %p496 = scmp.lt.s32.totalorder %s29, 1
      %s497 = scalar_select %p496, %s29, 1
      %s498 = smul.addr %s497, 2
      %s499 = smul.addr %s498, 4
      %s500 = scalar_lea.vmem %s0, %s499
      %p501 = pneg %p50
      %p502 = pneg %p47
      %p503 = pneg %p71
      %p504 = pneg %p68
      %p505 = pneg %p92
      %p506 = pneg %p89
      %p507 = pneg %p113
      %p508 = pneg %p110
      %p509 = pneg %p134
      %p510 = pneg %p131
      %p511 = pneg %p155
      %p512 = pneg %p152
      %p513 = pneg %p176
      %p514 = pneg %p173
      %p515 = pneg %p197
      %p516 = pneg %p194
      %p517 = pneg %p218
      %p518 = pneg %p215
      %p519 = pneg %p239
      %p520 = pneg %p236
      %p521 = pneg %p260
      %p522 = pneg %p257
      %p523 = pneg %p281
      %p524 = pneg %p278
      %p525 = pneg %p302
      %p526 = pneg %p299
      %p527 = pneg %p323
      %p528 = pneg %p320
      %p529 = pneg %p344
      %p530 = pneg %p341
      %p531 = pneg %p365
      %p532 = pneg %p362
      %p533 = pneg %p391
      %p534 = pneg %p388
      %p535 = scmp.lt.s32.totalorder %s29, 1
      %s536 = scalar_select %p535, %s29, 1
      %s537 = smul.addr %s536, 2
      %s538 = smul.addr %s537, 4
      %s539 = scalar_lea.vmem %s16, %s538
      %p540 = pneg %p417
      %p541 = pneg %p414
      %p542 = scmp.lt.s32.totalorder %s29, 1
      %s543 = scalar_select %p542, %s29, 1
      %s544 = scalar_lea.vmem %s17, %s543
      %p545 = scmp.lt.s32.totalorder %s29, 1
      %s546 = scalar_select %p545, %s29, 1
      %s547 = smul.addr %s546, 2
      %s548 = smul.addr %s547, 4
      %s549 = scalar_lea.vmem %s0, %s548
      %p550 = scmp.lt.s32.totalorder %s29, 1
      %s551 = scalar_select %p550, %s29, 1
      %s552 = smul.addr %s551, 2
      %s553 = smul.addr %s552, 4
      %s554 = scalar_lea.vmem %s16, %s553
      %p555 = scmp.lt.s32.totalorder %s29, 1
      %s556 = scalar_select %p555, %s29, 1
      %s557 = scalar_lea.vmem %s17, %s556
      %v559 = vld [vmem:[%s549] sm:$0xff]
      %v560 = vld [vmem:[%s1] sm:$0x3]
      %v561 = vld [vmem:[%s2] sm:$0x3]
      %v562 = vld [vmem:[%s3] sm:$0x3]
      %v564 = vcombine.high %v559, %v559
      %v566 = vpack.c.bf16 %v559, %v559
      %v567 = vpack.c.bf16 %v564, %v564
      %v568 = vld [vmem:[%s4] sm:$0xf]
      %570 = vset.pattern.permute.xlu0 0
      %571 = vperm.xlu0 %570, %v568
      %v572 = vpop.permute.xlu0 %571
      %vm574 = vcmask 31744
      %v576 = vsel %vm574, %v562, 0
      %vm578 = vcmask 1041408
      %v580 = vsel %vm578, %v566, 0
      %v583 = vsel %vm578, %v567, 0
      %585 = vmatprep.subr.bf16.mxu0 %v583
      %586 = vmatpush1.bf16.msra.mxu0 %v580
      %587 = vmatprep.subr.bf16.mxu0 0
      %588 = vmatpush1.bf16.msra.mxu0 0
      %589 = vmatprep.subr.bf16.mxu0 0
      %590 = vmatpush1.bf16.msra.mxu0 0
      %591 = vmatprep.subr.bf16.mxu0 0
      %592 = vmatpush1.bf16.msra.mxu0 0
      %593 = vmatprep.subr.bf16.mxu0 0
      %594 = vmatpush1.bf16.msra.mxu0 0
      %595 = vmatprep.subr.bf16.mxu0 0
      %596 = vmatpush1.bf16.msra.mxu0 0
      %597 = vmatprep.subr.bf16.mxu0 0
      %598 = vmatpush1.bf16.msra.mxu0 0
      %599 = vmatprep.subr.bf16.mxu0 0
      %600 = vmatpush1.bf16.msra.mxu0 0
      %601 = vmatprep.subr.bf16.mxu0 0
      %602 = vmatpush1.bf16.msra.mxu0 0
      %603 = vmatprep.subr.bf16.mxu0 0
      %604 = vmatpush1.bf16.msra.mxu0 0
      %605 = vmatprep.subr.bf16.mxu0 0
      %606 = vmatpush1.bf16.msra.mxu0 0
      %607 = vmatprep.subr.bf16.mxu0 0
      %608 = vmatpush1.bf16.msra.mxu0 0
      %609 = vmatprep.subr.bf16.mxu0 0
      %610 = vmatpush1.bf16.msra.mxu0 0
      %611 = vmatprep.subr.bf16.mxu0 0
      %612 = vmatpush1.bf16.msra.mxu0 0
      %613 = vmatprep.subr.bf16.mxu0 0
      %614 = vmatpush1.bf16.msra.mxu0 0
      %615 = vmatprep.subr.bf16.mxu0 0
      %616 = vmatpush1.bf16.msra.mxu0 0
      %617 = vmatprep.mubr.bf16.mxu0 0
      %618 = vmatmul.mubr.bf16.gmra.mrb[0].mxu0 %v576
      %v619 = vpop.f32.mrb[0].mxu0
      %v620 = vadd.f32 %v572, %v619
      %v621 = vpop.f32.mrb[0].mxu0
      %v622 = vadd.f32 %v572, %v621
      %v623 = vpop.f32.mrb[0].mxu0
      %v624 = vpop.f32.mrb[0].mxu0
      %625 = vdwg.mxu0
      %v626 = vld [vmem:[%s5] sm:$0x3]
      %628 = vset.pattern.permute.xlu0 0
      %629 = vperm.xlu0 %628, %v626
      %v630 = vpop.permute.xlu0 %629
      %v631 = vrot.slane %v630, 6
      %v633 = vmul.f32 %v620, %v631
      %v634 = vmul.f32 %v622, %v631
      %v635 = vld [vmem:[%s6] sm:$0x3]
      %637 = vset.pattern.permute.xlu0 0
      %638 = vperm.xlu0 %637, %v635
      %v639 = vpop.permute.xlu0 %638
      %v640 = vrot.slane %v639, 6
      %v642 = vadd.f32 %v633, %v640
      %v643 = vadd.f32 %v634, %v640
      %v644 = vmax.f32 %v642, 0.0
      %v645 = vmax.f32 %v643, 0.0
      %v646 = vld [vmem:[%s7] sm:$0xf]
      %v647 = vld [vmem:[%s7 + $0x4] sm:$0xf]
      %v648 = vld [vmem:[%s7 + $0x8] sm:$0xf]
      %v649 = vld [vmem:[%s7 + $0xc] sm:$0xf]
      %v652 = vrot.slane %v644, 2
      %v653 = vrot.slane %v645, 2
      %654 = vrot.lane.b32.xlu0 %v652, 17
      %v655 = vpop.permute.xlu0 %654
      %656 = vrot.lane.b32.xlu0 %v653, 17
      %v657 = vpop.permute.xlu0 %656
      %vm658 = vcmask 138240
      %v659 = vsel %vm658, %v655, %v657
      %v663 = vsel %vm658, 0.0, %v655
      %v664 = vsel %vm658, %v657, 0.0
      %v666 = vlaneseq
      %v667 = vshrl.u32 %v666, 7
      %v668 = vsub.s32 0, %v667
      %v669 = vrot.slane %v560, %v668
      %v670 = vlaneseq
      %v671 = vshrl.u32 %v670, 7
      %v672 = vsub.s32 1, %v671
      %v673 = vrot.slane %v560, %v672
      %v676 = vmul.f32 %v663, %v669
      %v677 = vmul.f32 %v659, %v673
      %v679 = vlaneseq
      %v680 = vshrl.u32 %v679, 7
      %v681 = vsub.s32 0, %v680
      %v682 = vrot.slane %v561, %v681
      %v683 = vlaneseq
      %v684 = vshrl.u32 %v683, 7
      %v685 = vsub.s32 1, %v684
      %v686 = vrot.slane %v561, %v685
      %687 = vrot.lane.b32.xlu0 %v682, 2
      %v688 = vpop.permute.xlu0 %687
      %689 = vrot.lane.b32.xlu0 %v686, 2
      %v690 = vpop.permute.xlu0 %689
      %vm691 = vcmask 15360
      %v692 = vsel %vm691, %v688, %v690
      %v696 = vmul.f32 %v663, %v688
      %v697 = vmul.f32 %v659, %v692
      %v698 = vmul.f32 %v664, %v690
      %699 = vrot.lane.b32.xlu0 %v669, 16
      %v700 = vpop.permute.xlu0 %699
      %701 = vrot.lane.b32.xlu0 %v673, 16
      %v702 = vpop.permute.xlu0 %701
      %vm703 = vcmask 130048
      %v704 = vsel %vm703, %v700, %v702
      %v708 = vmul.f32 %v663, %v700
      %v709 = vmul.f32 %v659, %v704
      %v710 = vmul.f32 %v664, %v702
      %711 = vrot.lane.b32.xlu0 %v682, 18
      %v712 = vpop.permute.xlu0 %711
      %713 = vrot.lane.b32.xlu0 %v686, 18
      %v714 = vpop.permute.xlu0 %713
      %vm715 = vcmask 146432
      %v716 = vsel %vm715, %v712, %v714
      %v720 = vmul.f32 %v663, %v712
      %v721 = vmul.f32 %v659, %v716
      %v722 = vmul.f32 %v664, %v714
      %723 = vrot.lane.b32.xlu0 %v669, 32
      %v724 = vpop.permute.xlu0 %723
      %725 = vrot.lane.b32.xlu0 %v673, 32
      %v726 = vpop.permute.xlu0 %725
      %vm727 = vcmask 261120
      %v728 = vsel %vm727, %v724, %v726
      %v732 = vmul.f32 %v663, %v724
      %v733 = vmul.f32 %v659, %v728
      %v734 = vmul.f32 %v664, %v726
      %735 = vrot.lane.b32.xlu0 %v682, 34
      %v736 = vpop.permute.xlu0 %735
      %737 = vrot.lane.b32.xlu0 %v686, 34
      %v738 = vpop.permute.xlu0 %737
      %vm739 = vcmask 277504
      %v740 = vsel %vm739, %v736, %v738
      %v744 = vmul.f32 %v663, %v736
      %v745 = vmul.f32 %v659, %v740
      %v746 = vmul.f32 %v664, %v738
      %v749 = vrot.slane %v663, 6
      %v750 = vrot.slane %v659, 6
      %v751 = vrot.slane %v664, 6
      %752 = vrot.lane.b32.xlu0 %v749, 127
      %v753 = vpop.permute.xlu0 %752
      %754 = vrot.lane.b32.xlu0 %v750, 127
      %v755 = vpop.permute.xlu0 %754
      %756 = vrot.lane.b32.xlu0 %v751, 127
      %v757 = vpop.permute.xlu0 %756
      %vm758 = vcmask 1039360
      %v759 = vsel %vm758, %v753, %v755
      %v760 = vsel %vm758, %v755, %v757
      %v766 = vrot.slane %v696, 4
      %v767 = vrot.slane %v697, 4
      %v768 = vrot.slane %v698, 4
      %769 = vrot.lane.b32.xlu0 %v766, 126
      %v770 = vpop.permute.xlu0 %769
      %771 = vrot.lane.b32.xlu0 %v767, 126
      %v772 = vpop.permute.xlu0 %771
      %773 = vrot.lane.b32.xlu0 %v768, 126
      %v774 = vpop.permute.xlu0 %773
      %vm775 = vcmask 1031168
      %v776 = vsel %vm775, %v770, %v772
      %v777 = vsel %vm775, %v772, %v774
      %v783 = vrot.slane %v708, 2
      %v784 = vrot.slane %v709, 2
      %v785 = vrot.slane %v710, 2
      %786 = vrot.lane.b32.xlu0 %v783, 112
      %v787 = vpop.permute.xlu0 %786
      %788 = vrot.lane.b32.xlu0 %v784, 112
      %v789 = vpop.permute.xlu0 %788
      %790 = vrot.lane.b32.xlu0 %v785, 112
      %v791 = vpop.permute.xlu0 %790
      %vm792 = vcmask 916480
      %v793 = vsel %vm792, %v787, %v789
      %v794 = vsel %vm792, %v789, %v791
      %797 = vrot.lane.b32.xlu0 %v663, 111
      %v798 = vpop.permute.xlu0 %797
      %799 = vrot.lane.b32.xlu0 %v659, 111
      %v800 = vpop.permute.xlu0 %799
      %801 = vrot.lane.b32.xlu0 %v664, 111
      %v802 = vpop.permute.xlu0 %801
      %vm803 = vcmask 908288
      %v804 = vsel %vm803, %v798, %v800
      %v805 = vsel %vm803, %v800, %v802
      %v811 = vrot.slane %v720, 6
      %v812 = vrot.slane %v721, 6
      %v813 = vrot.slane %v722, 6
      %814 = vrot.lane.b32.xlu0 %v811, 110
      %v815 = vpop.permute.xlu0 %814
      %816 = vrot.lane.b32.xlu0 %v812, 110
      %v817 = vpop.permute.xlu0 %816
      %818 = vrot.lane.b32.xlu0 %v813, 110
      %v819 = vpop.permute.xlu0 %818
      %vm820 = vcmask 900096
      %v821 = vsel %vm820, %v815, %v817
      %v822 = vsel %vm820, %v817, %v819
      %v828 = vrot.slane %v732, 4
      %v829 = vrot.slane %v733, 4
      %v830 = vrot.slane %v734, 4
      %831 = vrot.lane.b32.xlu0 %v828, 96
      %v832 = vpop.permute.xlu0 %831
      %833 = vrot.lane.b32.xlu0 %v829, 96
      %v834 = vpop.permute.xlu0 %833
      %835 = vrot.lane.b32.xlu0 %v830, 96
      %v836 = vpop.permute.xlu0 %835
      %vm837 = vcmask 785408
      %v838 = vsel %vm837, %v832, %v834
      %v839 = vsel %vm837, %v834, %v836
      %v842 = vrot.slane %v663, 2
      %v843 = vrot.slane %v659, 2
      %v844 = vrot.slane %v664, 2
      %845 = vrot.lane.b32.xlu0 %v842, 95
      %v846 = vpop.permute.xlu0 %845
      %847 = vrot.lane.b32.xlu0 %v843, 95
      %v848 = vpop.permute.xlu0 %847
      %849 = vrot.lane.b32.xlu0 %v844, 95
      %v850 = vpop.permute.xlu0 %849
      %vm851 = vcmask 777216
      %v852 = vsel %vm851, %v846, %v848
      %v853 = vsel %vm851, %v848, %v850
      %859 = vrot.lane.b32.xlu0 %v744, 94
      %v860 = vpop.permute.xlu0 %859
      %861 = vrot.lane.b32.xlu0 %v745, 94
      %v862 = vpop.permute.xlu0 %861
      %863 = vrot.lane.b32.xlu0 %v746, 94
      %v864 = vpop.permute.xlu0 %863
      %vm865 = vcmask 769024
      %v866 = vsel %vm865, %v860, %v862
      %v867 = vsel %vm865, %v862, %v864
      %v870 = vsel %vm578, %v676, %v759
      %v871 = vsel %vm578, %v677, %v760
      %vm872 = vcmask 1043456
      %v873 = vsel %vm872, %v870, %v776
      %v874 = vsel %vm872, %v871, %v777
      %vm875 = vcmask 1045504
      %v876 = vsel %vm875, %v873, %v793
      %v877 = vsel %vm875, %v874, %v794
      %v878 = vsel %vm578, %v804, %v821
      %v879 = vsel %vm578, %v805, %v822
      %v880 = vsel %vm872, %v878, %v838
      %v881 = vsel %vm872, %v879, %v839
      %v882 = vsel %vm875, %v880, %v852
      %v883 = vsel %vm875, %v881, %v853
      %v884 = vpack.c.bf16 %v882, %v876
      %v885 = vpack.c.bf16 %v883, %v877
      %v886 = vpack.c.bf16 %v866, %v866
      %v887 = vpack.c.bf16 %v867, %v867
      %v892 = vunpack.c.l.b16 %v646
      %v893 = vunpack.c.l.b16 %v647
      %v894 = vunpack.c.l.b16 %v648
      %v895 = vunpack.c.l.b16 %v649
      %v896 = vpack.c.b16 %v893, %v892
      %v897 = vpack.c.b16 %v895, %v894
      %v899 = vsel %vm715, %v896, 0
      %v902 = vsel %vm715, %v897, 0
      %vm904 = vcmask 1040384
      %v906 = vsel %vm904, %v886, 0
      %v909 = vsel %vm904, %v887, 0
      %911 = vmatprep.subr.bf16.mxu0 %v885
      %912 = vmatpush1.bf16.msra.mxu0 %v884
      %913 = vmatprep.subr.bf16.mxu0 %v909
      %914 = vmatpush1.bf16.msra.mxu0 %v906
      %915 = vmatprep.subr.bf16.mxu0 0
      %916 = vmatpush1.bf16.msra.mxu0 0
      %917 = vmatprep.subr.bf16.mxu0 0
      %918 = vmatpush1.bf16.msra.mxu0 0
      %919 = vmatprep.subr.bf16.mxu0 0
      %920 = vmatpush1.bf16.msra.mxu0 0
      %921 = vmatprep.subr.bf16.mxu0 0
      %922 = vmatpush1.bf16.msra.mxu0 0
      %923 = vmatprep.subr.bf16.mxu0 0
      %924 = vmatpush1.bf16.msra.mxu0 0
      %925 = vmatprep.subr.bf16.mxu0 0
      %926 = vmatpush1.bf16.msra.mxu0 0
      %927 = vmatprep.subr.bf16.mxu0 0
      %928 = vmatpush1.bf16.msra.mxu0 0
      %929 = vmatprep.subr.bf16.mxu0 0
      %930 = vmatpush1.bf16.msra.mxu0 0
      %931 = vmatprep.subr.bf16.mxu0 0
      %932 = vmatpush1.bf16.msra.mxu0 0
      %933 = vmatprep.subr.bf16.mxu0 0
      %934 = vmatpush1.bf16.msra.mxu0 0
      %935 = vmatprep.subr.bf16.mxu0 0
      %936 = vmatpush1.bf16.msra.mxu0 0
      %937 = vmatprep.subr.bf16.mxu0 0
      %938 = vmatpush1.bf16.msra.mxu0 0
      %939 = vmatprep.subr.bf16.mxu0 0
      %940 = vmatpush1.bf16.msra.mxu0 0
      %941 = vmatprep.subr.bf16.mxu0 0
      %942 = vmatpush1.bf16.msra.mxu0 0
      %943 = vmatprep.mubr.bf16.mxu0 0
      %944 = vmatmul.mubr.bf16.gmra.mrb[0].mxu0 %v899
      %v945 = vpop.f32.mrb[0].mxu0
      %v946 = vadd.f32 0.0, %v945
      %v947 = vpop.f32.mrb[0].mxu0
      %v948 = vadd.f32 0.0, %v947
      %v949 = vpop.f32.mrb[0].mxu0
      %v950 = vadd.f32 0.0, %v949
      %v951 = vpop.f32.mrb[0].mxu0
      %v952 = vadd.f32 0.0, %v951
      %953 = vmatprep.mubr.bf16.mxu0 0
      %954 = vmatmul.mubr.bf16.gmra.mrb[0].mxu0 %v902
      %v955 = vpop.f32.mrb[0].mxu0
      %v956 = vadd.f32 0.0, %v955
      %v957 = vpop.f32.mrb[0].mxu0
      %v958 = vadd.f32 0.0, %v957
      %v959 = vpop.f32.mrb[0].mxu0
      %v960 = vadd.f32 0.0, %v959
      %v961 = vpop.f32.mrb[0].mxu0
      %v962 = vadd.f32 0.0, %v961
      %963 = vdwg.mxu0
      %v964 = vld [vmem:[%s8] sm:$0xff]
      %v965 = vld [vmem:[%s8 + $0x8] sm:$0xff]
      %v966 = vld [vmem:[%s8 + $0x10] sm:$0xff]
      %v967 = vld [vmem:[%s8 + $0x18] sm:$0xff]
      %969 = vset.pattern.permute.xlu0 0
      %970 = vperm.xlu0 %969, %v964
      %v971 = vpop.permute.xlu0 %970
      %974 = vset.pattern.permute.xlu0 0
      %975 = vperm.xlu0 %974, %v965
      %v976 = vpop.permute.xlu0 %975
      %979 = vset.pattern.permute.xlu0 0
      %980 = vperm.xlu0 %979, %v966
      %v981 = vpop.permute.xlu0 %980
      %984 = vset.pattern.permute.xlu0 0
      %985 = vperm.xlu0 %984, %v967
      %v986 = vpop.permute.xlu0 %985
      %v988 = vmul.f32 %v946, %v971
      %v989 = vmul.f32 %v948, %v971
      %v990 = vmul.f32 %v950, %v976
      %v991 = vmul.f32 %v952, %v976
      %v992 = vmul.f32 %v956, %v981
      %v993 = vmul.f32 %v958, %v981
      %v994 = vmul.f32 %v960, %v986
      %v995 = vmul.f32 %v962, %v986
      %v996 = vld [vmem:[%s9] sm:$0xff]
      %v997 = vld [vmem:[%s9 + $0x8] sm:$0xff]
      %v998 = vld [vmem:[%s9 + $0x10] sm:$0xff]
      %v999 = vld [vmem:[%s9 + $0x18] sm:$0xff]
      %1001 = vset.pattern.permute.xlu0 0
      %1002 = vperm.xlu0 %1001, %v996
      %v1003 = vpop.permute.xlu0 %1002
      %1006 = vset.pattern.permute.xlu0 0
      %1007 = vperm.xlu0 %1006, %v997
      %v1008 = vpop.permute.xlu0 %1007
      %1011 = vset.pattern.permute.xlu0 0
      %1012 = vperm.xlu0 %1011, %v998
      %v1013 = vpop.permute.xlu0 %1012
      %1016 = vset.pattern.permute.xlu0 0
      %1017 = vperm.xlu0 %1016, %v999
      %v1018 = vpop.permute.xlu0 %1017
      %v1020 = vadd.f32 %v988, %v1003
      %v1021 = vadd.f32 %v989, %v1003
      %v1022 = vadd.f32 %v990, %v1008
      %v1023 = vadd.f32 %v991, %v1008
      %v1024 = vadd.f32 %v992, %v1013
      %v1025 = vadd.f32 %v993, %v1013
      %v1026 = vadd.f32 %v994, %v1018
      %v1027 = vadd.f32 %v995, %v1018
      %v1028 = vmax.f32 %v1020, 0.0
      %v1029 = vmax.f32 %v1021, 0.0
      %v1030 = vmax.f32 %v1022, 0.0
      %v1031 = vmax.f32 %v1023, 0.0
      %v1032 = vmax.f32 %v1024, 0.0
      %v1033 = vmax.f32 %v1025, 0.0
      %v1034 = vmax.f32 %v1026, 0.0
      %v1035 = vmax.f32 %v1027, 0.0
      %v1036 = vld [vmem:[%s10] sm:$0xf]
      %v1037 = vld [vmem:[%s10 + $0x4] sm:$0xf]
      %v1038 = vld [vmem:[%s10 + $0x8] sm:$0xf]
      %v1039 = vld [vmem:[%s10 + $0xc] sm:$0xf]
      %v1040 = vpack.c.bf16 %v1030, %v1028
      %v1041 = vpack.c.bf16 %v1031, %v1029
      %v1042 = vpack.c.bf16 %v1034, %v1032
      %v1043 = vpack.c.bf16 %v1035, %v1033
      %v1048 = vunpack.c.l.b16 %v1036
      %v1049 = vunpack.c.l.b16 %v1037
      %v1050 = vunpack.c.l.b16 %v1038
      %v1051 = vunpack.c.l.b16 %v1039
      %v1052 = vpack.c.b16 %v1049, %v1048
      %v1053 = vpack.c.b16 %v1051, %v1050
      %v1055 = vsel %vm727, %v1052, 0
      %v1058 = vsel %vm727, %v1053, 0
      %1060 = vmatprep.subr.bf16.mxu0 %v1041
      %1061 = vmatpush1.bf16.msra.mxu0 %v1040
      %1062 = vmatprep.subr.bf16.mxu0 %v1043
      %1063 = vmatpush1.bf16.msra.mxu0 %v1042
      %1064 = vmatprep.subr.bf16.mxu0 0
      %1065 = vmatpush1.bf16.msra.mxu0 0
      %1066 = vmatprep.subr.bf16.mxu0 0
      %1067 = vmatpush1.bf16.msra.mxu0 0
      %1068 = vmatprep.subr.bf16.mxu0 0
      %1069 = vmatpush1.bf16.msra.mxu0 0
      %1070 = vmatprep.subr.bf16.mxu0 0
      %1071 = vmatpush1.bf16.msra.mxu0 0
      %1072 = vmatprep.subr.bf16.mxu0 0
      %1073 = vmatpush1.bf16.msra.mxu0 0
      %1074 = vmatprep.subr.bf16.mxu0 0
      %1075 = vmatpush1.bf16.msra.mxu0 0
      %1076 = vmatprep.subr.bf16.mxu0 0
      %1077 = vmatpush1.bf16.msra.mxu0 0
      %1078 = vmatprep.subr.bf16.mxu0 0
      %1079 = vmatpush1.bf16.msra.mxu0 0
      %1080 = vmatprep.subr.bf16.mxu0 0
      %1081 = vmatpush1.bf16.msra.mxu0 0
      %1082 = vmatprep.subr.bf16.mxu0 0
      %1083 = vmatpush1.bf16.msra.mxu0 0
      %1084 = vmatprep.subr.bf16.mxu0 0
      %1085 = vmatpush1.bf16.msra.mxu0 0
      %1086 = vmatprep.subr.bf16.mxu0 0
      %1087 = vmatpush1.bf16.msra.mxu0 0
      %1088 = vmatprep.subr.bf16.mxu0 0
      %1089 = vmatpush1.bf16.msra.mxu0 0
      %1090 = vmatprep.subr.bf16.mxu0 0
      %1091 = vmatpush1.bf16.msra.mxu0 0
      %1092 = vmatprep.mubr.bf16.mxu0 0
      %1093 = vmatmul.mubr.bf16.gmra.mrb[0].mxu0 %v1055
      %v1094 = vpop.f32.mrb[0].mxu0
      %v1095 = vadd.f32 0.0, %v1094
      %v1096 = vpop.f32.mrb[0].mxu0
      %v1097 = vadd.f32 0.0, %v1096
      %v1098 = vpop.f32.mrb[0].mxu0
      %v1099 = vadd.f32 0.0, %v1098
      %v1100 = vpop.f32.mrb[0].mxu0
      %v1101 = vadd.f32 0.0, %v1100
      %1102 = vmatprep.mubr.bf16.mxu0 0
      %1103 = vmatmul.mubr.bf16.gmra.mrb[0].mxu0 %v1058
      %v1104 = vpop.f32.mrb[0].mxu0
      %v1105 = vadd.f32 0.0, %v1104
      %v1106 = vpop.f32.mrb[0].mxu0
      %v1107 = vadd.f32 0.0, %v1106
      %v1108 = vpop.f32.mrb[0].mxu0
      %v1109 = vadd.f32 0.0, %v1108
      %v1110 = vpop.f32.mrb[0].mxu0
      %v1111 = vadd.f32 0.0, %v1110
      %1112 = vdwg.mxu0
      %v1113 = vld [vmem:[%s11] sm:$0xff]
      %v1114 = vld [vmem:[%s11 + $0x8] sm:$0xff]
      %v1115 = vld [vmem:[%s11 + $0x10] sm:$0xff]
      %v1116 = vld [vmem:[%s11 + $0x18] sm:$0xff]
      %1118 = vset.pattern.permute.xlu0 0
      %1119 = vperm.xlu0 %1118, %v1113
      %v1120 = vpop.permute.xlu0 %1119
      %1123 = vset.pattern.permute.xlu0 0
      %1124 = vperm.xlu0 %1123, %v1114
      %v1125 = vpop.permute.xlu0 %1124
      %1128 = vset.pattern.permute.xlu0 0
      %1129 = vperm.xlu0 %1128, %v1115
      %v1130 = vpop.permute.xlu0 %1129
      %1133 = vset.pattern.permute.xlu0 0
      %1134 = vperm.xlu0 %1133, %v1116
      %v1135 = vpop.permute.xlu0 %1134
      %v1137 = vmul.f32 %v1095, %v1120
      %v1138 = vmul.f32 %v1097, %v1120
      %v1139 = vmul.f32 %v1099, %v1125
      %v1140 = vmul.f32 %v1101, %v1125
      %v1141 = vmul.f32 %v1105, %v1130
      %v1142 = vmul.f32 %v1107, %v1130
      %v1143 = vmul.f32 %v1109, %v1135
      %v1144 = vmul.f32 %v1111, %v1135
      %v1145 = vld [vmem:[%s12] sm:$0xff]
      %v1146 = vld [vmem:[%s12 + $0x8] sm:$0xff]
      %v1147 = vld [vmem:[%s12 + $0x10] sm:$0xff]
      %v1148 = vld [vmem:[%s12 + $0x18] sm:$0xff]
      %1150 = vset.pattern.permute.xlu0 0
      %1151 = vperm.xlu0 %1150, %v1145
      %v1152 = vpop.permute.xlu0 %1151
      %1155 = vset.pattern.permute.xlu0 0
      %1156 = vperm.xlu0 %1155, %v1146
      %v1157 = vpop.permute.xlu0 %1156
      %1160 = vset.pattern.permute.xlu0 0
      %1161 = vperm.xlu0 %1160, %v1147
      %v1162 = vpop.permute.xlu0 %1161
      %1165 = vset.pattern.permute.xlu0 0
      %1166 = vperm.xlu0 %1165, %v1148
      %v1167 = vpop.permute.xlu0 %1166
      %v1169 = vadd.f32 %v1137, %v1152
      %v1170 = vadd.f32 %v1138, %v1152
      %v1171 = vadd.f32 %v1139, %v1157
      %v1172 = vadd.f32 %v1140, %v1157
      %v1173 = vadd.f32 %v1141, %v1162
      %v1174 = vadd.f32 %v1142, %v1162
      %v1175 = vadd.f32 %v1143, %v1167
      %v1176 = vadd.f32 %v1144, %v1167
      %v1177 = vmax.f32 %v1169, 0.0
      %v1178 = vmax.f32 %v1170, 0.0
      %v1179 = vmax.f32 %v1171, 0.0
      %v1180 = vmax.f32 %v1172, 0.0
      %v1181 = vmax.f32 %v1173, 0.0
      %v1182 = vmax.f32 %v1174, 0.0
      %v1183 = vmax.f32 %v1175, 0.0
      %v1184 = vmax.f32 %v1176, 0.0
      %v1185 = vld [vmem:[%s13] sm:$0x3f]
      %1194 = vrot.lane.b32.xlu0 %v1177, 17
      %v1195 = vpop.permute.xlu0 %1194
      %1196 = vrot.lane.b32.xlu0 %v1178, 17
      %v1197 = vpop.permute.xlu0 %1196
      %1198 = vrot.lane.b32.xlu0 %v1179, 17
      %v1199 = vpop.permute.xlu0 %1198
      %1200 = vrot.lane.b32.xlu0 %v1180, 17
      %v1201 = vpop.permute.xlu0 %1200
      %1202 = vrot.lane.b32.xlu0 %v1181, 17
      %v1203 = vpop.permute.xlu0 %1202
      %1204 = vrot.lane.b32.xlu0 %v1182, 17
      %v1205 = vpop.permute.xlu0 %1204
      %1206 = vrot.lane.b32.xlu0 %v1183, 17
      %v1207 = vpop.permute.xlu0 %1206
      %1208 = vrot.lane.b32.xlu0 %v1184, 17
      %v1209 = vpop.permute.xlu0 %1208
      %v1210 = vsel %vm658, %v1195, %v1197
      %v1211 = vsel %vm658, %v1199, %v1201
      %v1212 = vsel %vm658, %v1203, %v1205
      %v1213 = vsel %vm658, %v1207, %v1209
      %v1226 = vsel %vm658, 0.0, %v1195
      %v1227 = vsel %vm658, 0.0, %v1199
      %v1228 = vsel %vm658, 0.0, %v1203
      %v1229 = vsel %vm658, 0.0, %v1207
      %v1230 = vsel %vm658, %v1197, 0.0
      %v1231 = vsel %vm658, %v1201, 0.0
      %v1232 = vsel %vm658, %v1205, 0.0
      %v1233 = vsel %vm658, %v1209, 0.0
      %v1234 = vmul.f32 %v1226, %v669
      %v1235 = vmul.f32 %v1210, %v673
      %v1236 = vmul.f32 %v1227, %v669
      %v1237 = vmul.f32 %v1211, %v673
      %v1238 = vmul.f32 %v1228, %v669
      %v1239 = vmul.f32 %v1212, %v673
      %v1240 = vmul.f32 %v1229, %v669
      %v1241 = vmul.f32 %v1213, %v673
      %v1242 = vmul.f32 %v1226, %v688
      %v1243 = vmul.f32 %v1210, %v692
      %v1244 = vmul.f32 %v1230, %v690
      %v1245 = vmul.f32 %v1227, %v688
      %v1246 = vmul.f32 %v1211, %v692
      %v1247 = vmul.f32 %v1231, %v690
      %v1248 = vmul.f32 %v1228, %v688
      %v1249 = vmul.f32 %v1212, %v692
      %v1250 = vmul.f32 %v1232, %v690
      %v1251 = vmul.f32 %v1229, %v688
      %v1252 = vmul.f32 %v1213, %v692
      %v1253 = vmul.f32 %v1233, %v690
      %v1254 = vmul.f32 %v1226, %v700
      %v1255 = vmul.f32 %v1210, %v704
      %v1256 = vmul.f32 %v1230, %v702
      %v1257 = vmul.f32 %v1227, %v700
      %v1258 = vmul.f32 %v1211, %v704
      %v1259 = vmul.f32 %v1231, %v702
      %v1260 = vmul.f32 %v1228, %v700
      %v1261 = vmul.f32 %v1212, %v704
      %v1262 = vmul.f32 %v1232, %v702
      %v1263 = vmul.f32 %v1229, %v700
      %v1264 = vmul.f32 %v1213, %v704
      %v1265 = vmul.f32 %v1233, %v702
      %v1266 = vmul.f32 %v1226, %v712
      %v1267 = vmul.f32 %v1210, %v716
      %v1268 = vmul.f32 %v1230, %v714
      %v1269 = vmul.f32 %v1227, %v712
      %v1270 = vmul.f32 %v1211, %v716
      %v1271 = vmul.f32 %v1231, %v714
      %v1272 = vmul.f32 %v1228, %v712
      %v1273 = vmul.f32 %v1212, %v716
      %v1274 = vmul.f32 %v1232, %v714
      %v1275 = vmul.f32 %v1229, %v712
      %v1276 = vmul.f32 %v1213, %v716
      %v1277 = vmul.f32 %v1233, %v714
      %v1278 = vmul.f32 %v1226, %v724
      %v1279 = vmul.f32 %v1210, %v728
      %v1280 = vmul.f32 %v1230, %v726
      %v1281 = vmul.f32 %v1227, %v724
      %v1282 = vmul.f32 %v1211, %v728
      %v1283 = vmul.f32 %v1231, %v726
      %v1284 = vmul.f32 %v1228, %v724
      %v1285 = vmul.f32 %v1212, %v728
      %v1286 = vmul.f32 %v1232, %v726
      %v1287 = vmul.f32 %v1229, %v724
      %v1288 = vmul.f32 %v1213, %v728
      %v1289 = vmul.f32 %v1233, %v726
      %v1290 = vmul.f32 %v1226, %v736
      %v1291 = vmul.f32 %v1210, %v740
      %v1292 = vmul.f32 %v1230, %v738
      %v1293 = vmul.f32 %v1227, %v736
      %v1294 = vmul.f32 %v1211, %v740
      %v1295 = vmul.f32 %v1231, %v738
      %v1296 = vmul.f32 %v1228, %v736
      %v1297 = vmul.f32 %v1212, %v740
      %v1298 = vmul.f32 %v1232, %v738
      %v1299 = vmul.f32 %v1229, %v736
      %v1300 = vmul.f32 %v1213, %v740
      %v1301 = vmul.f32 %v1233, %v738
      %1310 = vrot.lane.b32.xlu0 %v1226, 127
      %v1311 = vpop.permute.xlu0 %1310
      %1312 = vrot.lane.b32.xlu0 %v1210, 127
      %v1313 = vpop.permute.xlu0 %1312
      %1314 = vrot.lane.b32.xlu0 %v1230, 127
      %v1315 = vpop.permute.xlu0 %1314
      %1316 = vrot.lane.b32.xlu0 %v1227, 127
      %v1317 = vpop.permute.xlu0 %1316
      %1318 = vrot.lane.b32.xlu0 %v1211, 127
      %v1319 = vpop.permute.xlu0 %1318
      %1320 = vrot.lane.b32.xlu0 %v1231, 127
      %v1321 = vpop.permute.xlu0 %1320
      %1322 = vrot.lane.b32.xlu0 %v1228, 127
      %v1323 = vpop.permute.xlu0 %1322
      %1324 = vrot.lane.b32.xlu0 %v1212, 127
      %v1325 = vpop.permute.xlu0 %1324
      %1326 = vrot.lane.b32.xlu0 %v1232, 127
      %v1327 = vpop.permute.xlu0 %1326
      %1328 = vrot.lane.b32.xlu0 %v1229, 127
      %v1329 = vpop.permute.xlu0 %1328
      %1330 = vrot.lane.b32.xlu0 %v1213, 127
      %v1331 = vpop.permute.xlu0 %1330
      %1332 = vrot.lane.b32.xlu0 %v1233, 127
      %v1333 = vpop.permute.xlu0 %1332
      %v1334 = vsel %vm758, %v1311, %v1313
      %v1335 = vsel %vm758, %v1313, %v1315
      %v1336 = vsel %vm758, %v1317, %v1319
      %v1337 = vsel %vm758, %v1319, %v1321
      %v1338 = vsel %vm758, %v1323, %v1325
      %v1339 = vsel %vm758, %v1325, %v1327
      %v1340 = vsel %vm758, %v1329, %v1331
      %v1341 = vsel %vm758, %v1331, %v1333
      %1362 = vrot.lane.b32.xlu0 %v1242, 126
      %v1363 = vpop.permute.xlu0 %1362
      %1364 = vrot.lane.b32.xlu0 %v1243, 126
      %v1365 = vpop.permute.xlu0 %1364
      %1366 = vrot.lane.b32.xlu0 %v1244, 126
      %v1367 = vpop.permute.xlu0 %1366
      %1368 = vrot.lane.b32.xlu0 %v1245, 126
      %v1369 = vpop.permute.xlu0 %1368
      %1370 = vrot.lane.b32.xlu0 %v1246, 126
      %v1371 = vpop.permute.xlu0 %1370
      %1372 = vrot.lane.b32.xlu0 %v1247, 126
      %v1373 = vpop.permute.xlu0 %1372
      %1374 = vrot.lane.b32.xlu0 %v1248, 126
      %v1375 = vpop.permute.xlu0 %1374
      %1376 = vrot.lane.b32.xlu0 %v1249, 126
      %v1377 = vpop.permute.xlu0 %1376
      %1378 = vrot.lane.b32.xlu0 %v1250, 126
      %v1379 = vpop.permute.xlu0 %1378
      %1380 = vrot.lane.b32.xlu0 %v1251, 126
      %v1381 = vpop.permute.xlu0 %1380
      %1382 = vrot.lane.b32.xlu0 %v1252, 126
      %v1383 = vpop.permute.xlu0 %1382
      %1384 = vrot.lane.b32.xlu0 %v1253, 126
      %v1385 = vpop.permute.xlu0 %1384
      %v1386 = vsel %vm775, %v1363, %v1365
      %v1387 = vsel %vm775, %v1365, %v1367
      %v1388 = vsel %vm775, %v1369, %v1371
      %v1389 = vsel %vm775, %v1371, %v1373
      %v1390 = vsel %vm775, %v1375, %v1377
      %v1391 = vsel %vm775, %v1377, %v1379
      %v1392 = vsel %vm775, %v1381, %v1383
      %v1393 = vsel %vm775, %v1383, %v1385
      %1414 = vrot.lane.b32.xlu0 %v1254, 112
      %v1415 = vpop.permute.xlu0 %1414
      %1416 = vrot.lane.b32.xlu0 %v1255, 112
      %v1417 = vpop.permute.xlu0 %1416
      %1418 = vrot.lane.b32.xlu0 %v1256, 112
      %v1419 = vpop.permute.xlu0 %1418
      %1420 = vrot.lane.b32.xlu0 %v1257, 112
      %v1421 = vpop.permute.xlu0 %1420
      %1422 = vrot.lane.b32.xlu0 %v1258, 112
      %v1423 = vpop.permute.xlu0 %1422
      %1424 = vrot.lane.b32.xlu0 %v1259, 112
      %v1425 = vpop.permute.xlu0 %1424
      %1426 = vrot.lane.b32.xlu0 %v1260, 112
      %v1427 = vpop.permute.xlu0 %1426
      %1428 = vrot.lane.b32.xlu0 %v1261, 112
      %v1429 = vpop.permute.xlu0 %1428
      %1430 = vrot.lane.b32.xlu0 %v1262, 112
      %v1431 = vpop.permute.xlu0 %1430
      %1432 = vrot.lane.b32.xlu0 %v1263, 112
      %v1433 = vpop.permute.xlu0 %1432
      %1434 = vrot.lane.b32.xlu0 %v1264, 112
      %v1435 = vpop.permute.xlu0 %1434
      %1436 = vrot.lane.b32.xlu0 %v1265, 112
      %v1437 = vpop.permute.xlu0 %1436
      %v1438 = vsel %vm792, %v1415, %v1417
      %v1439 = vsel %vm792, %v1417, %v1419
      %v1440 = vsel %vm792, %v1421, %v1423
      %v1441 = vsel %vm792, %v1423, %v1425
      %v1442 = vsel %vm792, %v1427, %v1429
      %v1443 = vsel %vm792, %v1429, %v1431
      %v1444 = vsel %vm792, %v1433, %v1435
      %v1445 = vsel %vm792, %v1435, %v1437
      %1454 = vrot.lane.b32.xlu0 %v1226, 111
      %v1455 = vpop.permute.xlu0 %1454
      %1456 = vrot.lane.b32.xlu0 %v1210, 111
      %v1457 = vpop.permute.xlu0 %1456
      %1458 = vrot.lane.b32.xlu0 %v1230, 111
      %v1459 = vpop.permute.xlu0 %1458
      %1460 = vrot.lane.b32.xlu0 %v1227, 111
      %v1461 = vpop.permute.xlu0 %1460
      %1462 = vrot.lane.b32.xlu0 %v1211, 111
      %v1463 = vpop.permute.xlu0 %1462
      %1464 = vrot.lane.b32.xlu0 %v1231, 111
      %v1465 = vpop.permute.xlu0 %1464
      %1466 = vrot.lane.b32.xlu0 %v1228, 111
      %v1467 = vpop.permute.xlu0 %1466
      %1468 = vrot.lane.b32.xlu0 %v1212, 111
      %v1469 = vpop.permute.xlu0 %1468
      %1470 = vrot.lane.b32.xlu0 %v1232, 111
      %v1471 = vpop.permute.xlu0 %1470
      %1472 = vrot.lane.b32.xlu0 %v1229, 111
      %v1473 = vpop.permute.xlu0 %1472
      %1474 = vrot.lane.b32.xlu0 %v1213, 111
      %v1475 = vpop.permute.xlu0 %1474
      %1476 = vrot.lane.b32.xlu0 %v1233, 111
      %v1477 = vpop.permute.xlu0 %1476
      %v1478 = vsel %vm803, %v1455, %v1457
      %v1479 = vsel %vm803, %v1457, %v1459
      %v1480 = vsel %vm803, %v1461, %v1463
      %v1481 = vsel %vm803, %v1463, %v1465
      %v1482 = vsel %vm803, %v1467, %v1469
      %v1483 = vsel %vm803, %v1469, %v1471
      %v1484 = vsel %vm803, %v1473, %v1475
      %v1485 = vsel %vm803, %v1475, %v1477
      %1506 = vrot.lane.b32.xlu0 %v1266, 110
      %v1507 = vpop.permute.xlu0 %1506
      %1508 = vrot.lane.b32.xlu0 %v1267, 110
      %v1509 = vpop.permute.xlu0 %1508
      %1510 = vrot.lane.b32.xlu0 %v1268, 110
      %v1511 = vpop.permute.xlu0 %1510
      %1512 = vrot.lane.b32.xlu0 %v1269, 110
      %v1513 = vpop.permute.xlu0 %1512
      %1514 = vrot.lane.b32.xlu0 %v1270, 110
      %v1515 = vpop.permute.xlu0 %1514
      %1516 = vrot.lane.b32.xlu0 %v1271, 110
      %v1517 = vpop.permute.xlu0 %1516
      %1518 = vrot.lane.b32.xlu0 %v1272, 110
      %v1519 = vpop.permute.xlu0 %1518
      %1520 = vrot.lane.b32.xlu0 %v1273, 110
      %v1521 = vpop.permute.xlu0 %1520
      %1522 = vrot.lane.b32.xlu0 %v1274, 110
      %v1523 = vpop.permute.xlu0 %1522
      %1524 = vrot.lane.b32.xlu0 %v1275, 110
      %v1525 = vpop.permute.xlu0 %1524
      %1526 = vrot.lane.b32.xlu0 %v1276, 110
      %v1527 = vpop.permute.xlu0 %1526
      %1528 = vrot.lane.b32.xlu0 %v1277, 110
      %v1529 = vpop.permute.xlu0 %1528
      %v1530 = vsel %vm820, %v1507, %v1509
      %v1531 = vsel %vm820, %v1509, %v1511
      %v1532 = vsel %vm820, %v1513, %v1515
      %v1533 = vsel %vm820, %v1515, %v1517
      %v1534 = vsel %vm820, %v1519, %v1521
      %v1535 = vsel %vm820, %v1521, %v1523
      %v1536 = vsel %vm820, %v1525, %v1527
      %v1537 = vsel %vm820, %v1527, %v1529
      %1558 = vrot.lane.b32.xlu0 %v1278, 96
      %v1559 = vpop.permute.xlu0 %1558
      %1560 = vrot.lane.b32.xlu0 %v1279, 96
      %v1561 = vpop.permute.xlu0 %1560
      %1562 = vrot.lane.b32.xlu0 %v1280, 96
      %v1563 = vpop.permute.xlu0 %1562
      %1564 = vrot.lane.b32.xlu0 %v1281, 96
      %v1565 = vpop.permute.xlu0 %1564
      %1566 = vrot.lane.b32.xlu0 %v1282, 96
      %v1567 = vpop.permute.xlu0 %1566
      %1568 = vrot.lane.b32.xlu0 %v1283, 96
      %v1569 = vpop.permute.xlu0 %1568
      %1570 = vrot.lane.b32.xlu0 %v1284, 96
      %v1571 = vpop.permute.xlu0 %1570
      %1572 = vrot.lane.b32.xlu0 %v1285, 96
      %v1573 = vpop.permute.xlu0 %1572
      %1574 = vrot.lane.b32.xlu0 %v1286, 96
      %v1575 = vpop.permute.xlu0 %1574
      %1576 = vrot.lane.b32.xlu0 %v1287, 96
      %v1577 = vpop.permute.xlu0 %1576
      %1578 = vrot.lane.b32.xlu0 %v1288, 96
      %v1579 = vpop.permute.xlu0 %1578
      %1580 = vrot.lane.b32.xlu0 %v1289, 96
      %v1581 = vpop.permute.xlu0 %1580
      %v1582 = vsel %vm837, %v1559, %v1561
      %v1583 = vsel %vm837, %v1561, %v1563
      %v1584 = vsel %vm837, %v1565, %v1567
      %v1585 = vsel %vm837, %v1567, %v1569
      %v1586 = vsel %vm837, %v1571, %v1573
      %v1587 = vsel %vm837, %v1573, %v1575
      %v1588 = vsel %vm837, %v1577, %v1579
      %v1589 = vsel %vm837, %v1579, %v1581
      %1598 = vrot.lane.b32.xlu0 %v1226, 95
      %v1599 = vpop.permute.xlu0 %1598
      %1600 = vrot.lane.b32.xlu0 %v1210, 95
      %v1601 = vpop.permute.xlu0 %1600
      %1602 = vrot.lane.b32.xlu0 %v1230, 95
      %v1603 = vpop.permute.xlu0 %1602
      %1604 = vrot.lane.b32.xlu0 %v1227, 95
      %v1605 = vpop.permute.xlu0 %1604
      %1606 = vrot.lane.b32.xlu0 %v1211, 95
      %v1607 = vpop.permute.xlu0 %1606
      %1608 = vrot.lane.b32.xlu0 %v1231, 95
      %v1609 = vpop.permute.xlu0 %1608
      %1610 = vrot.lane.b32.xlu0 %v1228, 95
      %v1611 = vpop.permute.xlu0 %1610
      %1612 = vrot.lane.b32.xlu0 %v1212, 95
      %v1613 = vpop.permute.xlu0 %1612
      %1614 = vrot.lane.b32.xlu0 %v1232, 95
      %v1615 = vpop.permute.xlu0 %1614
      %1616 = vrot.lane.b32.xlu0 %v1229, 95
      %v1617 = vpop.permute.xlu0 %1616
      %1618 = vrot.lane.b32.xlu0 %v1213, 95
      %v1619 = vpop.permute.xlu0 %1618
      %1620 = vrot.lane.b32.xlu0 %v1233, 95
      %v1621 = vpop.permute.xlu0 %1620
      %v1622 = vsel %vm851, %v1599, %v1601
      %v1623 = vsel %vm851, %v1601, %v1603
      %v1624 = vsel %vm851, %v1605, %v1607
      %v1625 = vsel %vm851, %v1607, %v1609
      %v1626 = vsel %vm851, %v1611, %v1613
      %v1627 = vsel %vm851, %v1613, %v1615
      %v1628 = vsel %vm851, %v1617, %v1619
      %v1629 = vsel %vm851, %v1619, %v1621
      %1650 = vrot.lane.b32.xlu0 %v1290, 94
      %v1651 = vpop.permute.xlu0 %1650
      %1652 = vrot.lane.b32.xlu0 %v1291, 94
      %v1653 = vpop.permute.xlu0 %1652
      %1654 = vrot.lane.b32.xlu0 %v1292, 94
      %v1655 = vpop.permute.xlu0 %1654
      %1656 = vrot.lane.b32.xlu0 %v1293, 94
      %v1657 = vpop.permute.xlu0 %1656
      %1658 = vrot.lane.b32.xlu0 %v1294, 94
      %v1659 = vpop.permute.xlu0 %1658
      %1660 = vrot.lane.b32.xlu0 %v1295, 94
      %v1661 = vpop.permute.xlu0 %1660
      %1662 = vrot.lane.b32.xlu0 %v1296, 94
      %v1663 = vpop.permute.xlu0 %1662
      %1664 = vrot.lane.b32.xlu0 %v1297, 94
      %v1665 = vpop.permute.xlu0 %1664
      %1666 = vrot.lane.b32.xlu0 %v1298, 94
      %v1667 = vpop.permute.xlu0 %1666
      %1668 = vrot.lane.b32.xlu0 %v1299, 94
      %v1669 = vpop.permute.xlu0 %1668
      %1670 = vrot.lane.b32.xlu0 %v1300, 94
      %v1671 = vpop.permute.xlu0 %1670
      %1672 = vrot.lane.b32.xlu0 %v1301, 94
      %v1673 = vpop.permute.xlu0 %1672
      %v1674 = vsel %vm865, %v1651, %v1653
      %v1675 = vsel %vm865, %v1653, %v1655
      %v1676 = vsel %vm865, %v1657, %v1659
      %v1677 = vsel %vm865, %v1659, %v1661
      %v1678 = vsel %vm865, %v1663, %v1665
      %v1679 = vsel %vm865, %v1665, %v1667
      %v1680 = vsel %vm865, %v1669, %v1671
      %v1681 = vsel %vm865, %v1671, %v1673
      %v1690 = vpack.c.bf16 %v1236, %v1234
      %v1691 = vpack.c.bf16 %v1237, %v1235
      %v1692 = vpack.c.bf16 %v1240, %v1238
      %v1693 = vpack.c.bf16 %v1241, %v1239
      %v1694 = vpack.c.bf16 %v1336, %v1334
      %v1695 = vpack.c.bf16 %v1337, %v1335
      %v1696 = vpack.c.bf16 %v1340, %v1338
      %v1697 = vpack.c.bf16 %v1341, %v1339
      %v1698 = vpack.c.bf16 %v1388, %v1386
      %v1699 = vpack.c.bf16 %v1389, %v1387
      %v1700 = vpack.c.bf16 %v1392, %v1390
      %v1701 = vpack.c.bf16 %v1393, %v1391
      %v1702 = vpack.c.bf16 %v1440, %v1438
      %v1703 = vpack.c.bf16 %v1441, %v1439
      %v1704 = vpack.c.bf16 %v1444, %v1442
      %v1705 = vpack.c.bf16 %v1445, %v1443
      %v1706 = vpack.c.bf16 %v1480, %v1478
      %v1707 = vpack.c.bf16 %v1481, %v1479
      %v1708 = vpack.c.bf16 %v1484, %v1482
      %v1709 = vpack.c.bf16 %v1485, %v1483
      %v1710 = vpack.c.bf16 %v1532, %v1530
      %v1711 = vpack.c.bf16 %v1533, %v1531
      %v1712 = vpack.c.bf16 %v1536, %v1534
      %v1713 = vpack.c.bf16 %v1537, %v1535
      %v1714 = vpack.c.bf16 %v1584, %v1582
      %v1715 = vpack.c.bf16 %v1585, %v1583
      %v1716 = vpack.c.bf16 %v1588, %v1586
      %v1717 = vpack.c.bf16 %v1589, %v1587
      %v1718 = vpack.c.bf16 %v1624, %v1622
      %v1719 = vpack.c.bf16 %v1625, %v1623
      %v1720 = vpack.c.bf16 %v1628, %v1626
      %v1721 = vpack.c.bf16 %v1629, %v1627
      %v1722 = vpack.c.bf16 %v1676, %v1674
      %v1723 = vpack.c.bf16 %v1677, %v1675
      %v1724 = vpack.c.bf16 %v1680, %v1678
      %v1725 = vpack.c.bf16 %v1681, %v1679
      %v1726 = vld [vmem:[%s14] sm:$0xf]
      %1728 = vset.pattern.permute.xlu0 0
      %1729 = vperm.xlu0 %1728, %v1726
      %v1730 = vpop.permute.xlu0 %1729
      %v1733 = vcombine.high %v1185, %v1185
      %v1735 = vunpack.c.l.s4 1983009808
      %v1736 = vunpack.c.0.s8 %v1735
      %v1737 = vlaneseq
      %v1738 = vshrl.u32 %v1737, 7
      %v1739 = vsub.s32 %v1736, %v1738
      %v1740 = vrot.slane %v1185, %v1739
      %v1742 = vunpack.c.l.s4 1983009808
      %v1743 = vunpack.c.0.s8 %v1742
      %v1744 = vlaneseq
      %v1745 = vshrl.u32 %v1744, 7
      %v1746 = vsub.s32 %v1743, %v1745
      %v1747 = vrot.slane %v1733, %v1746
      %v1748 = vcombine.high %v1740, %v1740
      %v1752 = vsel %vm727, %v1747, 0
      %1754 = vmatprep.subr.bf16.mxu0 %v1691
      %1755 = vmatpush1.bf16.msra.mxu0 %v1690
      %1756 = vmatprep.subr.bf16.mxu0 %v1693
      %1757 = vmatpush1.bf16.msra.mxu0 %v1692
      %1758 = vmatprep.subr.bf16.mxu0 %v1695
      %1759 = vmatpush1.bf16.msra.mxu0 %v1694
      %1760 = vmatprep.subr.bf16.mxu0 %v1697
      %1761 = vmatpush1.bf16.msra.mxu0 %v1696
      %1762 = vmatprep.subr.bf16.mxu0 %v1699
      %1763 = vmatpush1.bf16.msra.mxu0 %v1698
      %1764 = vmatprep.subr.bf16.mxu0 %v1701
      %1765 = vmatpush1.bf16.msra.mxu0 %v1700
      %1766 = vmatprep.subr.bf16.mxu0 %v1703
      %1767 = vmatpush1.bf16.msra.mxu0 %v1702
      %1768 = vmatprep.subr.bf16.mxu0 %v1705
      %1769 = vmatpush1.bf16.msra.mxu0 %v1704
      %1770 = vmatprep.subr.bf16.mxu0 %v1707
      %1771 = vmatpush1.bf16.msra.mxu0 %v1706
      %1772 = vmatprep.subr.bf16.mxu0 %v1709
      %1773 = vmatpush1.bf16.msra.mxu0 %v1708
      %1774 = vmatprep.subr.bf16.mxu0 %v1711
      %1775 = vmatpush1.bf16.msra.mxu0 %v1710
      %1776 = vmatprep.subr.bf16.mxu0 %v1713
      %1777 = vmatpush1.bf16.msra.mxu0 %v1712
      %1778 = vmatprep.subr.bf16.mxu0 %v1715
      %1779 = vmatpush1.bf16.msra.mxu0 %v1714
      %1780 = vmatprep.subr.bf16.mxu0 %v1717
      %1781 = vmatpush1.bf16.msra.mxu0 %v1716
      %1782 = vmatprep.subr.bf16.mxu0 %v1719
      %1783 = vmatpush1.bf16.msra.mxu0 %v1718
      %1784 = vmatprep.subr.bf16.mxu0 %v1721
      %1785 = vmatpush1.bf16.msra.mxu0 %v1720
      %1786 = vmatprep.mubr.bf16.mxu0 %v1748
      %1787 = vmatmul.mubr.bf16.gmra.mrb[0].mxu0 %v1740
      %v1788 = vpop.f32.mrb[0].mxu0
      %v1789 = vadd.f32 %v1730, %v1788
      %v1790 = vpop.f32.mrb[0].mxu0
      %v1791 = vadd.f32 %v1730, %v1790
      %v1792 = vpop.f32.mrb[0].mxu0
      %v1793 = vpop.f32.mrb[0].mxu0
      %1794 = vdwg.mxu0
      %1795 = vmatprep.subr.bf16.mxu0 %v1723
      %1796 = vmatpush1.bf16.msra.mxu0 %v1722
      %1797 = vmatprep.subr.bf16.mxu0 %v1725
      %1798 = vmatpush1.bf16.msra.mxu0 %v1724
      %1799 = vmatprep.subr.bf16.mxu0 0
      %1800 = vmatpush1.bf16.msra.mxu0 0
      %1801 = vmatprep.subr.bf16.mxu0 0
      %1802 = vmatpush1.bf16.msra.mxu0 0
      %1803 = vmatprep.subr.bf16.mxu0 0
      %1804 = vmatpush1.bf16.msra.mxu0 0
      %1805 = vmatprep.subr.bf16.mxu0 0
      %1806 = vmatpush1.bf16.msra.mxu0 0
      %1807 = vmatprep.subr.bf16.mxu0 0
      %1808 = vmatpush1.bf16.msra.mxu0 0
      %1809 = vmatprep.subr.bf16.mxu0 0
      %1810 = vmatpush1.bf16.msra.mxu0 0
      %1811 = vmatprep.subr.bf16.mxu0 0
      %1812 = vmatpush1.bf16.msra.mxu0 0
      %1813 = vmatprep.subr.bf16.mxu0 0
      %1814 = vmatpush1.bf16.msra.mxu0 0
      %1815 = vmatprep.subr.bf16.mxu0 0
      %1816 = vmatpush1.bf16.msra.mxu0 0
      %1817 = vmatprep.subr.bf16.mxu0 0
      %1818 = vmatpush1.bf16.msra.mxu0 0
      %1819 = vmatprep.subr.bf16.mxu0 0
      %1820 = vmatpush1.bf16.msra.mxu0 0
      %1821 = vmatprep.subr.bf16.mxu0 0
      %1822 = vmatpush1.bf16.msra.mxu0 0
      %1823 = vmatprep.subr.bf16.mxu0 0
      %1824 = vmatpush1.bf16.msra.mxu0 0
      %1825 = vmatprep.subr.bf16.mxu0 0
      %1826 = vmatpush1.bf16.msra.mxu0 0
      %1827 = vmatprep.mubr.bf16.mxu0 0
      %1828 = vmatmul.mubr.bf16.gmra.mrb[0].mxu0 %v1752
      %v1829 = vpop.f32.mrb[0].mxu0
      %v1830 = vadd.f32 %v1789, %v1829
      %v1831 = vpop.f32.mrb[0].mxu0
      %v1832 = vadd.f32 %v1791, %v1831
      %v1833 = vpop.f32.mrb[0].mxu0
      %v1834 = vpop.f32.mrb[0].mxu0
      %1835 = vdwg.mxu0
      %v1836 = vld [vmem:[%s15] sm:$0x3]
      %v1837 = vtanh.pop %v1830
      %v1838 = vtanh.pop %v1832
      %1840 = vset.pattern.permute.xlu0 0
      %1841 = vperm.xlu0 %1840, %v1836
      %v1842 = vpop.permute.xlu0 %1841
      %v1844 = vmul.f32 %v1842, %v1837
      %v1845 = vmul.f32 %v1842, %v1838
      %v1848 = vrot.slane %v1830, 2
      %v1849 = vrot.slane %v1832, 2
      %v1852 = vadd.f32 %v620, %v1848
      %v1853 = vadd.f32 %v622, %v1849
      %v1854 = vmul.f32 %v1844, 1.442695
      %v1855 = vpow.pop %v1854
      %v1856 = vmul.f32 %v1845, 1.442695
      %v1857 = vpow.pop %v1856
      %v1858 = vmul.f32 %v1852, %v1855
      %v1859 = vmul.f32 %v1853, %v1857
      %v1860 = vsel %vm578, %v1858, %v620
      %v1861 = vsel %vm578, %v1859, %v622
      %v1864 = vcombine.low %v1860, %v1861
      %1866 = vst [vmem:[%s554] sm:$0xff] %v1864
      %v1867 = vsel %vm578, %v1844, 0.0
      %v1868 = vsel %vm578, %v1845, 0.0
      %v1869 = vadd.f32 %v1867, %v1868
      %1870 = vadd.xlane.f32.xlu0 %v1869
      %v1871 = vpop.xlane.xlu0 %1870
      %v1872 = vsel %vm578, %v1871, 0.0
      %v1873 = vrot.slane %v1872, 4
      %v1874 = vadd.f32 %v1872, %v1873
      %v1875 = vrot.slane %v1874, 2
      %v1876 = vadd.f32 %v1874, %v1875
      %v1877 = vrot.slane %v1876, 1
      %v1878 = vadd.f32 %v1876, %v1877
      %1879 = vst [vmem:[%s557] sm:$0x1] %v1878
      %p1880 = scmp.lt.s32.totalorder %s29, 1
      %s1881 = scalar_select %p1880, %s29, 1
      %s1882 = smul.addr %s1881, 2
      %s1883 = smul.addr %s1882, 4
      %s1884 = scalar_lea.vmem %s16, %s1883
      %p1885 = scmp.lt.s32.totalorder %s29, 1
      %s1886 = scalar_select %p1885, %s29, 1
      %s1887 = scalar_lea.vmem %s17, %s1886
      // Predicated region
      $region85: #{forward.4} parent=83 // pred_check
        %p1888 = pneg %p388
      $region86: #{forward.4} parent=83 // pred_check_branch
        %1890 = sbr.rel (%p1888) target = $region88
      $region87: #{forward.4} parent=83 // pred_region
        _
      $region88: #{forward.4} parent=83 // pred_fallthru
        _
      // Predicated region
      $region89: #{forward.4} parent=83 // pred_check
        %p1891 = pneg %p414
      $region90: #{forward.4} parent=83 // pred_check_branch
        %1893 = sbr.rel (%p1891) target = $region92
      $region91: #{forward.4} parent=83 // pred_region
        _
      $region92: #{forward.4} parent=83 // pred_fallthru
        _
    $region84: #{forward.4} parent=5 // pred_fallthru
      _
    %p1894 = scmp.le.s32.totalorder 2, %s24
    // Predicated region
    $region93: #{forward.4} parent=5 // pred_check
      %p1895 = pneg %p1894
    $region94: #{forward.4} parent=5 // pred_check_branch
      %1897 = sbr.rel (%p1895) target = $region96
    $region95: #{forward.4} parent=5 // pred_region
      %s1898 = ssub.s32 %s24, 2
      // Predicated region
      $region97: #{forward.4} parent=95 // pred_check
        %p1899 = pneg %p394
      $region98: #{forward.4} parent=95 // pred_check_branch
        %1901 = sbr.rel (%p1899) target = $region100
      $region99: #{forward.4} parent=95 // pred_region
        %p1902 = scmp.lt.s32.totalorder %s30, 1
        %s1903 = scalar_select %p1902, %s30, 1
        %s1904 = smul.addr %s1903, 2
        %s1905 = smul.addr %s1904, 4
        %s1906 = scalar_lea.vmem %s16, %s1905
      $region100: #{forward.4} parent=95 // pred_fallthru
        _
      // Predicated region
      $region101: #{forward.4} parent=95 // pred_check
        %p1907 = pneg %p420
      $region102: #{forward.4} parent=95 // pred_check_branch
        %1909 = sbr.rel (%p1907) target = $region104
      $region103: #{forward.4} parent=95 // pred_region
        %p1910 = scmp.lt.s32.totalorder %s30, 1
        %s1911 = scalar_select %p1910, %s30, 1
        %s1912 = scalar_lea.vmem %s17, %s1911
      $region104: #{forward.4} parent=95 // pred_fallthru
        _
    $region96: #{forward.4} parent=5 // pred_fallthru
      _
  $region6: #{forward.4} parent=0 // loop_footer
    %s28 = sadd.s32 1, %s24
  $region7: #{forward.4} parent=0 // loop_footer_branch
    %23 = sbr.rel target = $region3
  $region8: #{forward.4} parent=0 // loop_exit
    _

</llo_original>
